<compile_context>
chip_gen: v6e
topology: v6e:2x2x1
jax: 0.10.0
libtpu: 0.0.40
codegen_flags: <defaults>
</compile_context>

<pallas_src>
import functools

import jax
import jax.numpy as jnp
from jax.experimental import pallas as pl
from jax.experimental.pallas import tpu as pltpu


def _pick_point_tile(n):
    """Largest of (256, 128) that divides n, else the full n."""
    for t in (256, 128):
        if n >= t and n % t == 0:
            return t
    return n


# --------------------------------------------------------------------------
# Kernel 1: pairwise squared distances via a single augmented MXU matmul.
#   lhs_aug[b, m, :] = (-2*x, -2*y, -2*z, |x_m|^2, 1)        (B, N, 5)
#   rhs_aug[b, :, n] = ( x,  y,  z,  1,  |x_n|^2)            (B, 5, N)
#   dist[b, m, n]    = lhs_aug[b, m, :] . rhs_aug[b, :, n]
# --------------------------------------------------------------------------
def _dist_kernel(lhs_ref, rhs_ref, dist_ref):
    # lhs_ref: (1, tm, 5)  rhs_ref: (1, 5, N)  dist_ref: (1, tm, N)
    dist_ref[0] = jnp.dot(
        lhs_ref[0], rhs_ref[0],
        preferred_element_type=jnp.float32,
        precision=jax.lax.Precision.HIGHEST,  # exact-ish f32: stable top-k, K=5 so free
    )


def pairwise_sqdist(lhs_aug, rhs_aug, tm):
    B, N, _ = lhs_aug.shape
    return pl.pallas_call(
        _dist_kernel,
        out_shape=jax.ShapeDtypeStruct((B, N, N), jnp.float32),
        grid=(B, N // tm),
        in_specs=[
            pl.BlockSpec((1, tm, 5), lambda b, t: (b, t, 0)),
            pl.BlockSpec((1, 5, N), lambda b, t: (b, 0, 0)),
        ],
        out_specs=pl.BlockSpec((1, tm, N), lambda b, t: (b, t, 0)),
        compiler_params=pltpu.CompilerParams(
            dimension_semantics=("parallel", "parallel"),
            vmem_limit_bytes=32 * 1024 * 1024,  # blocks sized well under v7x's 64 MiB
        ),
    )(lhs_aug, rhs_aug)


# --------------------------------------------------------------------------
# Kernel 2: shared 1x1-conv MLP + max over the k neighbors, channels-first.
#   rel: (B, k, 3, N) tiled over points -> block (1, k, 3, tq)
#   out: (B, C, N)                      -> block (1, C, tq)   (lane-dense)
# --------------------------------------------------------------------------
def _mlp_max_kernel(rel_ref, w1_ref, b1_ref, w2_ref, b2_ref, out_ref, *,
                    n_blocks, k):
    C = out_ref.shape[1]
    tq = out_ref.shape[2]

    w1 = w1_ref[...]          # (C, 3)  f32
    w2 = w2_ref[...]          # (C, C)  bf16
    # Hoist loop-invariant broadcasts out of the unrolled neighbor loop.
    b1b = jnp.broadcast_to(b1_ref[...], (C, tq))               # (C, tq)
    b2b = jnp.broadcast_to(b2_ref[...], (C, tq))               # (C, tq)
    w1b = [jnp.broadcast_to(w1[:, c:c + 1], (C, tq)) for c in range(3)]

    acc = None
    for j in range(k):                      # static unroll over neighbors
        rel_j = rel_ref[0, j]               # (3, tq) -- leading-dim view, free
        # conv1 (K=3 contraction) on the VPU: 3 broadcast-FMAs.
        h = b1b
        for c in range(3):
            h = h + w1b[c] * rel_j[c:c + 1, :]
        # (n_blocks - 1) x shared conv2 on the MXU: bf16 inputs, f32 accumulate.
        for _ in range(1, n_blocks):
            h = jnp.maximum(h, 0.0).astype(jnp.bfloat16)
            h = jnp.dot(w2, h, preferred_element_type=jnp.float32) + b2b
        acc = h if acc is None else jnp.maximum(acc, h)
    out_ref[0] = acc


# --------------------------------------------------------------------------
# Wrapper (glue: top-k neighbor selection + gather; everything else in Pallas)
# --------------------------------------------------------------------------
def pointcnn_forward(xyz_b3n, params, k, n_blocks):
    w1, b1, w2, b2 = params                 # (C,3) (C,1) (C,C) (C,1), all f32
    B, _, N = xyz_b3n.shape
    C = w1.shape[0]
    xyz_b3n = xyz_b3n.astype(jnp.float32)

    # --- augmented operands for the distance matmul (tiny, O(B*N*5)) ---------
    xyz_bn3 = jnp.transpose(xyz_b3n, (0, 2, 1))                   # (B, N, 3)
    sq = jnp.sum(xyz_bn3 * xyz_bn3, axis=-1, keepdims=True)       # (B, N, 1)
    ones = jnp.ones((B, N, 1), jnp.float32)
    lhs_aug = jnp.concatenate([-2.0 * xyz_bn3, sq, ones], axis=-1)        # (B,N,5)
    rhs_aug = jnp.concatenate(
        [xyz_b3n, jnp.transpose(ones, (0, 2, 1)), jnp.transpose(sq, (0, 2, 1))],
        axis=1)                                                           # (B,5,N)

    tm = _pick_point_tile(N)
    dist = pairwise_sqdist(lhs_aug, rhs_aug, tm)                  # (B, N, N)

    # torch.topk defaults to LARGEST -> the module picks the k farthest points
    # (skipping the single farthest). Reproduce exactly.
    # TODO(synk): fuse this top-(k+1) into the distance kernel to avoid the
    # (B, N, N) HBM round trip; no clean Pallas primitive for row-wise top-k.
    _, idx = jax.lax.top_k(dist, k + 1)                           # (B, N, k+1)
    idx = idx[:, :, 1:]                                           # (B, N, k)

    # Gather relative coords directly from the channels-first xyz (glue).
    idx_t = jnp.transpose(idx, (0, 2, 1))                         # (B, k, N)

    def _gather_rel(xb, ib):                                      # (3,N),(k,N)
        g = xb[:, ib]                                             # (3, k, N)
        return jnp.transpose(g, (1, 0, 2)) - xb[None, :, :]       # (k, 3, N)

    rel = jax.vmap(_gather_rel)(xyz_b3n, idx_t)                   # (B, k, 3, N)

    tq = _pick_point_tile(N)
    w2_bf = w2.astype(jnp.bfloat16)
    kern = functools.partial(_mlp_max_kernel, n_blocks=n_blocks, k=k)
    out = pl.pallas_call(
        kern,
        out_shape=jax.ShapeDtypeStruct((B, C, N), jnp.float32),
        grid=(B, N // tq),
        in_specs=[
            pl.BlockSpec((1, k, 3, tq), lambda b, t: (b, 0, 0, t)),
            pl.BlockSpec((C, 3), lambda b, t: (0, 0)),
            pl.BlockSpec((C, 1), lambda b, t: (0, 0)),
            pl.BlockSpec((C, C), lambda b, t: (0, 0)),
            pl.BlockSpec((C, 1), lambda b, t: (0, 0)),
        ],
        out_specs=pl.BlockSpec((1, C, tq), lambda b, t: (b, 0, t)),
        compiler_params=pltpu.CompilerParams(
            dimension_semantics=("parallel", "parallel"),
            vmem_limit_bytes=32 * 1024 * 1024,
        ),
    )(rel, w1, b1, w2_bf, b2)
    return out                                                    # (B, C, N)


# --------------------------------------------------------------------------
# Deterministic parameter init mirroring Conv2d(3->C,1x1) / Conv2d(C->C,1x1),
# stored channels-first: w (C_out, C_in), b (C_out, 1).
# --------------------------------------------------------------------------
def init_params(key, n_cout):
    k1, k2, k3, k4 = jax.random.split(key, 4)
    bnd1 = 1.0 / jnp.sqrt(3.0)
    w1 = jax.random.uniform(k1, (n_cout, 3), jnp.float32, -bnd1, bnd1)
    b1 = jax.random.uniform(k2, (n_cout, 1), jnp.float32, -bnd1, bnd1)
    bnd2 = 1.0 / jnp.sqrt(float(n_cout))
    w2 = jax.random.uniform(k3, (n_cout, n_cout), jnp.float32, -bnd2, bnd2)
    b2 = jax.random.uniform(k4, (n_cout, 1), jnp.float32, -bnd2, bnd2)
    return w1, b1, w2, b2


# Pure-JAX reference (same numerics policy: exact f32 conv1, bf16-in/f32-acc conv2).
def pointcnn_reference(xyz_b3n, params, k, n_blocks):
    w1, b1, w2, b2 = params
    xyz = jnp.transpose(xyz_b3n, (0, 2, 1)).astype(jnp.float32)   # (B, N, 3)
    dist = jnp.sum((xyz[:, :, None, :] - xyz[:, None, :, :]) ** 2, axis=-1)
    _, idx = jax.lax.top_k(dist, k + 1)
    idx = idx[:, :, 1:]
    gathered = jax.vmap(lambda pts, ind: pts[ind])(xyz, idx)      # (B, N, k, 3)
    rel = gathered - xyz[:, :, None, :]
    h = jnp.einsum("bnkc,dc->bnkd", rel, w1,
                   precision=jax.lax.Precision.HIGHEST) + b1[:, 0]
    w2_bf = w2.astype(jnp.bfloat16)
    for _ in range(1, n_blocks):
        h = jnp.maximum(h, 0.0).astype(jnp.bfloat16)
        h = jnp.einsum("bnkc,dc->bnkd", h, w2_bf,
                       preferred_element_type=jnp.float32) + b2[:, 0]
    out = jnp.max(h, axis=2)                                      # (B, N, C)
    return jnp.transpose(out, (0, 2, 1))                          # (B, C, N)


if __name__ == "__main__":
    B, N, K, C, N_BLOCKS = 2, 512, 8, 32, 3

    key = jax.random.PRNGKey(0)
    kx, kp = jax.random.split(key)
    xyz = jax.random.normal(kx, (B, 3, N), jnp.float32)
    params = init_params(kp, C)

    out = pointcnn_forward(xyz, params, K, N_BLOCKS)
    out = jax.block_until_ready(out)

    ref = pointcnn_reference(xyz, params, K, N_BLOCKS)
    assert out.shape == (B, C, N), out.shape
    if not jnp.allclose(out, ref, rtol=1e-2, atol=1e-2):
        err = float(jnp.max(jnp.abs(out - ref)))
        raise AssertionError(f"Pallas result does not match reference (max abs err {err})")

    print("KERNEL_OK")
</pallas_src>

<mosaic_0001>
module attributes {stable_mosaic.version = 11 : i64} {
  func.func @_dist_kernel(%arg0: i32, %arg1: i32, %arg2: memref<1x256x5xf32, #tpu.memory_space<vmem>>, %arg3: memref<1x5x512xf32, #tpu.memory_space<vmem>>, %arg4: memref<1x256x512xf32, #tpu.memory_space<vmem>>) attributes {dimension_semantics = [#tpu.dimension_semantics<parallel>, #tpu.dimension_semantics<parallel>], iteration_bounds = array<i64: 2, 2>, scalar_prefetch = 0 : i64, scratch_operands = 0 : i64, tpu.core_type = #tpu.core_type<tc>, window_params = [{transform_indices = @transform_0, window_bounds = array<i64: 1, 256, 5>}, {transform_indices = @transform_1, window_bounds = array<i64: 1, 5, 512>}, {transform_indices = @transform_2, window_bounds = array<i64: 1, 256, 512>}]} {
    %c0 = arith.constant 0 : index
    %c0_0 = arith.constant 0 : index
    %c0_1 = arith.constant 0 : index
    %0 = vector.load %arg2[%c0, %c0_0, %c0_1] : memref<1x256x5xf32, #tpu.memory_space<vmem>>, vector<1x256x5xf32>
    %1 = vector.shape_cast %0 : vector<1x256x5xf32> to vector<256x5xf32>
    %c0_2 = arith.constant 0 : index
    %c0_3 = arith.constant 0 : index
    %c0_4 = arith.constant 0 : index
    %2 = vector.load %arg3[%c0_2, %c0_3, %c0_4] : memref<1x5x512xf32, #tpu.memory_space<vmem>>, vector<1x5x512xf32>
    %3 = vector.shape_cast %2 : vector<1x5x512xf32> to vector<5x512xf32>
    %cst = arith.constant dense<0.000000e+00> : vector<256x512xf32>
    %4 = tpu.matmul %1, %3, %cst {dimension_numbers = #tpu.dot_dimension_numbers<[1], [0], [0], [1], [0, 0, 1, 1], [], []>, precision = #tpu.contract_precision<fp32>} : vector<256x5xf32>, vector<5x512xf32>, vector<256x512xf32> -> vector<256x512xf32>
    %c0_5 = arith.constant 0 : index
    %c0_6 = arith.constant 0 : index
    %c0_7 = arith.constant 0 : index
    %5 = vector.load %arg4[%c0_5, %c0_6, %c0_7] : memref<1x256x512xf32, #tpu.memory_space<vmem>>, vector<1x256x512xf32>
    %6 = vector.shape_cast %5 : vector<1x256x512xf32> to vector<256x512xf32>
    %7 = vector.shape_cast %4 : vector<256x512xf32> to vector<1x256x512xf32>
    tpu.vector_store %arg4[%c0_5, %c0_6, %c0_7], %7 {strides = array<i32>} : memref<1x256x512xf32, #tpu.memory_space<vmem>>, vector<1x256x512xf32>,
    return
  }
  func.func @transform_0(%arg0: i32, %arg1: i32) -> (i32, i32, i32) {
    %c0_i32 = arith.constant 0 : i32
    %c0_i32_0 = arith.constant 0 : i32
    return %arg0, %arg1, %c0_i32 : i32, i32, i32
  }
  func.func @transform_1(%arg0: i32, %arg1: i32) -> (i32, i32, i32) {
    %c0_i32 = arith.constant 0 : i32
    %c0_i32_0 = arith.constant 0 : i32
    %c0_i32_1 = arith.constant 0 : i32
    return %arg0, %c0_i32, %c0_i32_0 : i32, i32, i32
  }
  func.func @transform_2(%arg0: i32, %arg1: i32) -> (i32, i32, i32) {
    %c0_i32 = arith.constant 0 : i32
    %c0_i32_0 = arith.constant 0 : i32
    return %arg0, %arg1, %c0_i32 : i32, i32, i32
  }
}

</mosaic_0001>

<llo_original>
// kernel: tpu_custom_call.1
$region0: #{tpu_custom_call.1}
  #allocation0 [shape = 'u32[]', space=smem, size = 0x4, offset = 0x4, fixed_abs, tag = 'smem constant byte address 0x4 - core index']
  #allocation1 [shape = 'u32[144,128]{1,0:T(1,128)}', space=vmem, size = 0x12000, scoped, tag = 'internal scratch']
  %s0 = inlined_call_operand.vmem [shape: f32[2,512,5], index: 0, kind: input, shape index: {}]
  %s1 = inlined_call_operand.vmem [shape: f32[2,5,512], index: 1, kind: input, shape index: {}]
  %s2 = inlined_call_operand.hbm [shape: f32[2,512,512], index: 2, kind: output, shape index: {}]
  %s3 = sld [smem:[#allocation0]]
  $region41: #{tpu_custom_call.1} parent=0
    _
  %s5 = ssub.s32 1, %s3
  %s6 = scalar_select 0, %s5, %s3
  $region1: #{tpu_custom_call.1} parent=0
    #allocation2 [shape = 'u8[1048576]{0}', space=vmem, size = 0x100000, scoped, tag = 'output window, operand 0']
    #allocation3 [shape = 's32[2]{0}', space=sflag, size = 0x8, scoped, tag = 'scoped memory for tpu_custom_call.1']
    %7 = vsyncpa [#allocation3], 0
    %s8 = scalar_lea.sflag [#allocation3], 1
    %9 = vsyncpa %s8, 0
    loop: start=0, step=1, limit=6
    $region2: #{tpu_custom_call.1} parent=1 // loop_pre_header
      _
    $region3: #{tpu_custom_call.1} parent=1 // loop_header
      %s11 = sphi 0, %s15
      %p12 = scmp.ge.s32.totalorder %s11, 6
      %s18 = sphi 0, %s30
      %s19 = sphi 0, %s26
      %s20 = sphi 0, %s18
      %s21 = sphi 0, %s19
      %s22 = sphi 0, %s20
      %s23 = sphi 0, %s21
      %s35 = sphi 0, %s37
      %s38 = sphi 0, %s35
      %s39 = sphi 0, %s38
      %s55 = sphi 0, %s39
      %s61 = sphi 0, %s63
      %s64 = sphi 0, %s61
      %s65 = sphi 0, %s64
      %s81 = sphi 0, %s65
      %s89 = sphi 0, %s91
      %s92 = sphi 0, %s89
      %s93 = sphi 0, %s92
      %s109 = sphi 0, %s93
    $region4: #{tpu_custom_call.1} parent=1 // loop_header_branch
      %14 = sbr.rel (%p12) target = $region8
    $region5: #{tpu_custom_call.1} parent=1 // loop_body
      %s16 = ssub.s32 %s11, 1
      %s17 = ssub.s32 %s11, 2
      %s24 = sadd.s32 1, %s19
      %p25 = scmp.ge.s32.totalorder %s24, 2
      %s26 = scalar_select %p25, 0, %s24
      %s27 = sadd.s32 1, %s18
      %s28 = scalar_select %p25, %s27, %s18
      %p29 = scmp.ge.s32.totalorder %s28, 2
      %s30 = scalar_select %p29, 0, %s28
      %s31 = ssub.s32 %s18, %s30
      %s32 = ssub.s32 %s19, %s26
      %s33 = sor.u32 %s31, %s32
      %p34 = scmp.eq.s32.totalorder %s33, 0
      %s36 = sadd.s32 %s35, 1
      %s37 = scalar_select %p34, %s35, %s36
      %p40 = pneg %p34
      %p41 = scmp.eq.s32.totalorder %s11, 3
      %p42 = por %p40, %p41
      %p43 = scmp.ne.s32.totalorder %s35, %s38
      %p44 = scmp.eq.s32.totalorder %s11, 0
      %p45 = por %p43, %p44
      %p46 = scmp.ne.s32.totalorder %s35, %s38
      %p47 = scmp.eq.s32.totalorder %s16, 3
      %p48 = por %p46, %p47
      %p49 = scmp.ne.s32.totalorder %s38, %s39
      %p50 = scmp.eq.s32.totalorder %s16, 0
      %p51 = por %p49, %p50
      %p52 = scmp.ne.s32.totalorder %s38, %s39
      %p53 = scmp.eq.s32.totalorder %s17, 3
      %p54 = por %p52, %p53
      %p56 = scmp.ne.s32.totalorder %s39, %s55
      %p57 = scmp.eq.s32.totalorder %s17, 0
      %p58 = por %p56, %p57
      %s59 = ssub.s32 %s18, %s30
      %p60 = scmp.eq.s32.totalorder %s59, 0
      %s62 = sadd.s32 %s61, 1
      %s63 = scalar_select %p60, %s61, %s62
      %p66 = pneg %p60
      %p67 = scmp.eq.s32.totalorder %s11, 3
      %p68 = por %p66, %p67
      %p69 = scmp.ne.s32.totalorder %s61, %s64
      %p70 = scmp.eq.s32.totalorder %s11, 0
      %p71 = por %p69, %p70
      %p72 = scmp.ne.s32.totalorder %s61, %s64
      %p73 = scmp.eq.s32.totalorder %s16, 3
      %p74 = por %p72, %p73
      %p75 = scmp.ne.s32.totalorder %s64, %s65
      %p76 = scmp.eq.s32.totalorder %s16, 0
      %p77 = por %p75, %p76
      %p78 = scmp.ne.s32.totalorder %s64, %s65
      %p79 = scmp.eq.s32.totalorder %s17, 3
      %p80 = por %p78, %p79
      %p82 = scmp.ne.s32.totalorder %s65, %s81
      %p83 = scmp.eq.s32.totalorder %s17, 0
      %p84 = por %p82, %p83
      %s85 = ssub.s32 %s18, %s30
      %s86 = ssub.s32 %s19, %s26
      %s87 = sor.u32 %s85, %s86
      %p88 = scmp.eq.s32.totalorder %s87, 0
      %s90 = sadd.s32 %s89, 1
      %s91 = scalar_select %p88, %s89, %s90
      %p94 = pneg %p88
      %p95 = scmp.eq.s32.totalorder %s11, 3
      %p96 = por %p94, %p95
      %p97 = scmp.ne.s32.totalorder %s89, %s92
      %p98 = scmp.eq.s32.totalorder %s11, 0
      %p99 = por %p97, %p98
      %p100 = scmp.ne.s32.totalorder %s89, %s92
      %p101 = scmp.eq.s32.totalorder %s16, 3
      %p102 = por %p100, %p101
      %p103 = scmp.ne.s32.totalorder %s92, %s93
      %p104 = scmp.eq.s32.totalorder %s16, 0
      %p105 = por %p103, %p104
      %p106 = scmp.ne.s32.totalorder %s92, %s93
      %p107 = scmp.eq.s32.totalorder %s17, 3
      %p108 = por %p106, %p107
      %p110 = scmp.ne.s32.totalorder %s93, %s109
      %p111 = scmp.eq.s32.totalorder %s17, 0
      %p112 = por %p110, %p111
      %p113 = scmp.le.s32.totalorder 1, %s11
      %p114 = scmp.lt.s32.totalorder %s11, 5
      %p115 = pnand %p113, %p114
      %p116 = pneg %p115
      // Predicated region
      $region9: #{tpu_custom_call.1} parent=5 // pred_check
        _
      $region10: #{tpu_custom_call.1} parent=5 // pred_check_branch
        %118 = sbr.rel (%p115) target = $region12
      $region11: #{tpu_custom_call.1} parent=5 // pred_region
        %s119 = ssub.s32 %s11, 1
      $region12: #{tpu_custom_call.1} parent=5 // pred_fallthru
        _
      %p120 = scmp.lt.s32.totalorder %s11, 4
      // Predicated region
      $region13: #{tpu_custom_call.1} parent=5 // pred_check
        %p121 = pneg %p120
      $region14: #{tpu_custom_call.1} parent=5 // pred_check_branch
        %123 = sbr.rel (%p121) target = $region16
      $region15: #{tpu_custom_call.1} parent=5 // pred_region
        // Predicated region
        $region17: #{tpu_custom_call.1} parent=15 // pred_check
          %p124 = pneg %p45
        $region18: #{tpu_custom_call.1} parent=15 // pred_check_branch
          %126 = sbr.rel (%p124) target = $region20
        $region19: #{tpu_custom_call.1} parent=15 // pred_region
          %s127 = smul.u32 32, %s19
          %p128 = scmp.lt.s32.totalorder %s18, 1
          %s129 = scalar_select %p128, %s18, 1
          %p130 = scmp.lt.s32.totalorder %s127, 63
          %s131 = scalar_select %p130, %s127, 63
          %s132 = smul.addr %s129, 64
          %s133 = sadd.s32 %s131, %s132
          %s134 = smul.addr %s133, 8
          %s135 = scalar_lea.vmem %s0, %s134
          %s136 = smul.u32 32, %s19
        $region20: #{tpu_custom_call.1} parent=15 // pred_fallthru
          _
        // Predicated region
        $region21: #{tpu_custom_call.1} parent=15 // pred_check
          %p137 = pneg %p71
        $region22: #{tpu_custom_call.1} parent=15 // pred_check_branch
          %139 = sbr.rel (%p137) target = $region24
        $region23: #{tpu_custom_call.1} parent=15 // pred_region
          %p140 = scmp.lt.s32.totalorder %s18, 1
          %s141 = scalar_select %p140, %s18, 1
          %s142 = smul.addr %s141, 4
          %s143 = smul.addr %s142, 8
          %s144 = scalar_lea.vmem %s1, %s143
        $region24: #{tpu_custom_call.1} parent=15 // pred_fallthru
          _
      $region16: #{tpu_custom_call.1} parent=5 // pred_fallthru
        _
      %p145 = scmp.le.s32.totalorder 1, %s11
      %p146 = scmp.lt.s32.totalorder %s11, 5
      %p147 = pnand %p145, %p146
      %p148 = pneg %p147
      // Predicated region
      $region25: #{tpu_custom_call.1} parent=5 // pred_check
        _
      $region26: #{tpu_custom_call.1} parent=5 // pred_check_branch
        %150 = sbr.rel (%p147) target = $region28
      $region27: #{tpu_custom_call.1} parent=5 // pred_region
        %s151 = ssub.s32 %s11, 1
        %s152 = smul.u32 32, %s21
        %p153 = scmp.lt.s32.totalorder %s20, 1
        %s154 = scalar_select %p153, %s20, 1
        %p155 = scmp.lt.s32.totalorder %s152, 63
        %s156 = scalar_select %p155, %s152, 63
        %s157 = smul.addr %s154, 64
        %s158 = sadd.s32 %s156, %s157
        %s159 = smul.addr %s158, 8
        %s160 = scalar_lea.vmem %s0, %s159
        %p161 = pneg %p51
        %p162 = pneg %p48
        %p163 = scmp.lt.s32.totalorder %s20, 1
        %s164 = scalar_select %p163, %s20, 1
        %s165 = smul.addr %s164, 4
        %s166 = smul.addr %s165, 8
        %s167 = scalar_lea.vmem %s1, %s166
        %p168 = pneg %p77
        %p169 = pneg %p74
        %p170 = pneg %p105
        %p171 = pneg %p102
        %s172 = sand.u32 %s92, 1
        %s173 = scalar_lea.sflag [#allocation3], %s172
        %s174 = sand.u32 %s92, 1
        %s175 = smul.addr %s174, 1024
        %s176 = scalar_lea.vmem [#allocation2], %s175
        %s177 = smul.u32 32, %s21
        %p178 = scmp.lt.s32.totalorder %s20, 1
        %s179 = scalar_select %p178, %s20, 1
        %p180 = scmp.lt.s32.totalorder %s177, 63
        %s181 = scalar_select %p180, %s177, 63
        %s182 = smul.addr %s179, 64
        %s183 = sadd.s32 %s181, %s182
        %s184 = smul.addr %s183, 8
        %s185 = scalar_lea.vmem %s0, %s184
        %s186 = smul.u32 32, %s21
        %p187 = scmp.lt.s32.totalorder %s20, 1
        %s188 = scalar_select %p187, %s20, 1
        %s189 = smul.addr %s188, 4
        %s190 = smul.addr %s189, 8
        %s191 = scalar_lea.vmem %s1, %s190
        %s192 = smul.u32 32, %s21
        %v193 = vld [vmem:[%s185] sm:$0xff]
        %v194 = vld [vmem:[%s185 + $0x8] sm:$0xff]
        %v195 = vld [vmem:[%s185 + $0x10] sm:$0xff]
        %v196 = vld [vmem:[%s185 + $0x18] sm:$0xff]
        %v197 = vld [vmem:[%s185 + $0x20] sm:$0xff]
        %v198 = vld [vmem:[%s185 + $0x28] sm:$0xff]
        %v199 = vld [vmem:[%s185 + $0x30] sm:$0xff]
        %v200 = vld [vmem:[%s185 + $0x38] sm:$0xff]
        %v201 = vld [vmem:[%s185 + $0x40] sm:$0xff]
        %v202 = vld [vmem:[%s185 + $0x48] sm:$0xff]
        %v203 = vld [vmem:[%s185 + $0x50] sm:$0xff]
        %v204 = vld [vmem:[%s185 + $0x58] sm:$0xff]
        %v205 = vld [vmem:[%s185 + $0x60] sm:$0xff]
        %v206 = vld [vmem:[%s185 + $0x68] sm:$0xff]
        %v207 = vld [vmem:[%s185 + $0x70] sm:$0xff]
        %v208 = vld [vmem:[%s185 + $0x78] sm:$0xff]
        %v209 = vld [vmem:[%s185 + $0x80] sm:$0xff]
        %v210 = vld [vmem:[%s185 + $0x88] sm:$0xff]
        %v211 = vld [vmem:[%s185 + $0x90] sm:$0xff]
        %v212 = vld [vmem:[%s185 + $0x98] sm:$0xff]
        %v213 = vld [vmem:[%s185 + $0xa0] sm:$0xff]
        %v214 = vld [vmem:[%s185 + $0xa8] sm:$0xff]
        %v215 = vld [vmem:[%s185 + $0xb0] sm:$0xff]
        %v216 = vld [vmem:[%s185 + $0xb8] sm:$0xff]
        %v217 = vld [vmem:[%s185 + $0xc0] sm:$0xff]
        %v218 = vld [vmem:[%s185 + $0xc8] sm:$0xff]
        %v219 = vld [vmem:[%s185 + $0xd0] sm:$0xff]
        %v220 = vld [vmem:[%s185 + $0xd8] sm:$0xff]
        %v221 = vld [vmem:[%s185 + $0xe0] sm:$0xff]
        %v222 = vld [vmem:[%s185 + $0xe8] sm:$0xff]
        %v223 = vld [vmem:[%s185 + $0xf0] sm:$0xff]
        %v224 = vld [vmem:[%s185 + $0xf8] sm:$0xff]
        %v225 = vld [vmem:[%s191] sm:$0x1f]
        %v226 = vld [vmem:[%s191 + $0x8] sm:$0x1f]
        %v227 = vld [vmem:[%s191 + $0x10] sm:$0x1f]
        %v228 = vld [vmem:[%s191 + $0x18] sm:$0x1f]
        %vm229 = vcmask 39936
        %v231 = vsel %vm229, %v193, 0
        %v234 = vsel %vm229, %v194, 0
        %v237 = vsel %vm229, %v195, 0
        %v240 = vsel %vm229, %v196, 0
        %v243 = vsel %vm229, %v197, 0
        %v246 = vsel %vm229, %v198, 0
        %v249 = vsel %vm229, %v199, 0
        %v252 = vsel %vm229, %v200, 0
        %v255 = vsel %vm229, %v201, 0
        %v258 = vsel %vm229, %v202, 0
        %v261 = vsel %vm229, %v203, 0
        %v264 = vsel %vm229, %v204, 0
        %v267 = vsel %vm229, %v205, 0
        %v270 = vsel %vm229, %v206, 0
        %v273 = vsel %vm229, %v207, 0
        %v276 = vsel %vm229, %v208, 0
        %v279 = vsel %vm229, %v209, 0
        %v282 = vsel %vm229, %v210, 0
        %v285 = vsel %vm229, %v211, 0
        %v288 = vsel %vm229, %v212, 0
        %v291 = vsel %vm229, %v213, 0
        %v294 = vsel %vm229, %v214, 0
        %v297 = vsel %vm229, %v215, 0
        %v300 = vsel %vm229, %v216, 0
        %v303 = vsel %vm229, %v217, 0
        %v306 = vsel %vm229, %v218, 0
        %v309 = vsel %vm229, %v219, 0
        %v312 = vsel %vm229, %v220, 0
        %v315 = vsel %vm229, %v221, 0
        %v318 = vsel %vm229, %v222, 0
        %v321 = vsel %vm229, %v223, 0
        %v324 = vsel %vm229, %v224, 0
        %vm326 = vcmask 1044480
        %v328 = vsel %vm326, %v225, 0
        %v331 = vsel %vm326, %v226, 0
        %v334 = vsel %vm326, %v227, 0
        %v337 = vsel %vm326, %v228, 0
        %339 = vmatprep.subr.mxu0 0.0
        %340 = vmatpush1.msra.mxu0 0.0
        %341 = vmatprep.subr.mxu0 0.0
        %342 = vmatpush1.msra.mxu0 0.0
        %343 = vmatprep.subr.mxu0 0.0
        %344 = vmatpush1.msra.mxu0 0.0
        %345 = vmatprep.subr.mxu0 0.0
        %346 = vmatpush1.msra.mxu0 0.0
        %347 = vmatprep.subr.mxu0 0.0
        %348 = vmatpush1.msra.mxu0 0.0
        %349 = vmatprep.subr.mxu0 0.0
        %350 = vmatpush1.msra.mxu0 0.0
        %351 = vmatprep.subr.mxu0 0.0
        %352 = vmatpush1.msra.mxu0 0.0
        %353 = vmatprep.subr.mxu0 0.0
        %354 = vmatpush1.msra.mxu0 0.0
        %355 = vmatprep.subr.mxu0 0.0
        %356 = vmatpush1.msra.mxu0 0.0
        %357 = vmatprep.subr.mxu0 0.0
        %358 = vmatpush1.msra.mxu0 0.0
        %359 = vmatprep.subr.mxu0 0.0
        %360 = vmatpush1.msra.mxu0 0.0
        %361 = vmatprep.subr.mxu0 0.0
        %362 = vmatpush1.msra.mxu0 0.0
        %363 = vmatprep.subr.mxu0 0.0
        %364 = vmatpush1.msra.mxu0 0.0
        %365 = vmatprep.subr.mxu0 0.0
        %366 = vmatpush1.msra.mxu0 0.0
        %367 = vmatprep.subr.mxu0 0.0
        %368 = vmatpush1.msra.mxu0 0.0
        %v369 = vand.u32 %v331, 4294901760
        %370 = vmatprep.subr.mxu0 %v369
        %v371 = vand.u32 %v328, 4294901760
        %372 = vmatpush1.msra.mxu0 %v371
        %373 = vmatprep.subr.mxu0 0.0
        %374 = vmatpush2.msra.mxu0 0.0
        %375 = vmatprep.subr.mxu0 0.0
        %376 = vmatpush2.msra.mxu0 0.0
        %377 = vmatprep.subr.mxu0 0.0
        %378 = vmatpush2.msra.mxu0 0.0
        %379 = vmatprep.subr.mxu0 0.0
        %380 = vmatpush2.msra.mxu0 0.0
        %381 = vmatprep.subr.mxu0 0.0
        %382 = vmatpush2.msra.mxu0 0.0
        %383 = vmatprep.subr.mxu0 0.0
        %384 = vmatpush2.msra.mxu0 0.0
        %385 = vmatprep.subr.mxu0 0.0
        %386 = vmatpush2.msra.mxu0 0.0
        %387 = vmatprep.subr.mxu0 0.0
        %388 = vmatpush2.msra.mxu0 0.0
        %389 = vmatprep.subr.mxu0 0.0
        %390 = vmatpush2.msra.mxu0 0.0
        %391 = vmatprep.subr.mxu0 0.0
        %392 = vmatpush2.msra.mxu0 0.0
        %393 = vmatprep.subr.mxu0 0.0
        %394 = vmatpush2.msra.mxu0 0.0
        %395 = vmatprep.subr.mxu0 0.0
        %396 = vmatpush2.msra.mxu0 0.0
        %397 = vmatprep.subr.mxu0 0.0
        %398 = vmatpush2.msra.mxu0 0.0
        %399 = vmatprep.subr.mxu0 0.0
        %400 = vmatpush2.msra.mxu0 0.0
        %401 = vmatprep.subr.mxu0 0.0
        %402 = vmatpush2.msra.mxu0 0.0
        %403 = vmatprep.subr.mxu0 0.0
        %404 = vmatpush2.msra.mxu0 0.0
        %405 = vmatprep.mubr.f32.mxu0 0.0
        %v406 = vand.u32 %v231, 4294901760
        %v407 = vsub.f32 %v231, %v406
        %v408 = vand.u32 %v407, 4294901760
        %v409 = vsub.f32 %v407, %v408
        %v410 = vand.u32 %v409, 4294901760
        %411 = vmatmul.mubr.f32.gmra.mxu0 %v410
        %v412 = vpop.f32.mrf.mxu0
        %v413 = vadd.f32 0.0, %v412
        %v414 = vpop.f32.mrf.mxu0
        %v415 = vadd.f32 0.0, %v414
        %416 = vmatprep.mubr.f32.mxu0 0.0
        %v417 = vand.u32 %v234, 4294901760
        %v418 = vsub.f32 %v234, %v417
        %v419 = vand.u32 %v418, 4294901760
        %v420 = vsub.f32 %v418, %v419
        %v421 = vand.u32 %v420, 4294901760
        %422 = vmatmul.mubr.f32.gmra.mxu0 %v421
        %v423 = vpop.f32.mrf.mxu0
        %v424 = vadd.f32 0.0, %v423
        %v425 = vpop.f32.mrf.mxu0
        %v426 = vadd.f32 0.0, %v425
        %427 = vmatprep.mubr.f32.mxu0 0.0
        %v428 = vand.u32 %v237, 4294901760
        %v429 = vsub.f32 %v237, %v428
        %v430 = vand.u32 %v429, 4294901760
        %v431 = vsub.f32 %v429, %v430
        %v432 = vand.u32 %v431, 4294901760
        %433 = vmatmul.mubr.f32.gmra.mxu0 %v432
        %v434 = vpop.f32.mrf.mxu0
        %v435 = vadd.f32 0.0, %v434
        %v436 = vpop.f32.mrf.mxu0
        %v437 = vadd.f32 0.0, %v436
        %438 = vmatprep.mubr.f32.mxu0 0.0
        %v439 = vand.u32 %v240, 4294901760
        %v440 = vsub.f32 %v240, %v439
        %v441 = vand.u32 %v440, 4294901760
        %v442 = vsub.f32 %v440, %v441
        %v443 = vand.u32 %v442, 4294901760
        %444 = vmatmul.mubr.f32.gmra.mxu0 %v443
        %v445 = vpop.f32.mrf.mxu0
        %v446 = vadd.f32 0.0, %v445
        %v447 = vpop.f32.mrf.mxu0
        %v448 = vadd.f32 0.0, %v447
        %449 = vmatprep.mubr.f32.mxu0 0.0
        %v450 = vand.u32 %v243, 4294901760
        %v451 = vsub.f32 %v243, %v450
        %v452 = vand.u32 %v451, 4294901760
        %v453 = vsub.f32 %v451, %v452
        %v454 = vand.u32 %v453, 4294901760
        %455 = vmatmul.mubr.f32.gmra.mxu0 %v454
        %v456 = vpop.f32.mrf.mxu0
        %v457 = vadd.f32 0.0, %v456
        %v458 = vpop.f32.mrf.mxu0
        %v459 = vadd.f32 0.0, %v458
        %460 = vmatprep.mubr.f32.mxu0 0.0
        %v461 = vand.u32 %v246, 4294901760
        %v462 = vsub.f32 %v246, %v461
        %v463 = vand.u32 %v462, 4294901760
        %v464 = vsub.f32 %v462, %v463
        %v465 = vand.u32 %v464, 4294901760
        %466 = vmatmul.mubr.f32.gmra.mxu0 %v465
        %v467 = vpop.f32.mrf.mxu0
        %v468 = vadd.f32 0.0, %v467
        %v469 = vpop.f32.mrf.mxu0
        %v470 = vadd.f32 0.0, %v469
        %471 = vmatprep.mubr.f32.mxu0 0.0
        %v472 = vand.u32 %v249, 4294901760
        %v473 = vsub.f32 %v249, %v472
        %v474 = vand.u32 %v473, 4294901760
        %v475 = vsub.f32 %v473, %v474
        %v476 = vand.u32 %v475, 4294901760
        %477 = vmatmul.mubr.f32.gmra.mxu0 %v476
        %v478 = vpop.f32.mrf.mxu0
        %v479 = vadd.f32 0.0, %v478
        %v480 = vpop.f32.mrf.mxu0
        %v481 = vadd.f32 0.0, %v480
        %482 = vmatprep.mubr.f32.mxu0 0.0
        %v483 = vand.u32 %v252, 4294901760
        %v484 = vsub.f32 %v252, %v483
        %v485 = vand.u32 %v484, 4294901760
        %v486 = vsub.f32 %v484, %v485
        %v487 = vand.u32 %v486, 4294901760
        %488 = vmatmul.mubr.f32.gmra.mxu0 %v487
        %v489 = vpop.f32.mrf.mxu0
        %v490 = vadd.f32 0.0, %v489
        %v491 = vpop.f32.mrf.mxu0
        %v492 = vadd.f32 0.0, %v491
        %493 = vmatprep.mubr.f32.mxu0 0.0
        %v494 = vand.u32 %v255, 4294901760
        %v495 = vsub.f32 %v255, %v494
        %v496 = vand.u32 %v495, 4294901760
        %v497 = vsub.f32 %v495, %v496
        %v498 = vand.u32 %v497, 4294901760
        %499 = vmatmul.mubr.f32.gmra.mxu0 %v498
        %v500 = vpop.f32.mrf.mxu0
        %v501 = vadd.f32 0.0, %v500
        %v502 = vpop.f32.mrf.mxu0
        %v503 = vadd.f32 0.0, %v502
        %504 = vmatprep.mubr.f32.mxu0 0.0
        %v505 = vand.u32 %v258, 4294901760
        %v506 = vsub.f32 %v258, %v505
        %v507 = vand.u32 %v506, 4294901760
        %v508 = vsub.f32 %v506, %v507
        %v509 = vand.u32 %v508, 4294901760
        %510 = vmatmul.mubr.f32.gmra.mxu0 %v509
        %v511 = vpop.f32.mrf.mxu0
        %v512 = vadd.f32 0.0, %v511
        %v513 = vpop.f32.mrf.mxu0
        %v514 = vadd.f32 0.0, %v513
        %515 = vmatprep.mubr.f32.mxu0 0.0
        %v516 = vand.u32 %v261, 4294901760
        %v517 = vsub.f32 %v261, %v516
        %v518 = vand.u32 %v517, 4294901760
        %v519 = vsub.f32 %v517, %v518
        %v520 = vand.u32 %v519, 4294901760
        %521 = vmatmul.mubr.f32.gmra.mxu0 %v520
        %v522 = vpop.f32.mrf.mxu0
        %v523 = vadd.f32 0.0, %v522
        %v524 = vpop.f32.mrf.mxu0
        %v525 = vadd.f32 0.0, %v524
        %526 = vmatprep.mubr.f32.mxu0 0.0
        %v527 = vand.u32 %v264, 4294901760
        %v528 = vsub.f32 %v264, %v527
        %v529 = vand.u32 %v528, 4294901760
        %v530 = vsub.f32 %v528, %v529
        %v531 = vand.u32 %v530, 4294901760
        %532 = vmatmul.mubr.f32.gmra.mxu0 %v531
        %v533 = vpop.f32.mrf.mxu0
        %v534 = vadd.f32 0.0, %v533
        %v535 = vpop.f32.mrf.mxu0
        %v536 = vadd.f32 0.0, %v535
        %537 = vmatprep.mubr.f32.mxu0 0.0
        %v538 = vand.u32 %v267, 4294901760
        %v539 = vsub.f32 %v267, %v538
        %v540 = vand.u32 %v539, 4294901760
        %v541 = vsub.f32 %v539, %v540
        %v542 = vand.u32 %v541, 4294901760
        %543 = vmatmul.mubr.f32.gmra.mxu0 %v542
        %v544 = vpop.f32.mrf.mxu0
        %v545 = vadd.f32 0.0, %v544
        %v546 = vpop.f32.mrf.mxu0
        %v547 = vadd.f32 0.0, %v546
        %548 = vmatprep.mubr.f32.mxu0 0.0
        %v549 = vand.u32 %v270, 4294901760
        %v550 = vsub.f32 %v270, %v549
        %v551 = vand.u32 %v550, 4294901760
        %v552 = vsub.f32 %v550, %v551
        %v553 = vand.u32 %v552, 4294901760
        %554 = vmatmul.mubr.f32.gmra.mxu0 %v553
        %v555 = vpop.f32.mrf.mxu0
        %v556 = vadd.f32 0.0, %v555
        %v557 = vpop.f32.mrf.mxu0
        %v558 = vadd.f32 0.0, %v557
        %559 = vmatprep.mubr.f32.mxu0 0.0
        %v560 = vand.u32 %v273, 4294901760
        %v561 = vsub.f32 %v273, %v560
        %v562 = vand.u32 %v561, 4294901760
        %v563 = vsub.f32 %v561, %v562
        %v564 = vand.u32 %v563, 4294901760
        %565 = vmatmul.mubr.f32.gmra.mxu0 %v564
        %v566 = vpop.f32.mrf.mxu0
        %v567 = vadd.f32 0.0, %v566
        %v568 = vpop.f32.mrf.mxu0
        %v569 = vadd.f32 0.0, %v568
        %570 = vmatprep.mubr.f32.mxu0 0.0
        %v571 = vand.u32 %v276, 4294901760
        %v572 = vsub.f32 %v276, %v571
        %v573 = vand.u32 %v572, 4294901760
        %v574 = vsub.f32 %v572, %v573
        %v575 = vand.u32 %v574, 4294901760
        %576 = vmatmul.mubr.f32.gmra.mxu0 %v575
        %v577 = vpop.f32.mrf.mxu0
        %v578 = vadd.f32 0.0, %v577
        %v579 = vpop.f32.mrf.mxu0
        %v580 = vadd.f32 0.0, %v579
        %581 = vmatprep.mubr.f32.mxu0 0.0
        %v582 = vand.u32 %v279, 4294901760
        %v583 = vsub.f32 %v279, %v582
        %v584 = vand.u32 %v583, 4294901760
        %v585 = vsub.f32 %v583, %v584
        %v586 = vand.u32 %v585, 4294901760
        %587 = vmatmul.mubr.f32.gmra.mxu0 %v586
        %v588 = vpop.f32.mrf.mxu0
        %v589 = vadd.f32 0.0, %v588
        %v590 = vpop.f32.mrf.mxu0
        %v591 = vadd.f32 0.0, %v590
        %592 = vmatprep.mubr.f32.mxu0 0.0
        %v593 = vand.u32 %v282, 4294901760
        %v594 = vsub.f32 %v282, %v593
        %v595 = vand.u32 %v594, 4294901760
        %v596 = vsub.f32 %v594, %v595
        %v597 = vand.u32 %v596, 4294901760
        %598 = vmatmul.mubr.f32.gmra.mxu0 %v597
        %v599 = vpop.f32.mrf.mxu0
        %v600 = vadd.f32 0.0, %v599
        %v601 = vpop.f32.mrf.mxu0
        %v602 = vadd.f32 0.0, %v601
        %603 = vmatprep.mubr.f32.mxu0 0.0
        %v604 = vand.u32 %v285, 4294901760
        %v605 = vsub.f32 %v285, %v604
        %v606 = vand.u32 %v605, 4294901760
        %v607 = vsub.f32 %v605, %v606
        %v608 = vand.u32 %v607, 4294901760
        %609 = vmatmul.mubr.f32.gmra.mxu0 %v608
        %v610 = vpop.f32.mrf.mxu0
        %v611 = vadd.f32 0.0, %v610
        %v612 = vpop.f32.mrf.mxu0
        %v613 = vadd.f32 0.0, %v612
        %614 = vmatprep.mubr.f32.mxu0 0.0
        %v615 = vand.u32 %v288, 4294901760
        %v616 = vsub.f32 %v288, %v615
        %v617 = vand.u32 %v616, 4294901760
        %v618 = vsub.f32 %v616, %v617
        %v619 = vand.u32 %v618, 4294901760
        %620 = vmatmul.mubr.f32.gmra.mxu0 %v619
        %v621 = vpop.f32.mrf.mxu0
        %v622 = vadd.f32 0.0, %v621
        %v623 = vpop.f32.mrf.mxu0
        %v624 = vadd.f32 0.0, %v623
        %625 = vmatprep.mubr.f32.mxu0 0.0
        %v626 = vand.u32 %v291, 4294901760
        %v627 = vsub.f32 %v291, %v626
        %v628 = vand.u32 %v627, 4294901760
        %v629 = vsub.f32 %v627, %v628
        %v630 = vand.u32 %v629, 4294901760
        %631 = vmatmul.mubr.f32.gmra.mxu0 %v630
        %v632 = vpop.f32.mrf.mxu0
        %v633 = vadd.f32 0.0, %v632
        %v634 = vpop.f32.mrf.mxu0
        %v635 = vadd.f32 0.0, %v634
        %636 = vmatprep.mubr.f32.mxu0 0.0
        %v637 = vand.u32 %v294, 4294901760
        %v638 = vsub.f32 %v294, %v637
        %v639 = vand.u32 %v638, 4294901760
        %v640 = vsub.f32 %v638, %v639
        %v641 = vand.u32 %v640, 4294901760
        %642 = vmatmul.mubr.f32.gmra.mxu0 %v641
        %v643 = vpop.f32.mrf.mxu0
        %v644 = vadd.f32 0.0, %v643
        %v645 = vpop.f32.mrf.mxu0
        %v646 = vadd.f32 0.0, %v645
        %647 = vmatprep.mubr.f32.mxu0 0.0
        %v648 = vand.u32 %v297, 4294901760
        %v649 = vsub.f32 %v297, %v648
        %v650 = vand.u32 %v649, 4294901760
        %v651 = vsub.f32 %v649, %v650
        %v652 = vand.u32 %v651, 4294901760
        %653 = vmatmul.mubr.f32.gmra.mxu0 %v652
        %v654 = vpop.f32.mrf.mxu0
        %v655 = vadd.f32 0.0, %v654
        %v656 = vpop.f32.mrf.mxu0
        %v657 = vadd.f32 0.0, %v656
        %658 = vmatprep.mubr.f32.mxu0 0.0
        %v659 = vand.u32 %v300, 4294901760
        %v660 = vsub.f32 %v300, %v659
        %v661 = vand.u32 %v660, 4294901760
        %v662 = vsub.f32 %v660, %v661
        %v663 = vand.u32 %v662, 4294901760
        %664 = vmatmul.mubr.f32.gmra.mxu0 %v663
        %v665 = vpop.f32.mrf.mxu0
        %v666 = vadd.f32 0.0, %v665
        %v667 = vpop.f32.mrf.mxu0
        %v668 = vadd.f32 0.0, %v667
        %669 = vmatprep.mubr.f32.mxu0 0.0
        %v670 = vand.u32 %v303, 4294901760
        %v671 = vsub.f32 %v303, %v670
        %v672 = vand.u32 %v671, 4294901760
        %v673 = vsub.f32 %v671, %v672
        %v674 = vand.u32 %v673, 4294901760
        %675 = vmatmul.mubr.f32.gmra.mxu0 %v674
        %v676 = vpop.f32.mrf.mxu0
        %v677 = vadd.f32 0.0, %v676
        %v678 = vpop.f32.mrf.mxu0
        %v679 = vadd.f32 0.0, %v678
        %680 = vmatprep.mubr.f32.mxu0 0.0
        %v681 = vand.u32 %v306, 4294901760
        %v682 = vsub.f32 %v306, %v681
        %v683 = vand.u32 %v682, 4294901760
        %v684 = vsub.f32 %v682, %v683
        %v685 = vand.u32 %v684, 4294901760
        %686 = vmatmul.mubr.f32.gmra.mxu0 %v685
        %v687 = vpop.f32.mrf.mxu0
        %v688 = vadd.f32 0.0, %v687
        %v689 = vpop.f32.mrf.mxu0
        %v690 = vadd.f32 0.0, %v689
        %691 = vmatprep.mubr.f32.mxu0 0.0
        %v692 = vand.u32 %v309, 4294901760
        %v693 = vsub.f32 %v309, %v692
        %v694 = vand.u32 %v693, 4294901760
        %v695 = vsub.f32 %v693, %v694
        %v696 = vand.u32 %v695, 4294901760
        %697 = vmatmul.mubr.f32.gmra.mxu0 %v696
        %v698 = vpop.f32.mrf.mxu0
        %v699 = vadd.f32 0.0, %v698
        %v700 = vpop.f32.mrf.mxu0
        %v701 = vadd.f32 0.0, %v700
        %702 = vmatprep.mubr.f32.mxu0 0.0
        %v703 = vand.u32 %v312, 4294901760
        %v704 = vsub.f32 %v312, %v703
        %v705 = vand.u32 %v704, 4294901760
        %v706 = vsub.f32 %v704, %v705
        %v707 = vand.u32 %v706, 4294901760
        %708 = vmatmul.mubr.f32.gmra.mxu0 %v707
        %v709 = vpop.f32.mrf.mxu0
        %v710 = vadd.f32 0.0, %v709
        %v711 = vpop.f32.mrf.mxu0
        %v712 = vadd.f32 0.0, %v711
        %713 = vmatprep.mubr.f32.mxu0 0.0
        %v714 = vand.u32 %v315, 4294901760
        %v715 = vsub.f32 %v315, %v714
        %v716 = vand.u32 %v715, 4294901760
        %v717 = vsub.f32 %v715, %v716
        %v718 = vand.u32 %v717, 4294901760
        %719 = vmatmul.mubr.f32.gmra.mxu0 %v718
        %v720 = vpop.f32.mrf.mxu0
        %v721 = vadd.f32 0.0, %v720
        %v722 = vpop.f32.mrf.mxu0
        %v723 = vadd.f32 0.0, %v722
        %724 = vmatprep.mubr.f32.mxu0 0.0
        %v725 = vand.u32 %v318, 4294901760
        %v726 = vsub.f32 %v318, %v725
        %v727 = vand.u32 %v726, 4294901760
        %v728 = vsub.f32 %v726, %v727
        %v729 = vand.u32 %v728, 4294901760
        %730 = vmatmul.mubr.f32.gmra.mxu0 %v729
        %v731 = vpop.f32.mrf.mxu0
        %v732 = vadd.f32 0.0, %v731
        %v733 = vpop.f32.mrf.mxu0
        %v734 = vadd.f32 0.0, %v733
        %735 = vmatprep.mubr.f32.mxu0 0.0
        %v736 = vand.u32 %v321, 4294901760
        %v737 = vsub.f32 %v321, %v736
        %v738 = vand.u32 %v737, 4294901760
        %v739 = vsub.f32 %v737, %v738
        %v740 = vand.u32 %v739, 4294901760
        %741 = vmatmul.mubr.f32.gmra.mxu0 %v740
        %v742 = vpop.f32.mrf.mxu0
        %v743 = vadd.f32 0.0, %v742
        %v744 = vpop.f32.mrf.mxu0
        %v745 = vadd.f32 0.0, %v744
        %746 = vmatprep.mubr.f32.mxu0 0.0
        %v747 = vand.u32 %v324, 4294901760
        %v748 = vsub.f32 %v324, %v747
        %v749 = vand.u32 %v748, 4294901760
        %v750 = vsub.f32 %v748, %v749
        %v751 = vand.u32 %v750, 4294901760
        %752 = vmatmul.mubr.f32.gmra.mxu0 %v751
        %v753 = vpop.f32.mrf.mxu0
        %v754 = vadd.f32 0.0, %v753
        %v755 = vpop.f32.mrf.mxu0
        %v756 = vadd.f32 0.0, %v755
        %757 = vdwg.mxu0
        %758 = vmatprep.subr.mxu0 0.0
        %759 = vmatpush1.msra.mxu0 0.0
        %760 = vmatprep.subr.mxu0 0.0
        %761 = vmatpush1.msra.mxu0 0.0
        %762 = vmatprep.subr.mxu0 0.0
        %763 = vmatpush1.msra.mxu0 0.0
        %764 = vmatprep.subr.mxu0 0.0
        %765 = vmatpush1.msra.mxu0 0.0
        %766 = vmatprep.subr.mxu0 0.0
        %767 = vmatpush1.msra.mxu0 0.0
        %768 = vmatprep.subr.mxu0 0.0
        %769 = vmatpush1.msra.mxu0 0.0
        %770 = vmatprep.subr.mxu0 0.0
        %771 = vmatpush1.msra.mxu0 0.0
        %772 = vmatprep.subr.mxu0 0.0
        %773 = vmatpush1.msra.mxu0 0.0
        %774 = vmatprep.subr.mxu0 0.0
        %775 = vmatpush1.msra.mxu0 0.0
        %776 = vmatprep.subr.mxu0 0.0
        %777 = vmatpush1.msra.mxu0 0.0
        %778 = vmatprep.subr.mxu0 0.0
        %779 = vmatpush1.msra.mxu0 0.0
        %780 = vmatprep.subr.mxu0 0.0
        %781 = vmatpush1.msra.mxu0 0.0
        %782 = vmatprep.subr.mxu0 0.0
        %783 = vmatpush1.msra.mxu0 0.0
        %784 = vmatprep.subr.mxu0 0.0
        %785 = vmatpush1.msra.mxu0 0.0
        %786 = vmatprep.subr.mxu0 0.0
        %787 = vmatpush1.msra.mxu0 0.0
        %v788 = vand.u32 %v331, 4294901760
        %v789 = vsub.f32 %v331, %v788
        %v790 = vand.u32 %v789, 4294901760
        %v791 = vsub.f32 %v789, %v790
        %v792 = vand.u32 %v791, 4294901760
        %793 = vmatprep.subr.mxu0 %v792
        %v794 = vand.u32 %v328, 4294901760
        %v795 = vsub.f32 %v328, %v794
        %v796 = vand.u32 %v795, 4294901760
        %v797 = vsub.f32 %v795, %v796
        %v798 = vand.u32 %v797, 4294901760
        %799 = vmatpush1.msra.mxu0 %v798
        %800 = vmatprep.subr.mxu0 0.0
        %801 = vmatpush2.msra.mxu0 0.0
        %802 = vmatprep.subr.mxu0 0.0
        %803 = vmatpush2.msra.mxu0 0.0
        %804 = vmatprep.subr.mxu0 0.0
        %805 = vmatpush2.msra.mxu0 0.0
        %806 = vmatprep.subr.mxu0 0.0
        %807 = vmatpush2.msra.mxu0 0.0
        %808 = vmatprep.subr.mxu0 0.0
        %809 = vmatpush2.msra.mxu0 0.0
        %810 = vmatprep.subr.mxu0 0.0
        %811 = vmatpush2.msra.mxu0 0.0
        %812 = vmatprep.subr.mxu0 0.0
        %813 = vmatpush2.msra.mxu0 0.0
        %814 = vmatprep.subr.mxu0 0.0
        %815 = vmatpush2.msra.mxu0 0.0
        %816 = vmatprep.subr.mxu0 0.0
        %817 = vmatpush2.msra.mxu0 0.0
        %818 = vmatprep.subr.mxu0 0.0
        %819 = vmatpush2.msra.mxu0 0.0
        %820 = vmatprep.subr.mxu0 0.0
        %821 = vmatpush2.msra.mxu0 0.0
        %822 = vmatprep.subr.mxu0 0.0
        %823 = vmatpush2.msra.mxu0 0.0
        %824 = vmatprep.subr.mxu0 0.0
        %825 = vmatpush2.msra.mxu0 0.0
        %826 = vmatprep.subr.mxu0 0.0
        %827 = vmatpush2.msra.mxu0 0.0
        %828 = vmatprep.subr.mxu0 0.0
        %829 = vmatpush2.msra.mxu0 0.0
        %830 = vmatprep.subr.mxu0 0.0
        %831 = vmatpush2.msra.mxu0 0.0
        %832 = vmatprep.mubr.f32.mxu0 0.0
        %v833 = vand.u32 %v231, 4294901760
        %834 = vmatmul.mubr.f32.gmra.mxu0 %v833
        %v835 = vpop.f32.mrf.mxu0
        %v836 = vadd.f32 %v413, %v835
        %v837 = vpop.f32.mrf.mxu0
        %v838 = vadd.f32 %v415, %v837
        %839 = vmatprep.mubr.f32.mxu0 0.0
        %v840 = vand.u32 %v234, 4294901760
        %841 = vmatmul.mubr.f32.gmra.mxu0 %v840
        %v842 = vpop.f32.mrf.mxu0
        %v843 = vadd.f32 %v424, %v842
        %v844 = vpop.f32.mrf.mxu0
        %v845 = vadd.f32 %v426, %v844
        %846 = vmatprep.mubr.f32.mxu0 0.0
        %v847 = vand.u32 %v237, 4294901760
        %848 = vmatmul.mubr.f32.gmra.mxu0 %v847
        %v849 = vpop.f32.mrf.mxu0
        %v850 = vadd.f32 %v435, %v849
        %v851 = vpop.f32.mrf.mxu0
        %v852 = vadd.f32 %v437, %v851
        %853 = vmatprep.mubr.f32.mxu0 0.0
        %v854 = vand.u32 %v240, 4294901760
        %855 = vmatmul.mubr.f32.gmra.mxu0 %v854
        %v856 = vpop.f32.mrf.mxu0
        %v857 = vadd.f32 %v446, %v856
        %v858 = vpop.f32.mrf.mxu0
        %v859 = vadd.f32 %v448, %v858
        %860 = vmatprep.mubr.f32.mxu0 0.0
        %v861 = vand.u32 %v243, 4294901760
        %862 = vmatmul.mubr.f32.gmra.mxu0 %v861
        %v863 = vpop.f32.mrf.mxu0
        %v864 = vadd.f32 %v457, %v863
        %v865 = vpop.f32.mrf.mxu0
        %v866 = vadd.f32 %v459, %v865
        %867 = vmatprep.mubr.f32.mxu0 0.0
        %v868 = vand.u32 %v246, 4294901760
        %869 = vmatmul.mubr.f32.gmra.mxu0 %v868
        %v870 = vpop.f32.mrf.mxu0
        %v871 = vadd.f32 %v468, %v870
        %v872 = vpop.f32.mrf.mxu0
        %v873 = vadd.f32 %v470, %v872
        %874 = vmatprep.mubr.f32.mxu0 0.0
        %v875 = vand.u32 %v249, 4294901760
        %876 = vmatmul.mubr.f32.gmra.mxu0 %v875
        %v877 = vpop.f32.mrf.mxu0
        %v878 = vadd.f32 %v479, %v877
        %v879 = vpop.f32.mrf.mxu0
        %v880 = vadd.f32 %v481, %v879
        %881 = vmatprep.mubr.f32.mxu0 0.0
        %v882 = vand.u32 %v252, 4294901760
        %883 = vmatmul.mubr.f32.gmra.mxu0 %v882
        %v884 = vpop.f32.mrf.mxu0
        %v885 = vadd.f32 %v490, %v884
        %v886 = vpop.f32.mrf.mxu0
        %v887 = vadd.f32 %v492, %v886
        %888 = vmatprep.mubr.f32.mxu0 0.0
        %v889 = vand.u32 %v255, 4294901760
        %890 = vmatmul.mubr.f32.gmra.mxu0 %v889
        %v891 = vpop.f32.mrf.mxu0
        %v892 = vadd.f32 %v501, %v891
        %v893 = vpop.f32.mrf.mxu0
        %v894 = vadd.f32 %v503, %v893
        %895 = vmatprep.mubr.f32.mxu0 0.0
        %v896 = vand.u32 %v258, 4294901760
        %897 = vmatmul.mubr.f32.gmra.mxu0 %v896
        %v898 = vpop.f32.mrf.mxu0
        %v899 = vadd.f32 %v512, %v898
        %v900 = vpop.f32.mrf.mxu0
        %v901 = vadd.f32 %v514, %v900
        %902 = vmatprep.mubr.f32.mxu0 0.0
        %v903 = vand.u32 %v261, 4294901760
        %904 = vmatmul.mubr.f32.gmra.mxu0 %v903
        %v905 = vpop.f32.mrf.mxu0
        %v906 = vadd.f32 %v523, %v905
        %v907 = vpop.f32.mrf.mxu0
        %v908 = vadd.f32 %v525, %v907
        %909 = vmatprep.mubr.f32.mxu0 0.0
        %v910 = vand.u32 %v264, 4294901760
        %911 = vmatmul.mubr.f32.gmra.mxu0 %v910
        %v912 = vpop.f32.mrf.mxu0
        %v913 = vadd.f32 %v534, %v912
        %v914 = vpop.f32.mrf.mxu0
        %v915 = vadd.f32 %v536, %v914
        %916 = vmatprep.mubr.f32.mxu0 0.0
        %v917 = vand.u32 %v267, 4294901760
        %918 = vmatmul.mubr.f32.gmra.mxu0 %v917
        %v919 = vpop.f32.mrf.mxu0
        %v920 = vadd.f32 %v545, %v919
        %v921 = vpop.f32.mrf.mxu0
        %v922 = vadd.f32 %v547, %v921
        %923 = vmatprep.mubr.f32.mxu0 0.0
        %v924 = vand.u32 %v270, 4294901760
        %925 = vmatmul.mubr.f32.gmra.mxu0 %v924
        %v926 = vpop.f32.mrf.mxu0
        %v927 = vadd.f32 %v556, %v926
        %v928 = vpop.f32.mrf.mxu0
        %v929 = vadd.f32 %v558, %v928
        %930 = vmatprep.mubr.f32.mxu0 0.0
        %v931 = vand.u32 %v273, 4294901760
        %932 = vmatmul.mubr.f32.gmra.mxu0 %v931
        %v933 = vpop.f32.mrf.mxu0
        %v934 = vadd.f32 %v567, %v933
        %v935 = vpop.f32.mrf.mxu0
        %v936 = vadd.f32 %v569, %v935
        %937 = vmatprep.mubr.f32.mxu0 0.0
        %v938 = vand.u32 %v276, 4294901760
        %939 = vmatmul.mubr.f32.gmra.mxu0 %v938
        %v940 = vpop.f32.mrf.mxu0
        %v941 = vadd.f32 %v578, %v940
        %v942 = vpop.f32.mrf.mxu0
        %v943 = vadd.f32 %v580, %v942
        %944 = vmatprep.mubr.f32.mxu0 0.0
        %v945 = vand.u32 %v279, 4294901760
        %946 = vmatmul.mubr.f32.gmra.mxu0 %v945
        %v947 = vpop.f32.mrf.mxu0
        %v948 = vadd.f32 %v589, %v947
        %v949 = vpop.f32.mrf.mxu0
        %v950 = vadd.f32 %v591, %v949
        %951 = vmatprep.mubr.f32.mxu0 0.0
        %v952 = vand.u32 %v282, 4294901760
        %953 = vmatmul.mubr.f32.gmra.mxu0 %v952
        %v954 = vpop.f32.mrf.mxu0
        %v955 = vadd.f32 %v600, %v954
        %v956 = vpop.f32.mrf.mxu0
        %v957 = vadd.f32 %v602, %v956
        %958 = vmatprep.mubr.f32.mxu0 0.0
        %v959 = vand.u32 %v285, 4294901760
        %960 = vmatmul.mubr.f32.gmra.mxu0 %v959
        %v961 = vpop.f32.mrf.mxu0
        %v962 = vadd.f32 %v611, %v961
        %v963 = vpop.f32.mrf.mxu0
        %v964 = vadd.f32 %v613, %v963
        %965 = vmatprep.mubr.f32.mxu0 0.0
        %v966 = vand.u32 %v288, 4294901760
        %967 = vmatmul.mubr.f32.gmra.mxu0 %v966
        %v968 = vpop.f32.mrf.mxu0
        %v969 = vadd.f32 %v622, %v968
        %v970 = vpop.f32.mrf.mxu0
        %v971 = vadd.f32 %v624, %v970
        %972 = vmatprep.mubr.f32.mxu0 0.0
        %v973 = vand.u32 %v291, 4294901760
        %974 = vmatmul.mubr.f32.gmra.mxu0 %v973
        %v975 = vpop.f32.mrf.mxu0
        %v976 = vadd.f32 %v633, %v975
        %v977 = vpop.f32.mrf.mxu0
        %v978 = vadd.f32 %v635, %v977
        %979 = vmatprep.mubr.f32.mxu0 0.0
        %v980 = vand.u32 %v294, 4294901760
        %981 = vmatmul.mubr.f32.gmra.mxu0 %v980
        %v982 = vpop.f32.mrf.mxu0
        %v983 = vadd.f32 %v644, %v982
        %v984 = vpop.f32.mrf.mxu0
        %v985 = vadd.f32 %v646, %v984
        %986 = vmatprep.mubr.f32.mxu0 0.0
        %v987 = vand.u32 %v297, 4294901760
        %988 = vmatmul.mubr.f32.gmra.mxu0 %v987
        %v989 = vpop.f32.mrf.mxu0
        %v990 = vadd.f32 %v655, %v989
        %v991 = vpop.f32.mrf.mxu0
        %v992 = vadd.f32 %v657, %v991
        %993 = vmatprep.mubr.f32.mxu0 0.0
        %v994 = vand.u32 %v300, 4294901760
        %995 = vmatmul.mubr.f32.gmra.mxu0 %v994
        %v996 = vpop.f32.mrf.mxu0
        %v997 = vadd.f32 %v666, %v996
        %v998 = vpop.f32.mrf.mxu0
        %v999 = vadd.f32 %v668, %v998
        %1000 = vmatprep.mubr.f32.mxu0 0.0
        %v1001 = vand.u32 %v303, 4294901760
        %1002 = vmatmul.mubr.f32.gmra.mxu0 %v1001
        %v1003 = vpop.f32.mrf.mxu0
        %v1004 = vadd.f32 %v677, %v1003
        %v1005 = vpop.f32.mrf.mxu0
        %v1006 = vadd.f32 %v679, %v1005
        %1007 = vmatprep.mubr.f32.mxu0 0.0
        %v1008 = vand.u32 %v306, 4294901760
        %1009 = vmatmul.mubr.f32.gmra.mxu0 %v1008
        %v1010 = vpop.f32.mrf.mxu0
        %v1011 = vadd.f32 %v688, %v1010
        %v1012 = vpop.f32.mrf.mxu0
        %v1013 = vadd.f32 %v690, %v1012
        %1014 = vmatprep.mubr.f32.mxu0 0.0
        %v1015 = vand.u32 %v309, 4294901760
        %1016 = vmatmul.mubr.f32.gmra.mxu0 %v1015
        %v1017 = vpop.f32.mrf.mxu0
        %v1018 = vadd.f32 %v699, %v1017
        %v1019 = vpop.f32.mrf.mxu0
        %v1020 = vadd.f32 %v701, %v1019
        %1021 = vmatprep.mubr.f32.mxu0 0.0
        %v1022 = vand.u32 %v312, 4294901760
        %1023 = vmatmul.mubr.f32.gmra.mxu0 %v1022
        %v1024 = vpop.f32.mrf.mxu0
        %v1025 = vadd.f32 %v710, %v1024
        %v1026 = vpop.f32.mrf.mxu0
        %v1027 = vadd.f32 %v712, %v1026
        %1028 = vmatprep.mubr.f32.mxu0 0.0
        %v1029 = vand.u32 %v315, 4294901760
        %1030 = vmatmul.mubr.f32.gmra.mxu0 %v1029
        %v1031 = vpop.f32.mrf.mxu0
        %v1032 = vadd.f32 %v721, %v1031
        %v1033 = vpop.f32.mrf.mxu0
        %v1034 = vadd.f32 %v723, %v1033
        %1035 = vmatprep.mubr.f32.mxu0 0.0
        %v1036 = vand.u32 %v318, 4294901760
        %1037 = vmatmul.mubr.f32.gmra.mxu0 %v1036
        %v1038 = vpop.f32.mrf.mxu0
        %v1039 = vadd.f32 %v732, %v1038
        %v1040 = vpop.f32.mrf.mxu0
        %v1041 = vadd.f32 %v734, %v1040
        %1042 = vmatprep.mubr.f32.mxu0 0.0
        %v1043 = vand.u32 %v321, 4294901760
        %1044 = vmatmul.mubr.f32.gmra.mxu0 %v1043
        %v1045 = vpop.f32.mrf.mxu0
        %v1046 = vadd.f32 %v743, %v1045
        %v1047 = vpop.f32.mrf.mxu0
        %v1048 = vadd.f32 %v745, %v1047
        %1049 = vmatprep.mubr.f32.mxu0 0.0
        %v1050 = vand.u32 %v324, 4294901760
        %1051 = vmatmul.mubr.f32.gmra.mxu0 %v1050
        %v1052 = vpop.f32.mrf.mxu0
        %v1053 = vadd.f32 %v754, %v1052
        %v1054 = vpop.f32.mrf.mxu0
        %v1055 = vadd.f32 %v756, %v1054
        %1056 = vdwg.mxu0
        %1057 = vmatprep.subr.mxu0 0.0
        %1058 = vmatpush1.msra.mxu0 0.0
        %1059 = vmatprep.subr.mxu0 0.0
        %1060 = vmatpush1.msra.mxu0 0.0
        %1061 = vmatprep.subr.mxu0 0.0
        %1062 = vmatpush1.msra.mxu0 0.0
        %1063 = vmatprep.subr.mxu0 0.0
        %1064 = vmatpush1.msra.mxu0 0.0
        %1065 = vmatprep.subr.mxu0 0.0
        %1066 = vmatpush1.msra.mxu0 0.0
        %1067 = vmatprep.subr.mxu0 0.0
        %1068 = vmatpush1.msra.mxu0 0.0
        %1069 = vmatprep.subr.mxu0 0.0
        %1070 = vmatpush1.msra.mxu0 0.0
        %1071 = vmatprep.subr.mxu0 0.0
        %1072 = vmatpush1.msra.mxu0 0.0
        %1073 = vmatprep.subr.mxu0 0.0
        %1074 = vmatpush1.msra.mxu0 0.0
        %1075 = vmatprep.subr.mxu0 0.0
        %1076 = vmatpush1.msra.mxu0 0.0
        %1077 = vmatprep.subr.mxu0 0.0
        %1078 = vmatpush1.msra.mxu0 0.0
        %1079 = vmatprep.subr.mxu0 0.0
        %1080 = vmatpush1.msra.mxu0 0.0
        %1081 = vmatprep.subr.mxu0 0.0
        %1082 = vmatpush1.msra.mxu0 0.0
        %1083 = vmatprep.subr.mxu0 0.0
        %1084 = vmatpush1.msra.mxu0 0.0
        %1085 = vmatprep.subr.mxu0 0.0
        %1086 = vmatpush1.msra.mxu0 0.0
        %v1087 = vand.u32 %v331, 4294901760
        %v1088 = vsub.f32 %v331, %v1087
        %1089 = vmatprep.subr.mxu0 %v1088
        %v1090 = vand.u32 %v328, 4294901760
        %v1091 = vsub.f32 %v328, %v1090
        %1092 = vmatpush1.msra.mxu0 %v1091
        %1093 = vmatprep.subr.mxu0 0.0
        %1094 = vmatpush2.msra.mxu0 0.0
        %1095 = vmatprep.subr.mxu0 0.0
        %1096 = vmatpush2.msra.mxu0 0.0
        %1097 = vmatprep.subr.mxu0 0.0
        %1098 = vmatpush2.msra.mxu0 0.0
        %1099 = vmatprep.subr.mxu0 0.0
        %1100 = vmatpush2.msra.mxu0 0.0
        %1101 = vmatprep.subr.mxu0 0.0
        %1102 = vmatpush2.msra.mxu0 0.0
        %1103 = vmatprep.subr.mxu0 0.0
        %1104 = vmatpush2.msra.mxu0 0.0
        %1105 = vmatprep.subr.mxu0 0.0
        %1106 = vmatpush2.msra.mxu0 0.0
        %1107 = vmatprep.subr.mxu0 0.0
        %1108 = vmatpush2.msra.mxu0 0.0
        %1109 = vmatprep.subr.mxu0 0.0
        %1110 = vmatpush2.msra.mxu0 0.0
        %1111 = vmatprep.subr.mxu0 0.0
        %1112 = vmatpush2.msra.mxu0 0.0
        %1113 = vmatprep.subr.mxu0 0.0
        %1114 = vmatpush2.msra.mxu0 0.0
        %1115 = vmatprep.subr.mxu0 0.0
        %1116 = vmatpush2.msra.mxu0 0.0
        %1117 = vmatprep.subr.mxu0 0.0
        %1118 = vmatpush2.msra.mxu0 0.0
        %1119 = vmatprep.subr.mxu0 0.0
        %1120 = vmatpush2.msra.mxu0 0.0
        %1121 = vmatprep.subr.mxu0 0.0
        %1122 = vmatpush2.msra.mxu0 0.0
        %1123 = vmatprep.subr.mxu0 0.0
        %1124 = vmatpush2.msra.mxu0 0.0
        %1125 = vmatprep.mubr.f32.mxu0 0.0
        %v1126 = vand.u32 %v231, 4294901760
        %v1127 = vsub.f32 %v231, %v1126
        %1128 = vmatmul.mubr.f32.gmra.mxu0 %v1127
        %v1129 = vpop.f32.mrf.mxu0
        %v1130 = vadd.f32 %v836, %v1129
        %v1131 = vpop.f32.mrf.mxu0
        %v1132 = vadd.f32 %v838, %v1131
        %1133 = vmatprep.mubr.f32.mxu0 0.0
        %v1134 = vand.u32 %v234, 4294901760
        %v1135 = vsub.f32 %v234, %v1134
        %1136 = vmatmul.mubr.f32.gmra.mxu0 %v1135
        %v1137 = vpop.f32.mrf.mxu0
        %v1138 = vadd.f32 %v843, %v1137
        %v1139 = vpop.f32.mrf.mxu0
        %v1140 = vadd.f32 %v845, %v1139
        %1141 = vmatprep.mubr.f32.mxu0 0.0
        %v1142 = vand.u32 %v237, 4294901760
        %v1143 = vsub.f32 %v237, %v1142
        %1144 = vmatmul.mubr.f32.gmra.mxu0 %v1143
        %v1145 = vpop.f32.mrf.mxu0
        %v1146 = vadd.f32 %v850, %v1145
        %v1147 = vpop.f32.mrf.mxu0
        %v1148 = vadd.f32 %v852, %v1147
        %1149 = vmatprep.mubr.f32.mxu0 0.0
        %v1150 = vand.u32 %v240, 4294901760
        %v1151 = vsub.f32 %v240, %v1150
        %1152 = vmatmul.mubr.f32.gmra.mxu0 %v1151
        %v1153 = vpop.f32.mrf.mxu0
        %v1154 = vadd.f32 %v857, %v1153
        %v1155 = vpop.f32.mrf.mxu0
        %v1156 = vadd.f32 %v859, %v1155
        %1157 = vmatprep.mubr.f32.mxu0 0.0
        %v1158 = vand.u32 %v243, 4294901760
        %v1159 = vsub.f32 %v243, %v1158
        %1160 = vmatmul.mubr.f32.gmra.mxu0 %v1159
        %v1161 = vpop.f32.mrf.mxu0
        %v1162 = vadd.f32 %v864, %v1161
        %v1163 = vpop.f32.mrf.mxu0
        %v1164 = vadd.f32 %v866, %v1163
        %1165 = vmatprep.mubr.f32.mxu0 0.0
        %v1166 = vand.u32 %v246, 4294901760
        %v1167 = vsub.f32 %v246, %v1166
        %1168 = vmatmul.mubr.f32.gmra.mxu0 %v1167
        %v1169 = vpop.f32.mrf.mxu0
        %v1170 = vadd.f32 %v871, %v1169
        %v1171 = vpop.f32.mrf.mxu0
        %v1172 = vadd.f32 %v873, %v1171
        %1173 = vmatprep.mubr.f32.mxu0 0.0
        %v1174 = vand.u32 %v249, 4294901760
        %v1175 = vsub.f32 %v249, %v1174
        %1176 = vmatmul.mubr.f32.gmra.mxu0 %v1175
        %v1177 = vpop.f32.mrf.mxu0
        %v1178 = vadd.f32 %v878, %v1177
        %v1179 = vpop.f32.mrf.mxu0
        %v1180 = vadd.f32 %v880, %v1179
        %1181 = vmatprep.mubr.f32.mxu0 0.0
        %v1182 = vand.u32 %v252, 4294901760
        %v1183 = vsub.f32 %v252, %v1182
        %1184 = vmatmul.mubr.f32.gmra.mxu0 %v1183
        %v1185 = vpop.f32.mrf.mxu0
        %v1186 = vadd.f32 %v885, %v1185
        %v1187 = vpop.f32.mrf.mxu0
        %v1188 = vadd.f32 %v887, %v1187
        %1189 = vmatprep.mubr.f32.mxu0 0.0
        %v1190 = vand.u32 %v255, 4294901760
        %v1191 = vsub.f32 %v255, %v1190
        %1192 = vmatmul.mubr.f32.gmra.mxu0 %v1191
        %v1193 = vpop.f32.mrf.mxu0
        %v1194 = vadd.f32 %v892, %v1193
        %v1195 = vpop.f32.mrf.mxu0
        %v1196 = vadd.f32 %v894, %v1195
        %1197 = vmatprep.mubr.f32.mxu0 0.0
        %v1198 = vand.u32 %v258, 4294901760
        %v1199 = vsub.f32 %v258, %v1198
        %1200 = vmatmul.mubr.f32.gmra.mxu0 %v1199
        %v1201 = vpop.f32.mrf.mxu0
        %v1202 = vadd.f32 %v899, %v1201
        %v1203 = vpop.f32.mrf.mxu0
        %v1204 = vadd.f32 %v901, %v1203
        %1205 = vmatprep.mubr.f32.mxu0 0.0
        %v1206 = vand.u32 %v261, 4294901760
        %v1207 = vsub.f32 %v261, %v1206
        %1208 = vmatmul.mubr.f32.gmra.mxu0 %v1207
        %v1209 = vpop.f32.mrf.mxu0
        %v1210 = vadd.f32 %v906, %v1209
        %v1211 = vpop.f32.mrf.mxu0
        %v1212 = vadd.f32 %v908, %v1211
        %1213 = vmatprep.mubr.f32.mxu0 0.0
        %v1214 = vand.u32 %v264, 4294901760
        %v1215 = vsub.f32 %v264, %v1214
        %1216 = vmatmul.mubr.f32.gmra.mxu0 %v1215
        %v1217 = vpop.f32.mrf.mxu0
        %v1218 = vadd.f32 %v913, %v1217
        %v1219 = vpop.f32.mrf.mxu0
        %v1220 = vadd.f32 %v915, %v1219
        %1221 = vmatprep.mubr.f32.mxu0 0.0
        %v1222 = vand.u32 %v267, 4294901760
        %v1223 = vsub.f32 %v267, %v1222
        %1224 = vmatmul.mubr.f32.gmra.mxu0 %v1223
        %v1225 = vpop.f32.mrf.mxu0
        %v1226 = vadd.f32 %v920, %v1225
        %v1227 = vpop.f32.mrf.mxu0
        %v1228 = vadd.f32 %v922, %v1227
        %1229 = vmatprep.mubr.f32.mxu0 0.0
        %v1230 = vand.u32 %v270, 4294901760
        %v1231 = vsub.f32 %v270, %v1230
        %1232 = vmatmul.mubr.f32.gmra.mxu0 %v1231
        %v1233 = vpop.f32.mrf.mxu0
        %v1234 = vadd.f32 %v927, %v1233
        %v1235 = vpop.f32.mrf.mxu0
        %v1236 = vadd.f32 %v929, %v1235
        %1237 = vmatprep.mubr.f32.mxu0 0.0
        %v1238 = vand.u32 %v273, 4294901760
        %v1239 = vsub.f32 %v273, %v1238
        %1240 = vmatmul.mubr.f32.gmra.mxu0 %v1239
        %v1241 = vpop.f32.mrf.mxu0
        %v1242 = vadd.f32 %v934, %v1241
        %v1243 = vpop.f32.mrf.mxu0
        %v1244 = vadd.f32 %v936, %v1243
        %1245 = vmatprep.mubr.f32.mxu0 0.0
        %v1246 = vand.u32 %v276, 4294901760
        %v1247 = vsub.f32 %v276, %v1246
        %1248 = vmatmul.mubr.f32.gmra.mxu0 %v1247
        %v1249 = vpop.f32.mrf.mxu0
        %v1250 = vadd.f32 %v941, %v1249
        %v1251 = vpop.f32.mrf.mxu0
        %v1252 = vadd.f32 %v943, %v1251
        %1253 = vmatprep.mubr.f32.mxu0 0.0
        %v1254 = vand.u32 %v279, 4294901760
        %v1255 = vsub.f32 %v279, %v1254
        %1256 = vmatmul.mubr.f32.gmra.mxu0 %v1255
        %v1257 = vpop.f32.mrf.mxu0
        %v1258 = vadd.f32 %v948, %v1257
        %v1259 = vpop.f32.mrf.mxu0
        %v1260 = vadd.f32 %v950, %v1259
        %1261 = vmatprep.mubr.f32.mxu0 0.0
        %v1262 = vand.u32 %v282, 4294901760
        %v1263 = vsub.f32 %v282, %v1262
        %1264 = vmatmul.mubr.f32.gmra.mxu0 %v1263
        %v1265 = vpop.f32.mrf.mxu0
        %v1266 = vadd.f32 %v955, %v1265
        %v1267 = vpop.f32.mrf.mxu0
        %v1268 = vadd.f32 %v957, %v1267
        %1269 = vmatprep.mubr.f32.mxu0 0.0
        %v1270 = vand.u32 %v285, 4294901760
        %v1271 = vsub.f32 %v285, %v1270
        %1272 = vmatmul.mubr.f32.gmra.mxu0 %v1271
        %v1273 = vpop.f32.mrf.mxu0
        %v1274 = vadd.f32 %v962, %v1273
        %v1275 = vpop.f32.mrf.mxu0
        %v1276 = vadd.f32 %v964, %v1275
        %1277 = vmatprep.mubr.f32.mxu0 0.0
        %v1278 = vand.u32 %v288, 4294901760
        %v1279 = vsub.f32 %v288, %v1278
        %1280 = vmatmul.mubr.f32.gmra.mxu0 %v1279
        %v1281 = vpop.f32.mrf.mxu0
        %v1282 = vadd.f32 %v969, %v1281
        %v1283 = vpop.f32.mrf.mxu0
        %v1284 = vadd.f32 %v971, %v1283
        %1285 = vmatprep.mubr.f32.mxu0 0.0
        %v1286 = vand.u32 %v291, 4294901760
        %v1287 = vsub.f32 %v291, %v1286
        %1288 = vmatmul.mubr.f32.gmra.mxu0 %v1287
        %v1289 = vpop.f32.mrf.mxu0
        %v1290 = vadd.f32 %v976, %v1289
        %v1291 = vpop.f32.mrf.mxu0
        %v1292 = vadd.f32 %v978, %v1291
        %1293 = vmatprep.mubr.f32.mxu0 0.0
        %v1294 = vand.u32 %v294, 4294901760
        %v1295 = vsub.f32 %v294, %v1294
        %1296 = vmatmul.mubr.f32.gmra.mxu0 %v1295
        %v1297 = vpop.f32.mrf.mxu0
        %v1298 = vadd.f32 %v983, %v1297
        %v1299 = vpop.f32.mrf.mxu0
        %v1300 = vadd.f32 %v985, %v1299
        %1301 = vmatprep.mubr.f32.mxu0 0.0
        %v1302 = vand.u32 %v297, 4294901760
        %v1303 = vsub.f32 %v297, %v1302
        %1304 = vmatmul.mubr.f32.gmra.mxu0 %v1303
        %v1305 = vpop.f32.mrf.mxu0
        %v1306 = vadd.f32 %v990, %v1305
        %v1307 = vpop.f32.mrf.mxu0
        %v1308 = vadd.f32 %v992, %v1307
        %1309 = vmatprep.mubr.f32.mxu0 0.0
        %v1310 = vand.u32 %v300, 4294901760
        %v1311 = vsub.f32 %v300, %v1310
        %1312 = vmatmul.mubr.f32.gmra.mxu0 %v1311
        %v1313 = vpop.f32.mrf.mxu0
        %v1314 = vadd.f32 %v997, %v1313
        %v1315 = vpop.f32.mrf.mxu0
        %v1316 = vadd.f32 %v999, %v1315
        %1317 = vmatprep.mubr.f32.mxu0 0.0
        %v1318 = vand.u32 %v303, 4294901760
        %v1319 = vsub.f32 %v303, %v1318
        %1320 = vmatmul.mubr.f32.gmra.mxu0 %v1319
        %v1321 = vpop.f32.mrf.mxu0
        %v1322 = vadd.f32 %v1004, %v1321
        %v1323 = vpop.f32.mrf.mxu0
        %v1324 = vadd.f32 %v1006, %v1323
        %1325 = vmatprep.mubr.f32.mxu0 0.0
        %v1326 = vand.u32 %v306, 4294901760
        %v1327 = vsub.f32 %v306, %v1326
        %1328 = vmatmul.mubr.f32.gmra.mxu0 %v1327
        %v1329 = vpop.f32.mrf.mxu0
        %v1330 = vadd.f32 %v1011, %v1329
        %v1331 = vpop.f32.mrf.mxu0
        %v1332 = vadd.f32 %v1013, %v1331
        %1333 = vmatprep.mubr.f32.mxu0 0.0
        %v1334 = vand.u32 %v309, 4294901760
        %v1335 = vsub.f32 %v309, %v1334
        %1336 = vmatmul.mubr.f32.gmra.mxu0 %v1335
        %v1337 = vpop.f32.mrf.mxu0
        %v1338 = vadd.f32 %v1018, %v1337
        %v1339 = vpop.f32.mrf.mxu0
        %v1340 = vadd.f32 %v1020, %v1339
        %1341 = vmatprep.mubr.f32.mxu0 0.0
        %v1342 = vand.u32 %v312, 4294901760
        %v1343 = vsub.f32 %v312, %v1342
        %1344 = vmatmul.mubr.f32.gmra.mxu0 %v1343
        %v1345 = vpop.f32.mrf.mxu0
        %v1346 = vadd.f32 %v1025, %v1345
        %v1347 = vpop.f32.mrf.mxu0
        %v1348 = vadd.f32 %v1027, %v1347
        %1349 = vmatprep.mubr.f32.mxu0 0.0
        %v1350 = vand.u32 %v315, 4294901760
        %v1351 = vsub.f32 %v315, %v1350
        %1352 = vmatmul.mubr.f32.gmra.mxu0 %v1351
        %v1353 = vpop.f32.mrf.mxu0
        %v1354 = vadd.f32 %v1032, %v1353
        %v1355 = vpop.f32.mrf.mxu0
        %v1356 = vadd.f32 %v1034, %v1355
        %1357 = vmatprep.mubr.f32.mxu0 0.0
        %v1358 = vand.u32 %v318, 4294901760
        %v1359 = vsub.f32 %v318, %v1358
        %1360 = vmatmul.mubr.f32.gmra.mxu0 %v1359
        %v1361 = vpop.f32.mrf.mxu0
        %v1362 = vadd.f32 %v1039, %v1361
        %v1363 = vpop.f32.mrf.mxu0
        %v1364 = vadd.f32 %v1041, %v1363
        %1365 = vmatprep.mubr.f32.mxu0 0.0
        %v1366 = vand.u32 %v321, 4294901760
        %v1367 = vsub.f32 %v321, %v1366
        %1368 = vmatmul.mubr.f32.gmra.mxu0 %v1367
        %v1369 = vpop.f32.mrf.mxu0
        %v1370 = vadd.f32 %v1046, %v1369
        %v1371 = vpop.f32.mrf.mxu0
        %v1372 = vadd.f32 %v1048, %v1371
        %1373 = vmatprep.mubr.f32.mxu0 0.0
        %v1374 = vand.u32 %v324, 4294901760
        %v1375 = vsub.f32 %v324, %v1374
        %1376 = vmatmul.mubr.f32.gmra.mxu0 %v1375
        %v1377 = vpop.f32.mrf.mxu0
        %v1378 = vadd.f32 %v1053, %v1377
        %v1379 = vpop.f32.mrf.mxu0
        %v1380 = vadd.f32 %v1055, %v1379
        %1381 = vdwg.mxu0
        %1382 = vmatprep.subr.mxu0 0.0
        %1383 = vmatpush1.msra.mxu0 0.0
        %1384 = vmatprep.subr.mxu0 0.0
        %1385 = vmatpush1.msra.mxu0 0.0
        %1386 = vmatprep.subr.mxu0 0.0
        %1387 = vmatpush1.msra.mxu0 0.0
        %1388 = vmatprep.subr.mxu0 0.0
        %1389 = vmatpush1.msra.mxu0 0.0
        %1390 = vmatprep.subr.mxu0 0.0
        %1391 = vmatpush1.msra.mxu0 0.0
        %1392 = vmatprep.subr.mxu0 0.0
        %1393 = vmatpush1.msra.mxu0 0.0
        %1394 = vmatprep.subr.mxu0 0.0
        %1395 = vmatpush1.msra.mxu0 0.0
        %1396 = vmatprep.subr.mxu0 0.0
        %1397 = vmatpush1.msra.mxu0 0.0
        %1398 = vmatprep.subr.mxu0 0.0
        %1399 = vmatpush1.msra.mxu0 0.0
        %1400 = vmatprep.subr.mxu0 0.0
        %1401 = vmatpush1.msra.mxu0 0.0
        %1402 = vmatprep.subr.mxu0 0.0
        %1403 = vmatpush1.msra.mxu0 0.0
        %1404 = vmatprep.subr.mxu0 0.0
        %1405 = vmatpush1.msra.mxu0 0.0
        %1406 = vmatprep.subr.mxu0 0.0
        %1407 = vmatpush1.msra.mxu0 0.0
        %1408 = vmatprep.subr.mxu0 0.0
        %1409 = vmatpush1.msra.mxu0 0.0
        %1410 = vmatprep.subr.mxu0 0.0
        %1411 = vmatpush1.msra.mxu0 0.0
        %v1412 = vand.u32 %v331, 4294901760
        %1413 = vmatprep.subr.mxu0 %v1412
        %v1414 = vand.u32 %v328, 4294901760
        %1415 = vmatpush1.msra.mxu0 %v1414
        %1416 = vmatprep.subr.mxu0 0.0
        %1417 = vmatpush2.msra.mxu0 0.0
        %1418 = vmatprep.subr.mxu0 0.0
        %1419 = vmatpush2.msra.mxu0 0.0
        %1420 = vmatprep.subr.mxu0 0.0
        %1421 = vmatpush2.msra.mxu0 0.0
        %1422 = vmatprep.subr.mxu0 0.0
        %1423 = vmatpush2.msra.mxu0 0.0
        %1424 = vmatprep.subr.mxu0 0.0
        %1425 = vmatpush2.msra.mxu0 0.0
        %1426 = vmatprep.subr.mxu0 0.0
        %1427 = vmatpush2.msra.mxu0 0.0
        %1428 = vmatprep.subr.mxu0 0.0
        %1429 = vmatpush2.msra.mxu0 0.0
        %1430 = vmatprep.subr.mxu0 0.0
        %1431 = vmatpush2.msra.mxu0 0.0
        %1432 = vmatprep.subr.mxu0 0.0
        %1433 = vmatpush2.msra.mxu0 0.0
        %1434 = vmatprep.subr.mxu0 0.0
        %1435 = vmatpush2.msra.mxu0 0.0
        %1436 = vmatprep.subr.mxu0 0.0
        %1437 = vmatpush2.msra.mxu0 0.0
        %1438 = vmatprep.subr.mxu0 0.0
        %1439 = vmatpush2.msra.mxu0 0.0
        %1440 = vmatprep.subr.mxu0 0.0
        %1441 = vmatpush2.msra.mxu0 0.0
        %1442 = vmatprep.subr.mxu0 0.0
        %1443 = vmatpush2.msra.mxu0 0.0
        %1444 = vmatprep.subr.mxu0 0.0
        %1445 = vmatpush2.msra.mxu0 0.0
        %1446 = vmatprep.subr.mxu0 0.0
        %1447 = vmatpush2.msra.mxu0 0.0
        %1448 = vmatprep.mubr.f32.mxu0 0.0
        %v1449 = vand.u32 %v231, 4294901760
        %v1450 = vsub.f32 %v231, %v1449
        %v1451 = vand.u32 %v1450, 4294901760
        %1452 = vmatmul.mubr.f32.gmra.mxu0 %v1451
        %v1453 = vpop.f32.mrf.mxu0
        %v1454 = vadd.f32 %v1130, %v1453
        %v1455 = vpop.f32.mrf.mxu0
        %v1456 = vadd.f32 %v1132, %v1455
        %1457 = vmatprep.mubr.f32.mxu0 0.0
        %v1458 = vand.u32 %v234, 4294901760
        %v1459 = vsub.f32 %v234, %v1458
        %v1460 = vand.u32 %v1459, 4294901760
        %1461 = vmatmul.mubr.f32.gmra.mxu0 %v1460
        %v1462 = vpop.f32.mrf.mxu0
        %v1463 = vadd.f32 %v1138, %v1462
        %v1464 = vpop.f32.mrf.mxu0
        %v1465 = vadd.f32 %v1140, %v1464
        %1466 = vmatprep.mubr.f32.mxu0 0.0
        %v1467 = vand.u32 %v237, 4294901760
        %v1468 = vsub.f32 %v237, %v1467
        %v1469 = vand.u32 %v1468, 4294901760
        %1470 = vmatmul.mubr.f32.gmra.mxu0 %v1469
        %v1471 = vpop.f32.mrf.mxu0
        %v1472 = vadd.f32 %v1146, %v1471
        %v1473 = vpop.f32.mrf.mxu0
        %v1474 = vadd.f32 %v1148, %v1473
        %1475 = vmatprep.mubr.f32.mxu0 0.0
        %v1476 = vand.u32 %v240, 4294901760
        %v1477 = vsub.f32 %v240, %v1476
        %v1478 = vand.u32 %v1477, 4294901760
        %1479 = vmatmul.mubr.f32.gmra.mxu0 %v1478
        %v1480 = vpop.f32.mrf.mxu0
        %v1481 = vadd.f32 %v1154, %v1480
        %v1482 = vpop.f32.mrf.mxu0
        %v1483 = vadd.f32 %v1156, %v1482
        %1484 = vmatprep.mubr.f32.mxu0 0.0
        %v1485 = vand.u32 %v243, 4294901760
        %v1486 = vsub.f32 %v243, %v1485
        %v1487 = vand.u32 %v1486, 4294901760
        %1488 = vmatmul.mubr.f32.gmra.mxu0 %v1487
        %v1489 = vpop.f32.mrf.mxu0
        %v1490 = vadd.f32 %v1162, %v1489
        %v1491 = vpop.f32.mrf.mxu0
        %v1492 = vadd.f32 %v1164, %v1491
        %1493 = vmatprep.mubr.f32.mxu0 0.0
        %v1494 = vand.u32 %v246, 4294901760
        %v1495 = vsub.f32 %v246, %v1494
        %v1496 = vand.u32 %v1495, 4294901760
        %1497 = vmatmul.mubr.f32.gmra.mxu0 %v1496
        %v1498 = vpop.f32.mrf.mxu0
        %v1499 = vadd.f32 %v1170, %v1498
        %v1500 = vpop.f32.mrf.mxu0
        %v1501 = vadd.f32 %v1172, %v1500
        %1502 = vmatprep.mubr.f32.mxu0 0.0
        %v1503 = vand.u32 %v249, 4294901760
        %v1504 = vsub.f32 %v249, %v1503
        %v1505 = vand.u32 %v1504, 4294901760
        %1506 = vmatmul.mubr.f32.gmra.mxu0 %v1505
        %v1507 = vpop.f32.mrf.mxu0
        %v1508 = vadd.f32 %v1178, %v1507
        %v1509 = vpop.f32.mrf.mxu0
        %v1510 = vadd.f32 %v1180, %v1509
        %1511 = vmatprep.mubr.f32.mxu0 0.0
        %v1512 = vand.u32 %v252, 4294901760
        %v1513 = vsub.f32 %v252, %v1512
        %v1514 = vand.u32 %v1513, 4294901760
        %1515 = vmatmul.mubr.f32.gmra.mxu0 %v1514
        %v1516 = vpop.f32.mrf.mxu0
        %v1517 = vadd.f32 %v1186, %v1516
        %v1518 = vpop.f32.mrf.mxu0
        %v1519 = vadd.f32 %v1188, %v1518
        %1520 = vmatprep.mubr.f32.mxu0 0.0
        %v1521 = vand.u32 %v255, 4294901760
        %v1522 = vsub.f32 %v255, %v1521
        %v1523 = vand.u32 %v1522, 4294901760
        %1524 = vmatmul.mubr.f32.gmra.mxu0 %v1523
        %v1525 = vpop.f32.mrf.mxu0
        %v1526 = vadd.f32 %v1194, %v1525
        %v1527 = vpop.f32.mrf.mxu0
        %v1528 = vadd.f32 %v1196, %v1527
        %1529 = vmatprep.mubr.f32.mxu0 0.0
        %v1530 = vand.u32 %v258, 4294901760
        %v1531 = vsub.f32 %v258, %v1530
        %v1532 = vand.u32 %v1531, 4294901760
        %1533 = vmatmul.mubr.f32.gmra.mxu0 %v1532
        %v1534 = vpop.f32.mrf.mxu0
        %v1535 = vadd.f32 %v1202, %v1534
        %v1536 = vpop.f32.mrf.mxu0
        %v1537 = vadd.f32 %v1204, %v1536
        %1538 = vmatprep.mubr.f32.mxu0 0.0
        %v1539 = vand.u32 %v261, 4294901760
        %v1540 = vsub.f32 %v261, %v1539
        %v1541 = vand.u32 %v1540, 4294901760
        %1542 = vmatmul.mubr.f32.gmra.mxu0 %v1541
        %v1543 = vpop.f32.mrf.mxu0
        %v1544 = vadd.f32 %v1210, %v1543
        %v1545 = vpop.f32.mrf.mxu0
        %v1546 = vadd.f32 %v1212, %v1545
        %1547 = vmatprep.mubr.f32.mxu0 0.0
        %v1548 = vand.u32 %v264, 4294901760
        %v1549 = vsub.f32 %v264, %v1548
        %v1550 = vand.u32 %v1549, 4294901760
        %1551 = vmatmul.mubr.f32.gmra.mxu0 %v1550
        %v1552 = vpop.f32.mrf.mxu0
        %v1553 = vadd.f32 %v1218, %v1552
        %v1554 = vpop.f32.mrf.mxu0
        %v1555 = vadd.f32 %v1220, %v1554
        %1556 = vmatprep.mubr.f32.mxu0 0.0
        %v1557 = vand.u32 %v267, 4294901760
        %v1558 = vsub.f32 %v267, %v1557
        %v1559 = vand.u32 %v1558, 4294901760
        %1560 = vmatmul.mubr.f32.gmra.mxu0 %v1559
        %v1561 = vpop.f32.mrf.mxu0
        %v1562 = vadd.f32 %v1226, %v1561
        %v1563 = vpop.f32.mrf.mxu0
        %v1564 = vadd.f32 %v1228, %v1563
        %1565 = vmatprep.mubr.f32.mxu0 0.0
        %v1566 = vand.u32 %v270, 4294901760
        %v1567 = vsub.f32 %v270, %v1566
        %v1568 = vand.u32 %v1567, 4294901760
        %1569 = vmatmul.mubr.f32.gmra.mxu0 %v1568
        %v1570 = vpop.f32.mrf.mxu0
        %v1571 = vadd.f32 %v1234, %v1570
        %v1572 = vpop.f32.mrf.mxu0
        %v1573 = vadd.f32 %v1236, %v1572
        %1574 = vmatprep.mubr.f32.mxu0 0.0
        %v1575 = vand.u32 %v273, 4294901760
        %v1576 = vsub.f32 %v273, %v1575
        %v1577 = vand.u32 %v1576, 4294901760
        %1578 = vmatmul.mubr.f32.gmra.mxu0 %v1577
        %v1579 = vpop.f32.mrf.mxu0
        %v1580 = vadd.f32 %v1242, %v1579
        %v1581 = vpop.f32.mrf.mxu0
        %v1582 = vadd.f32 %v1244, %v1581
        %1583 = vmatprep.mubr.f32.mxu0 0.0
        %v1584 = vand.u32 %v276, 4294901760
        %v1585 = vsub.f32 %v276, %v1584
        %v1586 = vand.u32 %v1585, 4294901760
        %1587 = vmatmul.mubr.f32.gmra.mxu0 %v1586
        %v1588 = vpop.f32.mrf.mxu0
        %v1589 = vadd.f32 %v1250, %v1588
        %v1590 = vpop.f32.mrf.mxu0
        %v1591 = vadd.f32 %v1252, %v1590
        %1592 = vmatprep.mubr.f32.mxu0 0.0
        %v1593 = vand.u32 %v279, 4294901760
        %v1594 = vsub.f32 %v279, %v1593
        %v1595 = vand.u32 %v1594, 4294901760
        %1596 = vmatmul.mubr.f32.gmra.mxu0 %v1595
        %v1597 = vpop.f32.mrf.mxu0
        %v1598 = vadd.f32 %v1258, %v1597
        %v1599 = vpop.f32.mrf.mxu0
        %v1600 = vadd.f32 %v1260, %v1599
        %1601 = vmatprep.mubr.f32.mxu0 0.0
        %v1602 = vand.u32 %v282, 4294901760
        %v1603 = vsub.f32 %v282, %v1602
        %v1604 = vand.u32 %v1603, 4294901760
        %1605 = vmatmul.mubr.f32.gmra.mxu0 %v1604
        %v1606 = vpop.f32.mrf.mxu0
        %v1607 = vadd.f32 %v1266, %v1606
        %v1608 = vpop.f32.mrf.mxu0
        %v1609 = vadd.f32 %v1268, %v1608
        %1610 = vmatprep.mubr.f32.mxu0 0.0
        %v1611 = vand.u32 %v285, 4294901760
        %v1612 = vsub.f32 %v285, %v1611
        %v1613 = vand.u32 %v1612, 4294901760
        %1614 = vmatmul.mubr.f32.gmra.mxu0 %v1613
        %v1615 = vpop.f32.mrf.mxu0
        %v1616 = vadd.f32 %v1274, %v1615
        %v1617 = vpop.f32.mrf.mxu0
        %v1618 = vadd.f32 %v1276, %v1617
        %1619 = vmatprep.mubr.f32.mxu0 0.0
        %v1620 = vand.u32 %v288, 4294901760
        %v1621 = vsub.f32 %v288, %v1620
        %v1622 = vand.u32 %v1621, 4294901760
        %1623 = vmatmul.mubr.f32.gmra.mxu0 %v1622
        %v1624 = vpop.f32.mrf.mxu0
        %v1625 = vadd.f32 %v1282, %v1624
        %v1626 = vpop.f32.mrf.mxu0
        %v1627 = vadd.f32 %v1284, %v1626
        %1628 = vmatprep.mubr.f32.mxu0 0.0
        %v1629 = vand.u32 %v291, 4294901760
        %v1630 = vsub.f32 %v291, %v1629
        %v1631 = vand.u32 %v1630, 4294901760
        %1632 = vmatmul.mubr.f32.gmra.mxu0 %v1631
        %v1633 = vpop.f32.mrf.mxu0
        %v1634 = vadd.f32 %v1290, %v1633
        %v1635 = vpop.f32.mrf.mxu0
        %v1636 = vadd.f32 %v1292, %v1635
        %1637 = vmatprep.mubr.f32.mxu0 0.0
        %v1638 = vand.u32 %v294, 4294901760
        %v1639 = vsub.f32 %v294, %v1638
        %v1640 = vand.u32 %v1639, 4294901760
        %1641 = vmatmul.mubr.f32.gmra.mxu0 %v1640
        %v1642 = vpop.f32.mrf.mxu0
        %v1643 = vadd.f32 %v1298, %v1642
        %v1644 = vpop.f32.mrf.mxu0
        %v1645 = vadd.f32 %v1300, %v1644
        %1646 = vmatprep.mubr.f32.mxu0 0.0
        %v1647 = vand.u32 %v297, 4294901760
        %v1648 = vsub.f32 %v297, %v1647
        %v1649 = vand.u32 %v1648, 4294901760
        %1650 = vmatmul.mubr.f32.gmra.mxu0 %v1649
        %v1651 = vpop.f32.mrf.mxu0
        %v1652 = vadd.f32 %v1306, %v1651
        %v1653 = vpop.f32.mrf.mxu0
        %v1654 = vadd.f32 %v1308, %v1653
        %1655 = vmatprep.mubr.f32.mxu0 0.0
        %v1656 = vand.u32 %v300, 4294901760
        %v1657 = vsub.f32 %v300, %v1656
        %v1658 = vand.u32 %v1657, 4294901760
        %1659 = vmatmul.mubr.f32.gmra.mxu0 %v1658
        %v1660 = vpop.f32.mrf.mxu0
        %v1661 = vadd.f32 %v1314, %v1660
        %v1662 = vpop.f32.mrf.mxu0
        %v1663 = vadd.f32 %v1316, %v1662
        %1664 = vmatprep.mubr.f32.mxu0 0.0
        %v1665 = vand.u32 %v303, 4294901760
        %v1666 = vsub.f32 %v303, %v1665
        %v1667 = vand.u32 %v1666, 4294901760
        %1668 = vmatmul.mubr.f32.gmra.mxu0 %v1667
        %v1669 = vpop.f32.mrf.mxu0
        %v1670 = vadd.f32 %v1322, %v1669
        %v1671 = vpop.f32.mrf.mxu0
        %v1672 = vadd.f32 %v1324, %v1671
        %1673 = vmatprep.mubr.f32.mxu0 0.0
        %v1674 = vand.u32 %v306, 4294901760
        %v1675 = vsub.f32 %v306, %v1674
        %v1676 = vand.u32 %v1675, 4294901760
        %1677 = vmatmul.mubr.f32.gmra.mxu0 %v1676
        %v1678 = vpop.f32.mrf.mxu0
        %v1679 = vadd.f32 %v1330, %v1678
        %v1680 = vpop.f32.mrf.mxu0
        %v1681 = vadd.f32 %v1332, %v1680
        %1682 = vmatprep.mubr.f32.mxu0 0.0
        %v1683 = vand.u32 %v309, 4294901760
        %v1684 = vsub.f32 %v309, %v1683
        %v1685 = vand.u32 %v1684, 4294901760
        %1686 = vmatmul.mubr.f32.gmra.mxu0 %v1685
        %v1687 = vpop.f32.mrf.mxu0
        %v1688 = vadd.f32 %v1338, %v1687
        %v1689 = vpop.f32.mrf.mxu0
        %v1690 = vadd.f32 %v1340, %v1689
        %1691 = vmatprep.mubr.f32.mxu0 0.0
        %v1692 = vand.u32 %v312, 4294901760
        %v1693 = vsub.f32 %v312, %v1692
        %v1694 = vand.u32 %v1693, 4294901760
        %1695 = vmatmul.mubr.f32.gmra.mxu0 %v1694
        %v1696 = vpop.f32.mrf.mxu0
        %v1697 = vadd.f32 %v1346, %v1696
        %v1698 = vpop.f32.mrf.mxu0
        %v1699 = vadd.f32 %v1348, %v1698
        %1700 = vmatprep.mubr.f32.mxu0 0.0
        %v1701 = vand.u32 %v315, 4294901760
        %v1702 = vsub.f32 %v315, %v1701
        %v1703 = vand.u32 %v1702, 4294901760
        %1704 = vmatmul.mubr.f32.gmra.mxu0 %v1703
        %v1705 = vpop.f32.mrf.mxu0
        %v1706 = vadd.f32 %v1354, %v1705
        %v1707 = vpop.f32.mrf.mxu0
        %v1708 = vadd.f32 %v1356, %v1707
        %1709 = vmatprep.mubr.f32.mxu0 0.0
        %v1710 = vand.u32 %v318, 4294901760
        %v1711 = vsub.f32 %v318, %v1710
        %v1712 = vand.u32 %v1711, 4294901760
        %1713 = vmatmul.mubr.f32.gmra.mxu0 %v1712
        %v1714 = vpop.f32.mrf.mxu0
        %v1715 = vadd.f32 %v1362, %v1714
        %v1716 = vpop.f32.mrf.mxu0
        %v1717 = vadd.f32 %v1364, %v1716
        %1718 = vmatprep.mubr.f32.mxu0 0.0
        %v1719 = vand.u32 %v321, 4294901760
        %v1720 = vsub.f32 %v321, %v1719
        %v1721 = vand.u32 %v1720, 4294901760
        %1722 = vmatmul.mubr.f32.gmra.mxu0 %v1721
        %v1723 = vpop.f32.mrf.mxu0
        %v1724 = vadd.f32 %v1370, %v1723
        %v1725 = vpop.f32.mrf.mxu0
        %v1726 = vadd.f32 %v1372, %v1725
        %1727 = vmatprep.mubr.f32.mxu0 0.0
        %v1728 = vand.u32 %v324, 4294901760
        %v1729 = vsub.f32 %v324, %v1728
        %v1730 = vand.u32 %v1729, 4294901760
        %1731 = vmatmul.mubr.f32.gmra.mxu0 %v1730
        %v1732 = vpop.f32.mrf.mxu0
        %v1733 = vadd.f32 %v1378, %v1732
        %v1734 = vpop.f32.mrf.mxu0
        %v1735 = vadd.f32 %v1380, %v1734
        %1736 = vdwg.mxu0
        %1737 = vmatprep.subr.mxu0 0.0
        %1738 = vmatpush1.msra.mxu0 0.0
        %1739 = vmatprep.subr.mxu0 0.0
        %1740 = vmatpush1.msra.mxu0 0.0
        %1741 = vmatprep.subr.mxu0 0.0
        %1742 = vmatpush1.msra.mxu0 0.0
        %1743 = vmatprep.subr.mxu0 0.0
        %1744 = vmatpush1.msra.mxu0 0.0
        %1745 = vmatprep.subr.mxu0 0.0
        %1746 = vmatpush1.msra.mxu0 0.0
        %1747 = vmatprep.subr.mxu0 0.0
        %1748 = vmatpush1.msra.mxu0 0.0
        %1749 = vmatprep.subr.mxu0 0.0
        %1750 = vmatpush1.msra.mxu0 0.0
        %1751 = vmatprep.subr.mxu0 0.0
        %1752 = vmatpush1.msra.mxu0 0.0
        %1753 = vmatprep.subr.mxu0 0.0
        %1754 = vmatpush1.msra.mxu0 0.0
        %1755 = vmatprep.subr.mxu0 0.0
        %1756 = vmatpush1.msra.mxu0 0.0
        %1757 = vmatprep.subr.mxu0 0.0
        %1758 = vmatpush1.msra.mxu0 0.0
        %1759 = vmatprep.subr.mxu0 0.0
        %1760 = vmatpush1.msra.mxu0 0.0
        %1761 = vmatprep.subr.mxu0 0.0
        %1762 = vmatpush1.msra.mxu0 0.0
        %1763 = vmatprep.subr.mxu0 0.0
        %1764 = vmatpush1.msra.mxu0 0.0
        %1765 = vmatprep.subr.mxu0 0.0
        %1766 = vmatpush1.msra.mxu0 0.0
        %v1767 = vand.u32 %v331, 4294901760
        %v1768 = vsub.f32 %v331, %v1767
        %v1769 = vand.u32 %v1768, 4294901760
        %1770 = vmatprep.subr.mxu0 %v1769
        %v1771 = vand.u32 %v328, 4294901760
        %v1772 = vsub.f32 %v328, %v1771
        %v1773 = vand.u32 %v1772, 4294901760
        %1774 = vmatpush1.msra.mxu0 %v1773
        %1775 = vmatprep.subr.mxu0 0.0
        %1776 = vmatpush2.msra.mxu0 0.0
        %1777 = vmatprep.subr.mxu0 0.0
        %1778 = vmatpush2.msra.mxu0 0.0
        %1779 = vmatprep.subr.mxu0 0.0
        %1780 = vmatpush2.msra.mxu0 0.0
        %1781 = vmatprep.subr.mxu0 0.0
        %1782 = vmatpush2.msra.mxu0 0.0
        %1783 = vmatprep.subr.mxu0 0.0
        %1784 = vmatpush2.msra.mxu0 0.0
        %1785 = vmatprep.subr.mxu0 0.0
        %1786 = vmatpush2.msra.mxu0 0.0
        %1787 = vmatprep.subr.mxu0 0.0
        %1788 = vmatpush2.msra.mxu0 0.0
        %1789 = vmatprep.subr.mxu0 0.0
        %1790 = vmatpush2.msra.mxu0 0.0
        %1791 = vmatprep.subr.mxu0 0.0
        %1792 = vmatpush2.msra.mxu0 0.0
        %1793 = vmatprep.subr.mxu0 0.0
        %1794 = vmatpush2.msra.mxu0 0.0
        %1795 = vmatprep.subr.mxu0 0.0
        %1796 = vmatpush2.msra.mxu0 0.0
        %1797 = vmatprep.subr.mxu0 0.0
        %1798 = vmatpush2.msra.mxu0 0.0
        %1799 = vmatprep.subr.mxu0 0.0
        %1800 = vmatpush2.msra.mxu0 0.0
        %1801 = vmatprep.subr.mxu0 0.0
        %1802 = vmatpush2.msra.mxu0 0.0
        %1803 = vmatprep.subr.mxu0 0.0
        %1804 = vmatpush2.msra.mxu0 0.0
        %1805 = vmatprep.subr.mxu0 0.0
        %1806 = vmatpush2.msra.mxu0 0.0
        %1807 = vmatprep.mubr.f32.mxu0 0.0
        %v1808 = vand.u32 %v231, 4294901760
        %1809 = vmatmul.mubr.f32.gmra.mxu0 %v1808
        %v1810 = vpop.f32.mrf.mxu0
        %v1811 = vadd.f32 %v1454, %v1810
        %v1812 = vpop.f32.mrf.mxu0
        %v1813 = vadd.f32 %v1456, %v1812
        %1814 = vmatprep.mubr.f32.mxu0 0.0
        %v1815 = vand.u32 %v234, 4294901760
        %1816 = vmatmul.mubr.f32.gmra.mxu0 %v1815
        %v1817 = vpop.f32.mrf.mxu0
        %v1818 = vadd.f32 %v1463, %v1817
        %v1819 = vpop.f32.mrf.mxu0
        %v1820 = vadd.f32 %v1465, %v1819
        %1821 = vmatprep.mubr.f32.mxu0 0.0
        %v1822 = vand.u32 %v237, 4294901760
        %1823 = vmatmul.mubr.f32.gmra.mxu0 %v1822
        %v1824 = vpop.f32.mrf.mxu0
        %v1825 = vadd.f32 %v1472, %v1824
        %v1826 = vpop.f32.mrf.mxu0
        %v1827 = vadd.f32 %v1474, %v1826
        %1828 = vmatprep.mubr.f32.mxu0 0.0
        %v1829 = vand.u32 %v240, 4294901760
        %1830 = vmatmul.mubr.f32.gmra.mxu0 %v1829
        %v1831 = vpop.f32.mrf.mxu0
        %v1832 = vadd.f32 %v1481, %v1831
        %v1833 = vpop.f32.mrf.mxu0
        %v1834 = vadd.f32 %v1483, %v1833
        %1835 = vmatprep.mubr.f32.mxu0 0.0
        %v1836 = vand.u32 %v243, 4294901760
        %1837 = vmatmul.mubr.f32.gmra.mxu0 %v1836
        %v1838 = vpop.f32.mrf.mxu0
        %v1839 = vadd.f32 %v1490, %v1838
        %v1840 = vpop.f32.mrf.mxu0
        %v1841 = vadd.f32 %v1492, %v1840
        %1842 = vmatprep.mubr.f32.mxu0 0.0
        %v1843 = vand.u32 %v246, 4294901760
        %1844 = vmatmul.mubr.f32.gmra.mxu0 %v1843
        %v1845 = vpop.f32.mrf.mxu0
        %v1846 = vadd.f32 %v1499, %v1845
        %v1847 = vpop.f32.mrf.mxu0
        %v1848 = vadd.f32 %v1501, %v1847
        %1849 = vmatprep.mubr.f32.mxu0 0.0
        %v1850 = vand.u32 %v249, 4294901760
        %1851 = vmatmul.mubr.f32.gmra.mxu0 %v1850
        %v1852 = vpop.f32.mrf.mxu0
        %v1853 = vadd.f32 %v1508, %v1852
        %v1854 = vpop.f32.mrf.mxu0
        %v1855 = vadd.f32 %v1510, %v1854
        %1856 = vmatprep.mubr.f32.mxu0 0.0
        %v1857 = vand.u32 %v252, 4294901760
        %1858 = vmatmul.mubr.f32.gmra.mxu0 %v1857
        %v1859 = vpop.f32.mrf.mxu0
        %v1860 = vadd.f32 %v1517, %v1859
        %v1861 = vpop.f32.mrf.mxu0
        %v1862 = vadd.f32 %v1519, %v1861
        %1863 = vmatprep.mubr.f32.mxu0 0.0
        %v1864 = vand.u32 %v255, 4294901760
        %1865 = vmatmul.mubr.f32.gmra.mxu0 %v1864
        %v1866 = vpop.f32.mrf.mxu0
        %v1867 = vadd.f32 %v1526, %v1866
        %v1868 = vpop.f32.mrf.mxu0
        %v1869 = vadd.f32 %v1528, %v1868
        %1870 = vmatprep.mubr.f32.mxu0 0.0
        %v1871 = vand.u32 %v258, 4294901760
        %1872 = vmatmul.mubr.f32.gmra.mxu0 %v1871
        %v1873 = vpop.f32.mrf.mxu0
        %v1874 = vadd.f32 %v1535, %v1873
        %v1875 = vpop.f32.mrf.mxu0
        %v1876 = vadd.f32 %v1537, %v1875
        %1877 = vmatprep.mubr.f32.mxu0 0.0
        %v1878 = vand.u32 %v261, 4294901760
        %1879 = vmatmul.mubr.f32.gmra.mxu0 %v1878
        %v1880 = vpop.f32.mrf.mxu0
        %v1881 = vadd.f32 %v1544, %v1880
        %v1882 = vpop.f32.mrf.mxu0
        %v1883 = vadd.f32 %v1546, %v1882
        %1884 = vmatprep.mubr.f32.mxu0 0.0
        %v1885 = vand.u32 %v264, 4294901760
        %1886 = vmatmul.mubr.f32.gmra.mxu0 %v1885
        %v1887 = vpop.f32.mrf.mxu0
        %v1888 = vadd.f32 %v1553, %v1887
        %v1889 = vpop.f32.mrf.mxu0
        %v1890 = vadd.f32 %v1555, %v1889
        %1891 = vmatprep.mubr.f32.mxu0 0.0
        %v1892 = vand.u32 %v267, 4294901760
        %1893 = vmatmul.mubr.f32.gmra.mxu0 %v1892
        %v1894 = vpop.f32.mrf.mxu0
        %v1895 = vadd.f32 %v1562, %v1894
        %v1896 = vpop.f32.mrf.mxu0
        %v1897 = vadd.f32 %v1564, %v1896
        %1898 = vmatprep.mubr.f32.mxu0 0.0
        %v1899 = vand.u32 %v270, 4294901760
        %1900 = vmatmul.mubr.f32.gmra.mxu0 %v1899
        %v1901 = vpop.f32.mrf.mxu0
        %v1902 = vadd.f32 %v1571, %v1901
        %v1903 = vpop.f32.mrf.mxu0
        %v1904 = vadd.f32 %v1573, %v1903
        %1905 = vmatprep.mubr.f32.mxu0 0.0
        %v1906 = vand.u32 %v273, 4294901760
        %1907 = vmatmul.mubr.f32.gmra.mxu0 %v1906
        %v1908 = vpop.f32.mrf.mxu0
        %v1909 = vadd.f32 %v1580, %v1908
        %v1910 = vpop.f32.mrf.mxu0
        %v1911 = vadd.f32 %v1582, %v1910
        %1912 = vmatprep.mubr.f32.mxu0 0.0
        %v1913 = vand.u32 %v276, 4294901760
        %1914 = vmatmul.mubr.f32.gmra.mxu0 %v1913
        %v1915 = vpop.f32.mrf.mxu0
        %v1916 = vadd.f32 %v1589, %v1915
        %v1917 = vpop.f32.mrf.mxu0
        %v1918 = vadd.f32 %v1591, %v1917
        %1919 = vmatprep.mubr.f32.mxu0 0.0
        %v1920 = vand.u32 %v279, 4294901760
        %1921 = vmatmul.mubr.f32.gmra.mxu0 %v1920
        %v1922 = vpop.f32.mrf.mxu0
        %v1923 = vadd.f32 %v1598, %v1922
        %v1924 = vpop.f32.mrf.mxu0
        %v1925 = vadd.f32 %v1600, %v1924
        %1926 = vmatprep.mubr.f32.mxu0 0.0
        %v1927 = vand.u32 %v282, 4294901760
        %1928 = vmatmul.mubr.f32.gmra.mxu0 %v1927
        %v1929 = vpop.f32.mrf.mxu0
        %v1930 = vadd.f32 %v1607, %v1929
        %v1931 = vpop.f32.mrf.mxu0
        %v1932 = vadd.f32 %v1609, %v1931
        %1933 = vmatprep.mubr.f32.mxu0 0.0
        %v1934 = vand.u32 %v285, 4294901760
        %1935 = vmatmul.mubr.f32.gmra.mxu0 %v1934
        %v1936 = vpop.f32.mrf.mxu0
        %v1937 = vadd.f32 %v1616, %v1936
        %v1938 = vpop.f32.mrf.mxu0
        %v1939 = vadd.f32 %v1618, %v1938
        %1940 = vmatprep.mubr.f32.mxu0 0.0
        %v1941 = vand.u32 %v288, 4294901760
        %1942 = vmatmul.mubr.f32.gmra.mxu0 %v1941
        %v1943 = vpop.f32.mrf.mxu0
        %v1944 = vadd.f32 %v1625, %v1943
        %v1945 = vpop.f32.mrf.mxu0
        %v1946 = vadd.f32 %v1627, %v1945
        %1947 = vmatprep.mubr.f32.mxu0 0.0
        %v1948 = vand.u32 %v291, 4294901760
        %1949 = vmatmul.mubr.f32.gmra.mxu0 %v1948
        %v1950 = vpop.f32.mrf.mxu0
        %v1951 = vadd.f32 %v1634, %v1950
        %v1952 = vpop.f32.mrf.mxu0
        %v1953 = vadd.f32 %v1636, %v1952
        %1954 = vmatprep.mubr.f32.mxu0 0.0
        %v1955 = vand.u32 %v294, 4294901760
        %1956 = vmatmul.mubr.f32.gmra.mxu0 %v1955
        %v1957 = vpop.f32.mrf.mxu0
        %v1958 = vadd.f32 %v1643, %v1957
        %v1959 = vpop.f32.mrf.mxu0
        %v1960 = vadd.f32 %v1645, %v1959
        %1961 = vmatprep.mubr.f32.mxu0 0.0
        %v1962 = vand.u32 %v297, 4294901760
        %1963 = vmatmul.mubr.f32.gmra.mxu0 %v1962
        %v1964 = vpop.f32.mrf.mxu0
        %v1965 = vadd.f32 %v1652, %v1964
        %v1966 = vpop.f32.mrf.mxu0
        %v1967 = vadd.f32 %v1654, %v1966
        %1968 = vmatprep.mubr.f32.mxu0 0.0
        %v1969 = vand.u32 %v300, 4294901760
        %1970 = vmatmul.mubr.f32.gmra.mxu0 %v1969
        %v1971 = vpop.f32.mrf.mxu0
        %v1972 = vadd.f32 %v1661, %v1971
        %v1973 = vpop.f32.mrf.mxu0
        %v1974 = vadd.f32 %v1663, %v1973
        %1975 = vmatprep.mubr.f32.mxu0 0.0
        %v1976 = vand.u32 %v303, 4294901760
        %1977 = vmatmul.mubr.f32.gmra.mxu0 %v1976
        %v1978 = vpop.f32.mrf.mxu0
        %v1979 = vadd.f32 %v1670, %v1978
        %v1980 = vpop.f32.mrf.mxu0
        %v1981 = vadd.f32 %v1672, %v1980
        %1982 = vmatprep.mubr.f32.mxu0 0.0
        %v1983 = vand.u32 %v306, 4294901760
        %1984 = vmatmul.mubr.f32.gmra.mxu0 %v1983
        %v1985 = vpop.f32.mrf.mxu0
        %v1986 = vadd.f32 %v1679, %v1985
        %v1987 = vpop.f32.mrf.mxu0
        %v1988 = vadd.f32 %v1681, %v1987
        %1989 = vmatprep.mubr.f32.mxu0 0.0
        %v1990 = vand.u32 %v309, 4294901760
        %1991 = vmatmul.mubr.f32.gmra.mxu0 %v1990
        %v1992 = vpop.f32.mrf.mxu0
        %v1993 = vadd.f32 %v1688, %v1992
        %v1994 = vpop.f32.mrf.mxu0
        %v1995 = vadd.f32 %v1690, %v1994
        %1996 = vmatprep.mubr.f32.mxu0 0.0
        %v1997 = vand.u32 %v312, 4294901760
        %1998 = vmatmul.mubr.f32.gmra.mxu0 %v1997
        %v1999 = vpop.f32.mrf.mxu0
        %v2000 = vadd.f32 %v1697, %v1999
        %v2001 = vpop.f32.mrf.mxu0
        %v2002 = vadd.f32 %v1699, %v2001
        %2003 = vmatprep.mubr.f32.mxu0 0.0
        %v2004 = vand.u32 %v315, 4294901760
        %2005 = vmatmul.mubr.f32.gmra.mxu0 %v2004
        %v2006 = vpop.f32.mrf.mxu0
        %v2007 = vadd.f32 %v1706, %v2006
        %v2008 = vpop.f32.mrf.mxu0
        %v2009 = vadd.f32 %v1708, %v2008
        %2010 = vmatprep.mubr.f32.mxu0 0.0
        %v2011 = vand.u32 %v318, 4294901760
        %2012 = vmatmul.mubr.f32.gmra.mxu0 %v2011
        %v2013 = vpop.f32.mrf.mxu0
        %v2014 = vadd.f32 %v1715, %v2013
        %v2015 = vpop.f32.mrf.mxu0
        %v2016 = vadd.f32 %v1717, %v2015
        %2017 = vmatprep.mubr.f32.mxu0 0.0
        %v2018 = vand.u32 %v321, 4294901760
        %2019 = vmatmul.mubr.f32.gmra.mxu0 %v2018
        %v2020 = vpop.f32.mrf.mxu0
        %v2021 = vadd.f32 %v1724, %v2020
        %v2022 = vpop.f32.mrf.mxu0
        %v2023 = vadd.f32 %v1726, %v2022
        %2024 = vmatprep.mubr.f32.mxu0 0.0
        %v2025 = vand.u32 %v324, 4294901760
        %2026 = vmatmul.mubr.f32.gmra.mxu0 %v2025
        %v2027 = vpop.f32.mrf.mxu0
        %v2028 = vadd.f32 %v1733, %v2027
        %v2029 = vpop.f32.mrf.mxu0
        %v2030 = vadd.f32 %v1735, %v2029
        %2031 = vdwg.mxu0
        %2032 = vmatprep.subr.mxu0 0.0
        %2033 = vmatpush1.msra.mxu0 0.0
        %2034 = vmatprep.subr.mxu0 0.0
        %2035 = vmatpush1.msra.mxu0 0.0
        %2036 = vmatprep.subr.mxu0 0.0
        %2037 = vmatpush1.msra.mxu0 0.0
        %2038 = vmatprep.subr.mxu0 0.0
        %2039 = vmatpush1.msra.mxu0 0.0
        %2040 = vmatprep.subr.mxu0 0.0
        %2041 = vmatpush1.msra.mxu0 0.0
        %2042 = vmatprep.subr.mxu0 0.0
        %2043 = vmatpush1.msra.mxu0 0.0
        %2044 = vmatprep.subr.mxu0 0.0
        %2045 = vmatpush1.msra.mxu0 0.0
        %2046 = vmatprep.subr.mxu0 0.0
        %2047 = vmatpush1.msra.mxu0 0.0
        %2048 = vmatprep.subr.mxu0 0.0
        %2049 = vmatpush1.msra.mxu0 0.0
        %2050 = vmatprep.subr.mxu0 0.0
        %2051 = vmatpush1.msra.mxu0 0.0
        %2052 = vmatprep.subr.mxu0 0.0
        %2053 = vmatpush1.msra.mxu0 0.0
        %2054 = vmatprep.subr.mxu0 0.0
        %2055 = vmatpush1.msra.mxu0 0.0
        %2056 = vmatprep.subr.mxu0 0.0
        %2057 = vmatpush1.msra.mxu0 0.0
        %2058 = vmatprep.subr.mxu0 0.0
        %2059 = vmatpush1.msra.mxu0 0.0
        %2060 = vmatprep.subr.mxu0 0.0
        %2061 = vmatpush1.msra.mxu0 0.0
        %v2062 = vand.u32 %v331, 4294901760
        %2063 = vmatprep.subr.mxu0 %v2062
        %v2064 = vand.u32 %v328, 4294901760
        %2065 = vmatpush1.msra.mxu0 %v2064
        %2066 = vmatprep.subr.mxu0 0.0
        %2067 = vmatpush2.msra.mxu0 0.0
        %2068 = vmatprep.subr.mxu0 0.0
        %2069 = vmatpush2.msra.mxu0 0.0
        %2070 = vmatprep.subr.mxu0 0.0
        %2071 = vmatpush2.msra.mxu0 0.0
        %2072 = vmatprep.subr.mxu0 0.0
        %2073 = vmatpush2.msra.mxu0 0.0
        %2074 = vmatprep.subr.mxu0 0.0
        %2075 = vmatpush2.msra.mxu0 0.0
        %2076 = vmatprep.subr.mxu0 0.0
        %2077 = vmatpush2.msra.mxu0 0.0
        %2078 = vmatprep.subr.mxu0 0.0
        %2079 = vmatpush2.msra.mxu0 0.0
        %2080 = vmatprep.subr.mxu0 0.0
        %2081 = vmatpush2.msra.mxu0 0.0
        %2082 = vmatprep.subr.mxu0 0.0
        %2083 = vmatpush2.msra.mxu0 0.0
        %2084 = vmatprep.subr.mxu0 0.0
        %2085 = vmatpush2.msra.mxu0 0.0
        %2086 = vmatprep.subr.mxu0 0.0
        %2087 = vmatpush2.msra.mxu0 0.0
        %2088 = vmatprep.subr.mxu0 0.0
        %2089 = vmatpush2.msra.mxu0 0.0
        %2090 = vmatprep.subr.mxu0 0.0
        %2091 = vmatpush2.msra.mxu0 0.0
        %2092 = vmatprep.subr.mxu0 0.0
        %2093 = vmatpush2.msra.mxu0 0.0
        %2094 = vmatprep.subr.mxu0 0.0
        %2095 = vmatpush2.msra.mxu0 0.0
        %2096 = vmatprep.subr.mxu0 0.0
        %2097 = vmatpush2.msra.mxu0 0.0
        %2098 = vmatprep.mubr.f32.mxu0 0.0
        %v2099 = vand.u32 %v231, 4294901760
        %2100 = vmatmul.mubr.f32.gmra.mxu0 %v2099
        %v2101 = vpop.f32.mrf.mxu0
        %v2102 = vadd.f32 %v1811, %v2101
        %v2103 = vpop.f32.mrf.mxu0
        %v2104 = vadd.f32 %v1813, %v2103
        %2105 = vmatprep.mubr.f32.mxu0 0.0
        %v2106 = vand.u32 %v234, 4294901760
        %2107 = vmatmul.mubr.f32.gmra.mxu0 %v2106
        %v2108 = vpop.f32.mrf.mxu0
        %v2109 = vadd.f32 %v1818, %v2108
        %v2110 = vpop.f32.mrf.mxu0
        %v2111 = vadd.f32 %v1820, %v2110
        %2112 = vmatprep.mubr.f32.mxu0 0.0
        %v2113 = vand.u32 %v237, 4294901760
        %2114 = vmatmul.mubr.f32.gmra.mxu0 %v2113
        %v2115 = vpop.f32.mrf.mxu0
        %v2116 = vadd.f32 %v1825, %v2115
        %v2117 = vpop.f32.mrf.mxu0
        %v2118 = vadd.f32 %v1827, %v2117
        %2119 = vmatprep.mubr.f32.mxu0 0.0
        %v2120 = vand.u32 %v240, 4294901760
        %2121 = vmatmul.mubr.f32.gmra.mxu0 %v2120
        %v2122 = vpop.f32.mrf.mxu0
        %v2123 = vadd.f32 %v1832, %v2122
        %v2124 = vpop.f32.mrf.mxu0
        %v2125 = vadd.f32 %v1834, %v2124
        %2126 = vmatprep.mubr.f32.mxu0 0.0
        %v2127 = vand.u32 %v243, 4294901760
        %2128 = vmatmul.mubr.f32.gmra.mxu0 %v2127
        %v2129 = vpop.f32.mrf.mxu0
        %v2130 = vadd.f32 %v1839, %v2129
        %v2131 = vpop.f32.mrf.mxu0
        %v2132 = vadd.f32 %v1841, %v2131
        %2133 = vmatprep.mubr.f32.mxu0 0.0
        %v2134 = vand.u32 %v246, 4294901760
        %2135 = vmatmul.mubr.f32.gmra.mxu0 %v2134
        %v2136 = vpop.f32.mrf.mxu0
        %v2137 = vadd.f32 %v1846, %v2136
        %v2138 = vpop.f32.mrf.mxu0
        %v2139 = vadd.f32 %v1848, %v2138
        %2140 = vmatprep.mubr.f32.mxu0 0.0
        %v2141 = vand.u32 %v249, 4294901760
        %2142 = vmatmul.mubr.f32.gmra.mxu0 %v2141
        %v2143 = vpop.f32.mrf.mxu0
        %v2144 = vadd.f32 %v1853, %v2143
        %v2145 = vpop.f32.mrf.mxu0
        %v2146 = vadd.f32 %v1855, %v2145
        %2147 = vmatprep.mubr.f32.mxu0 0.0
        %v2148 = vand.u32 %v252, 4294901760
        %2149 = vmatmul.mubr.f32.gmra.mxu0 %v2148
        %v2150 = vpop.f32.mrf.mxu0
        %v2151 = vadd.f32 %v1860, %v2150
        %v2152 = vpop.f32.mrf.mxu0
        %v2153 = vadd.f32 %v1862, %v2152
        %2154 = vmatprep.mubr.f32.mxu0 0.0
        %v2155 = vand.u32 %v255, 4294901760
        %2156 = vmatmul.mubr.f32.gmra.mxu0 %v2155
        %v2157 = vpop.f32.mrf.mxu0
        %v2158 = vadd.f32 %v1867, %v2157
        %v2159 = vpop.f32.mrf.mxu0
        %v2160 = vadd.f32 %v1869, %v2159
        %2161 = vmatprep.mubr.f32.mxu0 0.0
        %v2162 = vand.u32 %v258, 4294901760
        %2163 = vmatmul.mubr.f32.gmra.mxu0 %v2162
        %v2164 = vpop.f32.mrf.mxu0
        %v2165 = vadd.f32 %v1874, %v2164
        %v2166 = vpop.f32.mrf.mxu0
        %v2167 = vadd.f32 %v1876, %v2166
        %2168 = vmatprep.mubr.f32.mxu0 0.0
        %v2169 = vand.u32 %v261, 4294901760
        %2170 = vmatmul.mubr.f32.gmra.mxu0 %v2169
        %v2171 = vpop.f32.mrf.mxu0
        %v2172 = vadd.f32 %v1881, %v2171
        %v2173 = vpop.f32.mrf.mxu0
        %v2174 = vadd.f32 %v1883, %v2173
        %2175 = vmatprep.mubr.f32.mxu0 0.0
        %v2176 = vand.u32 %v264, 4294901760
        %2177 = vmatmul.mubr.f32.gmra.mxu0 %v2176
        %v2178 = vpop.f32.mrf.mxu0
        %v2179 = vadd.f32 %v1888, %v2178
        %v2180 = vpop.f32.mrf.mxu0
        %v2181 = vadd.f32 %v1890, %v2180
        %2182 = vmatprep.mubr.f32.mxu0 0.0
        %v2183 = vand.u32 %v267, 4294901760
        %2184 = vmatmul.mubr.f32.gmra.mxu0 %v2183
        %v2185 = vpop.f32.mrf.mxu0
        %v2186 = vadd.f32 %v1895, %v2185
        %v2187 = vpop.f32.mrf.mxu0
        %v2188 = vadd.f32 %v1897, %v2187
        %2189 = vmatprep.mubr.f32.mxu0 0.0
        %v2190 = vand.u32 %v270, 4294901760
        %2191 = vmatmul.mubr.f32.gmra.mxu0 %v2190
        %v2192 = vpop.f32.mrf.mxu0
        %v2193 = vadd.f32 %v1902, %v2192
        %v2194 = vpop.f32.mrf.mxu0
        %v2195 = vadd.f32 %v1904, %v2194
        %2196 = vmatprep.mubr.f32.mxu0 0.0
        %v2197 = vand.u32 %v273, 4294901760
        %2198 = vmatmul.mubr.f32.gmra.mxu0 %v2197
        %v2199 = vpop.f32.mrf.mxu0
        %v2200 = vadd.f32 %v1909, %v2199
        %v2201 = vpop.f32.mrf.mxu0
        %v2202 = vadd.f32 %v1911, %v2201
        %2203 = vmatprep.mubr.f32.mxu0 0.0
        %v2204 = vand.u32 %v276, 4294901760
        %2205 = vmatmul.mubr.f32.gmra.mxu0 %v2204
        %v2206 = vpop.f32.mrf.mxu0
        %v2207 = vadd.f32 %v1916, %v2206
        %v2208 = vpop.f32.mrf.mxu0
        %v2209 = vadd.f32 %v1918, %v2208
        %2210 = vmatprep.mubr.f32.mxu0 0.0
        %v2211 = vand.u32 %v279, 4294901760
        %2212 = vmatmul.mubr.f32.gmra.mxu0 %v2211
        %v2213 = vpop.f32.mrf.mxu0
        %v2214 = vadd.f32 %v1923, %v2213
        %v2215 = vpop.f32.mrf.mxu0
        %v2216 = vadd.f32 %v1925, %v2215
        %2217 = vmatprep.mubr.f32.mxu0 0.0
        %v2218 = vand.u32 %v282, 4294901760
        %2219 = vmatmul.mubr.f32.gmra.mxu0 %v2218
        %v2220 = vpop.f32.mrf.mxu0
        %v2221 = vadd.f32 %v1930, %v2220
        %v2222 = vpop.f32.mrf.mxu0
        %v2223 = vadd.f32 %v1932, %v2222
        %2224 = vmatprep.mubr.f32.mxu0 0.0
        %v2225 = vand.u32 %v285, 4294901760
        %2226 = vmatmul.mubr.f32.gmra.mxu0 %v2225
        %v2227 = vpop.f32.mrf.mxu0
        %v2228 = vadd.f32 %v1937, %v2227
        %v2229 = vpop.f32.mrf.mxu0
        %v2230 = vadd.f32 %v1939, %v2229
        %2231 = vmatprep.mubr.f32.mxu0 0.0
        %v2232 = vand.u32 %v288, 4294901760
        %2233 = vmatmul.mubr.f32.gmra.mxu0 %v2232
        %v2234 = vpop.f32.mrf.mxu0
        %v2235 = vadd.f32 %v1944, %v2234
        %v2236 = vpop.f32.mrf.mxu0
        %v2237 = vadd.f32 %v1946, %v2236
        %2238 = vmatprep.mubr.f32.mxu0 0.0
        %v2239 = vand.u32 %v291, 4294901760
        %2240 = vmatmul.mubr.f32.gmra.mxu0 %v2239
        %v2241 = vpop.f32.mrf.mxu0
        %v2242 = vadd.f32 %v1951, %v2241
        %v2243 = vpop.f32.mrf.mxu0
        %v2244 = vadd.f32 %v1953, %v2243
        %2245 = vmatprep.mubr.f32.mxu0 0.0
        %v2246 = vand.u32 %v294, 4294901760
        %2247 = vmatmul.mubr.f32.gmra.mxu0 %v2246
        %v2248 = vpop.f32.mrf.mxu0
        %v2249 = vadd.f32 %v1958, %v2248
        %v2250 = vpop.f32.mrf.mxu0
        %v2251 = vadd.f32 %v1960, %v2250
        %2252 = vmatprep.mubr.f32.mxu0 0.0
        %v2253 = vand.u32 %v297, 4294901760
        %2254 = vmatmul.mubr.f32.gmra.mxu0 %v2253
        %v2255 = vpop.f32.mrf.mxu0
        %v2256 = vadd.f32 %v1965, %v2255
        %v2257 = vpop.f32.mrf.mxu0
        %v2258 = vadd.f32 %v1967, %v2257
        %2259 = vmatprep.mubr.f32.mxu0 0.0
        %v2260 = vand.u32 %v300, 4294901760
        %2261 = vmatmul.mubr.f32.gmra.mxu0 %v2260
        %v2262 = vpop.f32.mrf.mxu0
        %v2263 = vadd.f32 %v1972, %v2262
        %v2264 = vpop.f32.mrf.mxu0
        %v2265 = vadd.f32 %v1974, %v2264
        %2266 = vmatprep.mubr.f32.mxu0 0.0
        %v2267 = vand.u32 %v303, 4294901760
        %2268 = vmatmul.mubr.f32.gmra.mxu0 %v2267
        %v2269 = vpop.f32.mrf.mxu0
        %v2270 = vadd.f32 %v1979, %v2269
        %v2271 = vpop.f32.mrf.mxu0
        %v2272 = vadd.f32 %v1981, %v2271
        %2273 = vmatprep.mubr.f32.mxu0 0.0
        %v2274 = vand.u32 %v306, 4294901760
        %2275 = vmatmul.mubr.f32.gmra.mxu0 %v2274
        %v2276 = vpop.f32.mrf.mxu0
        %v2277 = vadd.f32 %v1986, %v2276
        %v2278 = vpop.f32.mrf.mxu0
        %v2279 = vadd.f32 %v1988, %v2278
        %2280 = vmatprep.mubr.f32.mxu0 0.0
        %v2281 = vand.u32 %v309, 4294901760
        %2282 = vmatmul.mubr.f32.gmra.mxu0 %v2281
        %v2283 = vpop.f32.mrf.mxu0
        %v2284 = vadd.f32 %v1993, %v2283
        %v2285 = vpop.f32.mrf.mxu0
        %v2286 = vadd.f32 %v1995, %v2285
        %2287 = vmatprep.mubr.f32.mxu0 0.0
        %v2288 = vand.u32 %v312, 4294901760
        %2289 = vmatmul.mubr.f32.gmra.mxu0 %v2288
        %v2290 = vpop.f32.mrf.mxu0
        %v2291 = vadd.f32 %v2000, %v2290
        %v2292 = vpop.f32.mrf.mxu0
        %v2293 = vadd.f32 %v2002, %v2292
        %2294 = vmatprep.mubr.f32.mxu0 0.0
        %v2295 = vand.u32 %v315, 4294901760
        %2296 = vmatmul.mubr.f32.gmra.mxu0 %v2295
        %v2297 = vpop.f32.mrf.mxu0
        %v2298 = vadd.f32 %v2007, %v2297
        %v2299 = vpop.f32.mrf.mxu0
        %v2300 = vadd.f32 %v2009, %v2299
        %2301 = vmatprep.mubr.f32.mxu0 0.0
        %v2302 = vand.u32 %v318, 4294901760
        %2303 = vmatmul.mubr.f32.gmra.mxu0 %v2302
        %v2304 = vpop.f32.mrf.mxu0
        %v2305 = vadd.f32 %v2014, %v2304
        %v2306 = vpop.f32.mrf.mxu0
        %v2307 = vadd.f32 %v2016, %v2306
        %2308 = vmatprep.mubr.f32.mxu0 0.0
        %v2309 = vand.u32 %v321, 4294901760
        %2310 = vmatmul.mubr.f32.gmra.mxu0 %v2309
        %v2311 = vpop.f32.mrf.mxu0
        %v2312 = vadd.f32 %v2021, %v2311
        %v2313 = vpop.f32.mrf.mxu0
        %v2314 = vadd.f32 %v2023, %v2313
        %2315 = vmatprep.mubr.f32.mxu0 0.0
        %v2316 = vand.u32 %v324, 4294901760
        %2317 = vmatmul.mubr.f32.gmra.mxu0 %v2316
        %v2318 = vpop.f32.mrf.mxu0
        %v2319 = vadd.f32 %v2028, %v2318
        %v2320 = vpop.f32.mrf.mxu0
        %v2321 = vadd.f32 %v2030, %v2320
        %2322 = vdwg.mxu0
        %2323 = vmatprep.subr.mxu0 0.0
        %2324 = vmatpush1.msra.mxu0 0.0
        %2325 = vmatprep.subr.mxu0 0.0
        %2326 = vmatpush1.msra.mxu0 0.0
        %2327 = vmatprep.subr.mxu0 0.0
        %2328 = vmatpush1.msra.mxu0 0.0
        %2329 = vmatprep.subr.mxu0 0.0
        %2330 = vmatpush1.msra.mxu0 0.0
        %2331 = vmatprep.subr.mxu0 0.0
        %2332 = vmatpush1.msra.mxu0 0.0
        %2333 = vmatprep.subr.mxu0 0.0
        %2334 = vmatpush1.msra.mxu0 0.0
        %2335 = vmatprep.subr.mxu0 0.0
        %2336 = vmatpush1.msra.mxu0 0.0
        %2337 = vmatprep.subr.mxu0 0.0
        %2338 = vmatpush1.msra.mxu0 0.0
        %2339 = vmatprep.subr.mxu0 0.0
        %2340 = vmatpush1.msra.mxu0 0.0
        %2341 = vmatprep.subr.mxu0 0.0
        %2342 = vmatpush1.msra.mxu0 0.0
        %2343 = vmatprep.subr.mxu0 0.0
        %2344 = vmatpush1.msra.mxu0 0.0
        %2345 = vmatprep.subr.mxu0 0.0
        %2346 = vmatpush1.msra.mxu0 0.0
        %2347 = vmatprep.subr.mxu0 0.0
        %2348 = vmatpush1.msra.mxu0 0.0
        %2349 = vmatprep.subr.mxu0 0.0
        %2350 = vmatpush1.msra.mxu0 0.0
        %2351 = vmatprep.subr.mxu0 0.0
        %2352 = vmatpush1.msra.mxu0 0.0
        %v2353 = vand.u32 %v337, 4294901760
        %2354 = vmatprep.subr.mxu0 %v2353
        %v2355 = vand.u32 %v334, 4294901760
        %2356 = vmatpush1.msra.mxu0 %v2355
        %2357 = vmatprep.subr.mxu0 0.0
        %2358 = vmatpush2.msra.mxu0 0.0
        %2359 = vmatprep.subr.mxu0 0.0
        %2360 = vmatpush2.msra.mxu0 0.0
        %2361 = vmatprep.subr.mxu0 0.0
        %2362 = vmatpush2.msra.mxu0 0.0
        %2363 = vmatprep.subr.mxu0 0.0
        %2364 = vmatpush2.msra.mxu0 0.0
        %2365 = vmatprep.subr.mxu0 0.0
        %2366 = vmatpush2.msra.mxu0 0.0
        %2367 = vmatprep.subr.mxu0 0.0
        %2368 = vmatpush2.msra.mxu0 0.0
        %2369 = vmatprep.subr.mxu0 0.0
        %2370 = vmatpush2.msra.mxu0 0.0
        %2371 = vmatprep.subr.mxu0 0.0
        %2372 = vmatpush2.msra.mxu0 0.0
        %2373 = vmatprep.subr.mxu0 0.0
        %2374 = vmatpush2.msra.mxu0 0.0
        %2375 = vmatprep.subr.mxu0 0.0
        %2376 = vmatpush2.msra.mxu0 0.0
        %2377 = vmatprep.subr.mxu0 0.0
        %2378 = vmatpush2.msra.mxu0 0.0
        %2379 = vmatprep.subr.mxu0 0.0
        %2380 = vmatpush2.msra.mxu0 0.0
        %2381 = vmatprep.subr.mxu0 0.0
        %2382 = vmatpush2.msra.mxu0 0.0
        %2383 = vmatprep.subr.mxu0 0.0
        %2384 = vmatpush2.msra.mxu0 0.0
        %2385 = vmatprep.subr.mxu0 0.0
        %2386 = vmatpush2.msra.mxu0 0.0
        %2387 = vmatprep.subr.mxu0 0.0
        %2388 = vmatpush2.msra.mxu0 0.0
        %2389 = vmatprep.mubr.f32.mxu0 0.0
        %v2390 = vand.u32 %v231, 4294901760
        %v2391 = vsub.f32 %v231, %v2390
        %v2392 = vand.u32 %v2391, 4294901760
        %v2393 = vsub.f32 %v2391, %v2392
        %v2394 = vand.u32 %v2393, 4294901760
        %2395 = vmatmul.mubr.f32.gmra.mxu0 %v2394
        %v2396 = vpop.f32.mrf.mxu0
        %v2397 = vadd.f32 0.0, %v2396
        %v2398 = vpop.f32.mrf.mxu0
        %v2399 = vadd.f32 0.0, %v2398
        %2400 = vmatprep.mubr.f32.mxu0 0.0
        %v2401 = vand.u32 %v234, 4294901760
        %v2402 = vsub.f32 %v234, %v2401
        %v2403 = vand.u32 %v2402, 4294901760
        %v2404 = vsub.f32 %v2402, %v2403
        %v2405 = vand.u32 %v2404, 4294901760
        %2406 = vmatmul.mubr.f32.gmra.mxu0 %v2405
        %v2407 = vpop.f32.mrf.mxu0
        %v2408 = vadd.f32 0.0, %v2407
        %v2409 = vpop.f32.mrf.mxu0
        %v2410 = vadd.f32 0.0, %v2409
        %2411 = vmatprep.mubr.f32.mxu0 0.0
        %v2412 = vand.u32 %v237, 4294901760
        %v2413 = vsub.f32 %v237, %v2412
        %v2414 = vand.u32 %v2413, 4294901760
        %v2415 = vsub.f32 %v2413, %v2414
        %v2416 = vand.u32 %v2415, 4294901760
        %2417 = vmatmul.mubr.f32.gmra.mxu0 %v2416
        %v2418 = vpop.f32.mrf.mxu0
        %v2419 = vadd.f32 0.0, %v2418
        %v2420 = vpop.f32.mrf.mxu0
        %v2421 = vadd.f32 0.0, %v2420
        %2422 = vmatprep.mubr.f32.mxu0 0.0
        %v2423 = vand.u32 %v240, 4294901760
        %v2424 = vsub.f32 %v240, %v2423
        %v2425 = vand.u32 %v2424, 4294901760
        %v2426 = vsub.f32 %v2424, %v2425
        %v2427 = vand.u32 %v2426, 4294901760
        %2428 = vmatmul.mubr.f32.gmra.mxu0 %v2427
        %v2429 = vpop.f32.mrf.mxu0
        %v2430 = vadd.f32 0.0, %v2429
        %v2431 = vpop.f32.mrf.mxu0
        %v2432 = vadd.f32 0.0, %v2431
        %2433 = vmatprep.mubr.f32.mxu0 0.0
        %v2434 = vand.u32 %v243, 4294901760
        %v2435 = vsub.f32 %v243, %v2434
        %v2436 = vand.u32 %v2435, 4294901760
        %v2437 = vsub.f32 %v2435, %v2436
        %v2438 = vand.u32 %v2437, 4294901760
        %2439 = vmatmul.mubr.f32.gmra.mxu0 %v2438
        %v2440 = vpop.f32.mrf.mxu0
        %v2441 = vadd.f32 0.0, %v2440
        %v2442 = vpop.f32.mrf.mxu0
        %v2443 = vadd.f32 0.0, %v2442
        %2444 = vmatprep.mubr.f32.mxu0 0.0
        %v2445 = vand.u32 %v246, 4294901760
        %v2446 = vsub.f32 %v246, %v2445
        %v2447 = vand.u32 %v2446, 4294901760
        %v2448 = vsub.f32 %v2446, %v2447
        %v2449 = vand.u32 %v2448, 4294901760
        %2450 = vmatmul.mubr.f32.gmra.mxu0 %v2449
        %v2451 = vpop.f32.mrf.mxu0
        %v2452 = vadd.f32 0.0, %v2451
        %v2453 = vpop.f32.mrf.mxu0
        %v2454 = vadd.f32 0.0, %v2453
        %2455 = vmatprep.mubr.f32.mxu0 0.0
        %v2456 = vand.u32 %v249, 4294901760
        %v2457 = vsub.f32 %v249, %v2456
        %v2458 = vand.u32 %v2457, 4294901760
        %v2459 = vsub.f32 %v2457, %v2458
        %v2460 = vand.u32 %v2459, 4294901760
        %2461 = vmatmul.mubr.f32.gmra.mxu0 %v2460
        %v2462 = vpop.f32.mrf.mxu0
        %v2463 = vadd.f32 0.0, %v2462
        %v2464 = vpop.f32.mrf.mxu0
        %v2465 = vadd.f32 0.0, %v2464
        %2466 = vmatprep.mubr.f32.mxu0 0.0
        %v2467 = vand.u32 %v252, 4294901760
        %v2468 = vsub.f32 %v252, %v2467
        %v2469 = vand.u32 %v2468, 4294901760
        %v2470 = vsub.f32 %v2468, %v2469
        %v2471 = vand.u32 %v2470, 4294901760
        %2472 = vmatmul.mubr.f32.gmra.mxu0 %v2471
        %v2473 = vpop.f32.mrf.mxu0
        %v2474 = vadd.f32 0.0, %v2473
        %v2475 = vpop.f32.mrf.mxu0
        %v2476 = vadd.f32 0.0, %v2475
        %2477 = vmatprep.mubr.f32.mxu0 0.0
        %v2478 = vand.u32 %v255, 4294901760
        %v2479 = vsub.f32 %v255, %v2478
        %v2480 = vand.u32 %v2479, 4294901760
        %v2481 = vsub.f32 %v2479, %v2480
        %v2482 = vand.u32 %v2481, 4294901760
        %2483 = vmatmul.mubr.f32.gmra.mxu0 %v2482
        %v2484 = vpop.f32.mrf.mxu0
        %v2485 = vadd.f32 0.0, %v2484
        %v2486 = vpop.f32.mrf.mxu0
        %v2487 = vadd.f32 0.0, %v2486
        %2488 = vmatprep.mubr.f32.mxu0 0.0
        %v2489 = vand.u32 %v258, 4294901760
        %v2490 = vsub.f32 %v258, %v2489
        %v2491 = vand.u32 %v2490, 4294901760
        %v2492 = vsub.f32 %v2490, %v2491
        %v2493 = vand.u32 %v2492, 4294901760
        %2494 = vmatmul.mubr.f32.gmra.mxu0 %v2493
        %v2495 = vpop.f32.mrf.mxu0
        %v2496 = vadd.f32 0.0, %v2495
        %v2497 = vpop.f32.mrf.mxu0
        %v2498 = vadd.f32 0.0, %v2497
        %2499 = vmatprep.mubr.f32.mxu0 0.0
        %v2500 = vand.u32 %v261, 4294901760
        %v2501 = vsub.f32 %v261, %v2500
        %v2502 = vand.u32 %v2501, 4294901760
        %v2503 = vsub.f32 %v2501, %v2502
        %v2504 = vand.u32 %v2503, 4294901760
        %2505 = vmatmul.mubr.f32.gmra.mxu0 %v2504
        %v2506 = vpop.f32.mrf.mxu0
        %v2507 = vadd.f32 0.0, %v2506
        %v2508 = vpop.f32.mrf.mxu0
        %v2509 = vadd.f32 0.0, %v2508
        %2510 = vmatprep.mubr.f32.mxu0 0.0
        %v2511 = vand.u32 %v264, 4294901760
        %v2512 = vsub.f32 %v264, %v2511
        %v2513 = vand.u32 %v2512, 4294901760
        %v2514 = vsub.f32 %v2512, %v2513
        %v2515 = vand.u32 %v2514, 4294901760
        %2516 = vmatmul.mubr.f32.gmra.mxu0 %v2515
        %v2517 = vpop.f32.mrf.mxu0
        %v2518 = vadd.f32 0.0, %v2517
        %v2519 = vpop.f32.mrf.mxu0
        %v2520 = vadd.f32 0.0, %v2519
        %2521 = vmatprep.mubr.f32.mxu0 0.0
        %v2522 = vand.u32 %v267, 4294901760
        %v2523 = vsub.f32 %v267, %v2522
        %v2524 = vand.u32 %v2523, 4294901760
        %v2525 = vsub.f32 %v2523, %v2524
        %v2526 = vand.u32 %v2525, 4294901760
        %2527 = vmatmul.mubr.f32.gmra.mxu0 %v2526
        %v2528 = vpop.f32.mrf.mxu0
        %v2529 = vadd.f32 0.0, %v2528
        %v2530 = vpop.f32.mrf.mxu0
        %v2531 = vadd.f32 0.0, %v2530
        %2532 = vmatprep.mubr.f32.mxu0 0.0
        %v2533 = vand.u32 %v270, 4294901760
        %v2534 = vsub.f32 %v270, %v2533
        %v2535 = vand.u32 %v2534, 4294901760
        %v2536 = vsub.f32 %v2534, %v2535
        %v2537 = vand.u32 %v2536, 4294901760
        %2538 = vmatmul.mubr.f32.gmra.mxu0 %v2537
        %v2539 = vpop.f32.mrf.mxu0
        %v2540 = vadd.f32 0.0, %v2539
        %v2541 = vpop.f32.mrf.mxu0
        %v2542 = vadd.f32 0.0, %v2541
        %2543 = vmatprep.mubr.f32.mxu0 0.0
        %v2544 = vand.u32 %v273, 4294901760
        %v2545 = vsub.f32 %v273, %v2544
        %v2546 = vand.u32 %v2545, 4294901760
        %v2547 = vsub.f32 %v2545, %v2546
        %v2548 = vand.u32 %v2547, 4294901760
        %2549 = vmatmul.mubr.f32.gmra.mxu0 %v2548
        %v2550 = vpop.f32.mrf.mxu0
        %v2551 = vadd.f32 0.0, %v2550
        %v2552 = vpop.f32.mrf.mxu0
        %v2553 = vadd.f32 0.0, %v2552
        %2554 = vmatprep.mubr.f32.mxu0 0.0
        %v2555 = vand.u32 %v276, 4294901760
        %v2556 = vsub.f32 %v276, %v2555
        %v2557 = vand.u32 %v2556, 4294901760
        %v2558 = vsub.f32 %v2556, %v2557
        %v2559 = vand.u32 %v2558, 4294901760
        %2560 = vmatmul.mubr.f32.gmra.mxu0 %v2559
        %v2561 = vpop.f32.mrf.mxu0
        %v2562 = vadd.f32 0.0, %v2561
        %v2563 = vpop.f32.mrf.mxu0
        %v2564 = vadd.f32 0.0, %v2563
        %2565 = vmatprep.mubr.f32.mxu0 0.0
        %v2566 = vand.u32 %v279, 4294901760
        %v2567 = vsub.f32 %v279, %v2566
        %v2568 = vand.u32 %v2567, 4294901760
        %v2569 = vsub.f32 %v2567, %v2568
        %v2570 = vand.u32 %v2569, 4294901760
        %2571 = vmatmul.mubr.f32.gmra.mxu0 %v2570
        %v2572 = vpop.f32.mrf.mxu0
        %v2573 = vadd.f32 0.0, %v2572
        %v2574 = vpop.f32.mrf.mxu0
        %v2575 = vadd.f32 0.0, %v2574
        %2576 = vmatprep.mubr.f32.mxu0 0.0
        %v2577 = vand.u32 %v282, 4294901760
        %v2578 = vsub.f32 %v282, %v2577
        %v2579 = vand.u32 %v2578, 4294901760
        %v2580 = vsub.f32 %v2578, %v2579
        %v2581 = vand.u32 %v2580, 4294901760
        %2582 = vmatmul.mubr.f32.gmra.mxu0 %v2581
        %v2583 = vpop.f32.mrf.mxu0
        %v2584 = vadd.f32 0.0, %v2583
        %v2585 = vpop.f32.mrf.mxu0
        %v2586 = vadd.f32 0.0, %v2585
        %2587 = vmatprep.mubr.f32.mxu0 0.0
        %v2588 = vand.u32 %v285, 4294901760
        %v2589 = vsub.f32 %v285, %v2588
        %v2590 = vand.u32 %v2589, 4294901760
        %v2591 = vsub.f32 %v2589, %v2590
        %v2592 = vand.u32 %v2591, 4294901760
        %2593 = vmatmul.mubr.f32.gmra.mxu0 %v2592
        %v2594 = vpop.f32.mrf.mxu0
        %v2595 = vadd.f32 0.0, %v2594
        %v2596 = vpop.f32.mrf.mxu0
        %v2597 = vadd.f32 0.0, %v2596
        %2598 = vmatprep.mubr.f32.mxu0 0.0
        %v2599 = vand.u32 %v288, 4294901760
        %v2600 = vsub.f32 %v288, %v2599
        %v2601 = vand.u32 %v2600, 4294901760
        %v2602 = vsub.f32 %v2600, %v2601
        %v2603 = vand.u32 %v2602, 4294901760
        %2604 = vmatmul.mubr.f32.gmra.mxu0 %v2603
        %v2605 = vpop.f32.mrf.mxu0
        %v2606 = vadd.f32 0.0, %v2605
        %v2607 = vpop.f32.mrf.mxu0
        %v2608 = vadd.f32 0.0, %v2607
        %2609 = vmatprep.mubr.f32.mxu0 0.0
        %v2610 = vand.u32 %v291, 4294901760
        %v2611 = vsub.f32 %v291, %v2610
        %v2612 = vand.u32 %v2611, 4294901760
        %v2613 = vsub.f32 %v2611, %v2612
        %v2614 = vand.u32 %v2613, 4294901760
        %2615 = vmatmul.mubr.f32.gmra.mxu0 %v2614
        %v2616 = vpop.f32.mrf.mxu0
        %v2617 = vadd.f32 0.0, %v2616
        %v2618 = vpop.f32.mrf.mxu0
        %v2619 = vadd.f32 0.0, %v2618
        %2620 = vmatprep.mubr.f32.mxu0 0.0
        %v2621 = vand.u32 %v294, 4294901760
        %v2622 = vsub.f32 %v294, %v2621
        %v2623 = vand.u32 %v2622, 4294901760
        %v2624 = vsub.f32 %v2622, %v2623
        %v2625 = vand.u32 %v2624, 4294901760
        %2626 = vmatmul.mubr.f32.gmra.mxu0 %v2625
        %v2627 = vpop.f32.mrf.mxu0
        %v2628 = vadd.f32 0.0, %v2627
        %v2629 = vpop.f32.mrf.mxu0
        %v2630 = vadd.f32 0.0, %v2629
        %2631 = vmatprep.mubr.f32.mxu0 0.0
        %v2632 = vand.u32 %v297, 4294901760
        %v2633 = vsub.f32 %v297, %v2632
        %v2634 = vand.u32 %v2633, 4294901760
        %v2635 = vsub.f32 %v2633, %v2634
        %v2636 = vand.u32 %v2635, 4294901760
        %2637 = vmatmul.mubr.f32.gmra.mxu0 %v2636
        %v2638 = vpop.f32.mrf.mxu0
        %v2639 = vadd.f32 0.0, %v2638
        %v2640 = vpop.f32.mrf.mxu0
        %v2641 = vadd.f32 0.0, %v2640
        %2642 = vmatprep.mubr.f32.mxu0 0.0
        %v2643 = vand.u32 %v300, 4294901760
        %v2644 = vsub.f32 %v300, %v2643
        %v2645 = vand.u32 %v2644, 4294901760
        %v2646 = vsub.f32 %v2644, %v2645
        %v2647 = vand.u32 %v2646, 4294901760
        %2648 = vmatmul.mubr.f32.gmra.mxu0 %v2647
        %v2649 = vpop.f32.mrf.mxu0
        %v2650 = vadd.f32 0.0, %v2649
        %v2651 = vpop.f32.mrf.mxu0
        %v2652 = vadd.f32 0.0, %v2651
        %2653 = vmatprep.mubr.f32.mxu0 0.0
        %v2654 = vand.u32 %v303, 4294901760
        %v2655 = vsub.f32 %v303, %v2654
        %v2656 = vand.u32 %v2655, 4294901760
        %v2657 = vsub.f32 %v2655, %v2656
        %v2658 = vand.u32 %v2657, 4294901760
        %2659 = vmatmul.mubr.f32.gmra.mxu0 %v2658
        %v2660 = vpop.f32.mrf.mxu0
        %v2661 = vadd.f32 0.0, %v2660
        %v2662 = vpop.f32.mrf.mxu0
        %v2663 = vadd.f32 0.0, %v2662
        %2664 = vmatprep.mubr.f32.mxu0 0.0
        %v2665 = vand.u32 %v306, 4294901760
        %v2666 = vsub.f32 %v306, %v2665
        %v2667 = vand.u32 %v2666, 4294901760
        %v2668 = vsub.f32 %v2666, %v2667
        %v2669 = vand.u32 %v2668, 4294901760
        %2670 = vmatmul.mubr.f32.gmra.mxu0 %v2669
        %v2671 = vpop.f32.mrf.mxu0
        %v2672 = vadd.f32 0.0, %v2671
        %v2673 = vpop.f32.mrf.mxu0
        %v2674 = vadd.f32 0.0, %v2673
        %2675 = vmatprep.mubr.f32.mxu0 0.0
        %v2676 = vand.u32 %v309, 4294901760
        %v2677 = vsub.f32 %v309, %v2676
        %v2678 = vand.u32 %v2677, 4294901760
        %v2679 = vsub.f32 %v2677, %v2678
        %v2680 = vand.u32 %v2679, 4294901760
        %2681 = vmatmul.mubr.f32.gmra.mxu0 %v2680
        %v2682 = vpop.f32.mrf.mxu0
        %v2683 = vadd.f32 0.0, %v2682
        %v2684 = vpop.f32.mrf.mxu0
        %v2685 = vadd.f32 0.0, %v2684
        %2686 = vmatprep.mubr.f32.mxu0 0.0
        %v2687 = vand.u32 %v312, 4294901760
        %v2688 = vsub.f32 %v312, %v2687
        %v2689 = vand.u32 %v2688, 4294901760
        %v2690 = vsub.f32 %v2688, %v2689
        %v2691 = vand.u32 %v2690, 4294901760
        %2692 = vmatmul.mubr.f32.gmra.mxu0 %v2691
        %v2693 = vpop.f32.mrf.mxu0
        %v2694 = vadd.f32 0.0, %v2693
        %v2695 = vpop.f32.mrf.mxu0
        %v2696 = vadd.f32 0.0, %v2695
        %2697 = vmatprep.mubr.f32.mxu0 0.0
        %v2698 = vand.u32 %v315, 4294901760
        %v2699 = vsub.f32 %v315, %v2698
        %v2700 = vand.u32 %v2699, 4294901760
        %v2701 = vsub.f32 %v2699, %v2700
        %v2702 = vand.u32 %v2701, 4294901760
        %2703 = vmatmul.mubr.f32.gmra.mxu0 %v2702
        %v2704 = vpop.f32.mrf.mxu0
        %v2705 = vadd.f32 0.0, %v2704
        %v2706 = vpop.f32.mrf.mxu0
        %v2707 = vadd.f32 0.0, %v2706
        %2708 = vmatprep.mubr.f32.mxu0 0.0
        %v2709 = vand.u32 %v318, 4294901760
        %v2710 = vsub.f32 %v318, %v2709
        %v2711 = vand.u32 %v2710, 4294901760
        %v2712 = vsub.f32 %v2710, %v2711
        %v2713 = vand.u32 %v2712, 4294901760
        %2714 = vmatmul.mubr.f32.gmra.mxu0 %v2713
        %v2715 = vpop.f32.mrf.mxu0
        %v2716 = vadd.f32 0.0, %v2715
        %v2717 = vpop.f32.mrf.mxu0
        %v2718 = vadd.f32 0.0, %v2717
        %2719 = vmatprep.mubr.f32.mxu0 0.0
        %v2720 = vand.u32 %v321, 4294901760
        %v2721 = vsub.f32 %v321, %v2720
        %v2722 = vand.u32 %v2721, 4294901760
        %v2723 = vsub.f32 %v2721, %v2722
        %v2724 = vand.u32 %v2723, 4294901760
        %2725 = vmatmul.mubr.f32.gmra.mxu0 %v2724
        %v2726 = vpop.f32.mrf.mxu0
        %v2727 = vadd.f32 0.0, %v2726
        %v2728 = vpop.f32.mrf.mxu0
        %v2729 = vadd.f32 0.0, %v2728
        %2730 = vmatprep.mubr.f32.mxu0 0.0
        %v2731 = vand.u32 %v324, 4294901760
        %v2732 = vsub.f32 %v324, %v2731
        %v2733 = vand.u32 %v2732, 4294901760
        %v2734 = vsub.f32 %v2732, %v2733
        %v2735 = vand.u32 %v2734, 4294901760
        %2736 = vmatmul.mubr.f32.gmra.mxu0 %v2735
        %v2737 = vpop.f32.mrf.mxu0
        %v2738 = vadd.f32 0.0, %v2737
        %v2739 = vpop.f32.mrf.mxu0
        %v2740 = vadd.f32 0.0, %v2739
        %2741 = vdwg.mxu0
        %2742 = vmatprep.subr.mxu0 0.0
        %2743 = vmatpush1.msra.mxu0 0.0
        %2744 = vmatprep.subr.mxu0 0.0
        %2745 = vmatpush1.msra.mxu0 0.0
        %2746 = vmatprep.subr.mxu0 0.0
        %2747 = vmatpush1.msra.mxu0 0.0
        %2748 = vmatprep.subr.mxu0 0.0
        %2749 = vmatpush1.msra.mxu0 0.0
        %2750 = vmatprep.subr.mxu0 0.0
        %2751 = vmatpush1.msra.mxu0 0.0
        %2752 = vmatprep.subr.mxu0 0.0
        %2753 = vmatpush1.msra.mxu0 0.0
        %2754 = vmatprep.subr.mxu0 0.0
        %2755 = vmatpush1.msra.mxu0 0.0
        %2756 = vmatprep.subr.mxu0 0.0
        %2757 = vmatpush1.msra.mxu0 0.0
        %2758 = vmatprep.subr.mxu0 0.0
        %2759 = vmatpush1.msra.mxu0 0.0
        %2760 = vmatprep.subr.mxu0 0.0
        %2761 = vmatpush1.msra.mxu0 0.0
        %2762 = vmatprep.subr.mxu0 0.0
        %2763 = vmatpush1.msra.mxu0 0.0
        %2764 = vmatprep.subr.mxu0 0.0
        %2765 = vmatpush1.msra.mxu0 0.0
        %2766 = vmatprep.subr.mxu0 0.0
        %2767 = vmatpush1.msra.mxu0 0.0
        %2768 = vmatprep.subr.mxu0 0.0
        %2769 = vmatpush1.msra.mxu0 0.0
        %2770 = vmatprep.subr.mxu0 0.0
        %2771 = vmatpush1.msra.mxu0 0.0
        %v2772 = vand.u32 %v337, 4294901760
        %v2773 = vsub.f32 %v337, %v2772
        %v2774 = vand.u32 %v2773, 4294901760
        %v2775 = vsub.f32 %v2773, %v2774
        %v2776 = vand.u32 %v2775, 4294901760
        %2777 = vmatprep.subr.mxu0 %v2776
        %v2778 = vand.u32 %v334, 4294901760
        %v2779 = vsub.f32 %v334, %v2778
        %v2780 = vand.u32 %v2779, 4294901760
        %v2781 = vsub.f32 %v2779, %v2780
        %v2782 = vand.u32 %v2781, 4294901760
        %2783 = vmatpush1.msra.mxu0 %v2782
        %2784 = vmatprep.subr.mxu0 0.0
        %2785 = vmatpush2.msra.mxu0 0.0
        %2786 = vmatprep.subr.mxu0 0.0
        %2787 = vmatpush2.msra.mxu0 0.0
        %2788 = vmatprep.subr.mxu0 0.0
        %2789 = vmatpush2.msra.mxu0 0.0
        %2790 = vmatprep.subr.mxu0 0.0
        %2791 = vmatpush2.msra.mxu0 0.0
        %2792 = vmatprep.subr.mxu0 0.0
        %2793 = vmatpush2.msra.mxu0 0.0
        %2794 = vmatprep.subr.mxu0 0.0
        %2795 = vmatpush2.msra.mxu0 0.0
        %2796 = vmatprep.subr.mxu0 0.0
        %2797 = vmatpush2.msra.mxu0 0.0
        %2798 = vmatprep.subr.mxu0 0.0
        %2799 = vmatpush2.msra.mxu0 0.0
        %2800 = vmatprep.subr.mxu0 0.0
        %2801 = vmatpush2.msra.mxu0 0.0
        %2802 = vmatprep.subr.mxu0 0.0
        %2803 = vmatpush2.msra.mxu0 0.0
        %2804 = vmatprep.subr.mxu0 0.0
        %2805 = vmatpush2.msra.mxu0 0.0
        %2806 = vmatprep.subr.mxu0 0.0
        %2807 = vmatpush2.msra.mxu0 0.0
        %2808 = vmatprep.subr.mxu0 0.0
        %2809 = vmatpush2.msra.mxu0 0.0
        %2810 = vmatprep.subr.mxu0 0.0
        %2811 = vmatpush2.msra.mxu0 0.0
        %2812 = vmatprep.subr.mxu0 0.0
        %2813 = vmatpush2.msra.mxu0 0.0
        %2814 = vmatprep.subr.mxu0 0.0
        %2815 = vmatpush2.msra.mxu0 0.0
        %2816 = vmatprep.mubr.f32.mxu0 0.0
        %v2817 = vand.u32 %v231, 4294901760
        %2818 = vmatmul.mubr.f32.gmra.mxu0 %v2817
        %v2819 = vpop.f32.mrf.mxu0
        %v2820 = vadd.f32 %v2397, %v2819
        %v2821 = vpop.f32.mrf.mxu0
        %v2822 = vadd.f32 %v2399, %v2821
        %2823 = vmatprep.mubr.f32.mxu0 0.0
        %v2824 = vand.u32 %v234, 4294901760
        %2825 = vmatmul.mubr.f32.gmra.mxu0 %v2824
        %v2826 = vpop.f32.mrf.mxu0
        %v2827 = vadd.f32 %v2408, %v2826
        %v2828 = vpop.f32.mrf.mxu0
        %v2829 = vadd.f32 %v2410, %v2828
        %2830 = vmatprep.mubr.f32.mxu0 0.0
        %v2831 = vand.u32 %v237, 4294901760
        %2832 = vmatmul.mubr.f32.gmra.mxu0 %v2831
        %v2833 = vpop.f32.mrf.mxu0
        %v2834 = vadd.f32 %v2419, %v2833
        %v2835 = vpop.f32.mrf.mxu0
        %v2836 = vadd.f32 %v2421, %v2835
        %2837 = vmatprep.mubr.f32.mxu0 0.0
        %v2838 = vand.u32 %v240, 4294901760
        %2839 = vmatmul.mubr.f32.gmra.mxu0 %v2838
        %v2840 = vpop.f32.mrf.mxu0
        %v2841 = vadd.f32 %v2430, %v2840
        %v2842 = vpop.f32.mrf.mxu0
        %v2843 = vadd.f32 %v2432, %v2842
        %2844 = vmatprep.mubr.f32.mxu0 0.0
        %v2845 = vand.u32 %v243, 4294901760
        %2846 = vmatmul.mubr.f32.gmra.mxu0 %v2845
        %v2847 = vpop.f32.mrf.mxu0
        %v2848 = vadd.f32 %v2441, %v2847
        %v2849 = vpop.f32.mrf.mxu0
        %v2850 = vadd.f32 %v2443, %v2849
        %2851 = vmatprep.mubr.f32.mxu0 0.0
        %v2852 = vand.u32 %v246, 4294901760
        %2853 = vmatmul.mubr.f32.gmra.mxu0 %v2852
        %v2854 = vpop.f32.mrf.mxu0
        %v2855 = vadd.f32 %v2452, %v2854
        %v2856 = vpop.f32.mrf.mxu0
        %v2857 = vadd.f32 %v2454, %v2856
        %2858 = vmatprep.mubr.f32.mxu0 0.0
        %v2859 = vand.u32 %v249, 4294901760
        %2860 = vmatmul.mubr.f32.gmra.mxu0 %v2859
        %v2861 = vpop.f32.mrf.mxu0
        %v2862 = vadd.f32 %v2463, %v2861
        %v2863 = vpop.f32.mrf.mxu0
        %v2864 = vadd.f32 %v2465, %v2863
        %2865 = vmatprep.mubr.f32.mxu0 0.0
        %v2866 = vand.u32 %v252, 4294901760
        %2867 = vmatmul.mubr.f32.gmra.mxu0 %v2866
        %v2868 = vpop.f32.mrf.mxu0
        %v2869 = vadd.f32 %v2474, %v2868
        %v2870 = vpop.f32.mrf.mxu0
        %v2871 = vadd.f32 %v2476, %v2870
        %2872 = vmatprep.mubr.f32.mxu0 0.0
        %v2873 = vand.u32 %v255, 4294901760
        %2874 = vmatmul.mubr.f32.gmra.mxu0 %v2873
        %v2875 = vpop.f32.mrf.mxu0
        %v2876 = vadd.f32 %v2485, %v2875
        %v2877 = vpop.f32.mrf.mxu0
        %v2878 = vadd.f32 %v2487, %v2877
        %2879 = vmatprep.mubr.f32.mxu0 0.0
        %v2880 = vand.u32 %v258, 4294901760
        %2881 = vmatmul.mubr.f32.gmra.mxu0 %v2880
        %v2882 = vpop.f32.mrf.mxu0
        %v2883 = vadd.f32 %v2496, %v2882
        %v2884 = vpop.f32.mrf.mxu0
        %v2885 = vadd.f32 %v2498, %v2884
        %2886 = vmatprep.mubr.f32.mxu0 0.0
        %v2887 = vand.u32 %v261, 4294901760
        %2888 = vmatmul.mubr.f32.gmra.mxu0 %v2887
        %v2889 = vpop.f32.mrf.mxu0
        %v2890 = vadd.f32 %v2507, %v2889
        %v2891 = vpop.f32.mrf.mxu0
        %v2892 = vadd.f32 %v2509, %v2891
        %2893 = vmatprep.mubr.f32.mxu0 0.0
        %v2894 = vand.u32 %v264, 4294901760
        %2895 = vmatmul.mubr.f32.gmra.mxu0 %v2894
        %v2896 = vpop.f32.mrf.mxu0
        %v2897 = vadd.f32 %v2518, %v2896
        %v2898 = vpop.f32.mrf.mxu0
        %v2899 = vadd.f32 %v2520, %v2898
        %2900 = vmatprep.mubr.f32.mxu0 0.0
        %v2901 = vand.u32 %v267, 4294901760
        %2902 = vmatmul.mubr.f32.gmra.mxu0 %v2901
        %v2903 = vpop.f32.mrf.mxu0
        %v2904 = vadd.f32 %v2529, %v2903
        %v2905 = vpop.f32.mrf.mxu0
        %v2906 = vadd.f32 %v2531, %v2905
        %2907 = vmatprep.mubr.f32.mxu0 0.0
        %v2908 = vand.u32 %v270, 4294901760
        %2909 = vmatmul.mubr.f32.gmra.mxu0 %v2908
        %v2910 = vpop.f32.mrf.mxu0
        %v2911 = vadd.f32 %v2540, %v2910
        %v2912 = vpop.f32.mrf.mxu0
        %v2913 = vadd.f32 %v2542, %v2912
        %2914 = vmatprep.mubr.f32.mxu0 0.0
        %v2915 = vand.u32 %v273, 4294901760
        %2916 = vmatmul.mubr.f32.gmra.mxu0 %v2915
        %v2917 = vpop.f32.mrf.mxu0
        %v2918 = vadd.f32 %v2551, %v2917
        %v2919 = vpop.f32.mrf.mxu0
        %v2920 = vadd.f32 %v2553, %v2919
        %2921 = vmatprep.mubr.f32.mxu0 0.0
        %v2922 = vand.u32 %v276, 4294901760
        %2923 = vmatmul.mubr.f32.gmra.mxu0 %v2922
        %v2924 = vpop.f32.mrf.mxu0
        %v2925 = vadd.f32 %v2562, %v2924
        %v2926 = vpop.f32.mrf.mxu0
        %v2927 = vadd.f32 %v2564, %v2926
        %2928 = vmatprep.mubr.f32.mxu0 0.0
        %v2929 = vand.u32 %v279, 4294901760
        %2930 = vmatmul.mubr.f32.gmra.mxu0 %v2929
        %v2931 = vpop.f32.mrf.mxu0
        %v2932 = vadd.f32 %v2573, %v2931
        %v2933 = vpop.f32.mrf.mxu0
        %v2934 = vadd.f32 %v2575, %v2933
        %2935 = vmatprep.mubr.f32.mxu0 0.0
        %v2936 = vand.u32 %v282, 4294901760
        %2937 = vmatmul.mubr.f32.gmra.mxu0 %v2936
        %v2938 = vpop.f32.mrf.mxu0
        %v2939 = vadd.f32 %v2584, %v2938
        %v2940 = vpop.f32.mrf.mxu0
        %v2941 = vadd.f32 %v2586, %v2940
        %2942 = vmatprep.mubr.f32.mxu0 0.0
        %v2943 = vand.u32 %v285, 4294901760
        %2944 = vmatmul.mubr.f32.gmra.mxu0 %v2943
        %v2945 = vpop.f32.mrf.mxu0
        %v2946 = vadd.f32 %v2595, %v2945
        %v2947 = vpop.f32.mrf.mxu0
        %v2948 = vadd.f32 %v2597, %v2947
        %2949 = vmatprep.mubr.f32.mxu0 0.0
        %v2950 = vand.u32 %v288, 4294901760
        %2951 = vmatmul.mubr.f32.gmra.mxu0 %v2950
        %v2952 = vpop.f32.mrf.mxu0
        %v2953 = vadd.f32 %v2606, %v2952
        %v2954 = vpop.f32.mrf.mxu0
        %v2955 = vadd.f32 %v2608, %v2954
        %2956 = vmatprep.mubr.f32.mxu0 0.0
        %v2957 = vand.u32 %v291, 4294901760
        %2958 = vmatmul.mubr.f32.gmra.mxu0 %v2957
        %v2959 = vpop.f32.mrf.mxu0
        %v2960 = vadd.f32 %v2617, %v2959
        %v2961 = vpop.f32.mrf.mxu0
        %v2962 = vadd.f32 %v2619, %v2961
        %2963 = vmatprep.mubr.f32.mxu0 0.0
        %v2964 = vand.u32 %v294, 4294901760
        %2965 = vmatmul.mubr.f32.gmra.mxu0 %v2964
        %v2966 = vpop.f32.mrf.mxu0
        %v2967 = vadd.f32 %v2628, %v2966
        %v2968 = vpop.f32.mrf.mxu0
        %v2969 = vadd.f32 %v2630, %v2968
        %2970 = vmatprep.mubr.f32.mxu0 0.0
        %v2971 = vand.u32 %v297, 4294901760
        %2972 = vmatmul.mubr.f32.gmra.mxu0 %v2971
        %v2973 = vpop.f32.mrf.mxu0
        %v2974 = vadd.f32 %v2639, %v2973
        %v2975 = vpop.f32.mrf.mxu0
        %v2976 = vadd.f32 %v2641, %v2975
        %2977 = vmatprep.mubr.f32.mxu0 0.0
        %v2978 = vand.u32 %v300, 4294901760
        %2979 = vmatmul.mubr.f32.gmra.mxu0 %v2978
        %v2980 = vpop.f32.mrf.mxu0
        %v2981 = vadd.f32 %v2650, %v2980
        %v2982 = vpop.f32.mrf.mxu0
        %v2983 = vadd.f32 %v2652, %v2982
        %2984 = vmatprep.mubr.f32.mxu0 0.0
        %v2985 = vand.u32 %v303, 4294901760
        %2986 = vmatmul.mubr.f32.gmra.mxu0 %v2985
        %v2987 = vpop.f32.mrf.mxu0
        %v2988 = vadd.f32 %v2661, %v2987
        %v2989 = vpop.f32.mrf.mxu0
        %v2990 = vadd.f32 %v2663, %v2989
        %2991 = vmatprep.mubr.f32.mxu0 0.0
        %v2992 = vand.u32 %v306, 4294901760
        %2993 = vmatmul.mubr.f32.gmra.mxu0 %v2992
        %v2994 = vpop.f32.mrf.mxu0
        %v2995 = vadd.f32 %v2672, %v2994
        %v2996 = vpop.f32.mrf.mxu0
        %v2997 = vadd.f32 %v2674, %v2996
        %2998 = vmatprep.mubr.f32.mxu0 0.0
        %v2999 = vand.u32 %v309, 4294901760
        %3000 = vmatmul.mubr.f32.gmra.mxu0 %v2999
        %v3001 = vpop.f32.mrf.mxu0
        %v3002 = vadd.f32 %v2683, %v3001
        %v3003 = vpop.f32.mrf.mxu0
        %v3004 = vadd.f32 %v2685, %v3003
        %3005 = vmatprep.mubr.f32.mxu0 0.0
        %v3006 = vand.u32 %v312, 4294901760
        %3007 = vmatmul.mubr.f32.gmra.mxu0 %v3006
        %v3008 = vpop.f32.mrf.mxu0
        %v3009 = vadd.f32 %v2694, %v3008
        %v3010 = vpop.f32.mrf.mxu0
        %v3011 = vadd.f32 %v2696, %v3010
        %3012 = vmatprep.mubr.f32.mxu0 0.0
        %v3013 = vand.u32 %v315, 4294901760
        %3014 = vmatmul.mubr.f32.gmra.mxu0 %v3013
        %v3015 = vpop.f32.mrf.mxu0
        %v3016 = vadd.f32 %v2705, %v3015
        %v3017 = vpop.f32.mrf.mxu0
        %v3018 = vadd.f32 %v2707, %v3017
        %3019 = vmatprep.mubr.f32.mxu0 0.0
        %v3020 = vand.u32 %v318, 4294901760
        %3021 = vmatmul.mubr.f32.gmra.mxu0 %v3020
        %v3022 = vpop.f32.mrf.mxu0
        %v3023 = vadd.f32 %v2716, %v3022
        %v3024 = vpop.f32.mrf.mxu0
        %v3025 = vadd.f32 %v2718, %v3024
        %3026 = vmatprep.mubr.f32.mxu0 0.0
        %v3027 = vand.u32 %v321, 4294901760
        %3028 = vmatmul.mubr.f32.gmra.mxu0 %v3027
        %v3029 = vpop.f32.mrf.mxu0
        %v3030 = vadd.f32 %v2727, %v3029
        %v3031 = vpop.f32.mrf.mxu0
        %v3032 = vadd.f32 %v2729, %v3031
        %3033 = vmatprep.mubr.f32.mxu0 0.0
        %v3034 = vand.u32 %v324, 4294901760
        %3035 = vmatmul.mubr.f32.gmra.mxu0 %v3034
        %v3036 = vpop.f32.mrf.mxu0
        %v3037 = vadd.f32 %v2738, %v3036
        %v3038 = vpop.f32.mrf.mxu0
        %v3039 = vadd.f32 %v2740, %v3038
        %3040 = vdwg.mxu0
        %3041 = vmatprep.subr.mxu0 0.0
        %3042 = vmatpush1.msra.mxu0 0.0
        %3043 = vmatprep.subr.mxu0 0.0
        %3044 = vmatpush1.msra.mxu0 0.0
        %3045 = vmatprep.subr.mxu0 0.0
        %3046 = vmatpush1.msra.mxu0 0.0
        %3047 = vmatprep.subr.mxu0 0.0
        %3048 = vmatpush1.msra.mxu0 0.0
        %3049 = vmatprep.subr.mxu0 0.0
        %3050 = vmatpush1.msra.mxu0 0.0
        %3051 = vmatprep.subr.mxu0 0.0
        %3052 = vmatpush1.msra.mxu0 0.0
        %3053 = vmatprep.subr.mxu0 0.0
        %3054 = vmatpush1.msra.mxu0 0.0
        %3055 = vmatprep.subr.mxu0 0.0
        %3056 = vmatpush1.msra.mxu0 0.0
        %3057 = vmatprep.subr.mxu0 0.0
        %3058 = vmatpush1.msra.mxu0 0.0
        %3059 = vmatprep.subr.mxu0 0.0
        %3060 = vmatpush1.msra.mxu0 0.0
        %3061 = vmatprep.subr.mxu0 0.0
        %3062 = vmatpush1.msra.mxu0 0.0
        %3063 = vmatprep.subr.mxu0 0.0
        %3064 = vmatpush1.msra.mxu0 0.0
        %3065 = vmatprep.subr.mxu0 0.0
        %3066 = vmatpush1.msra.mxu0 0.0
        %3067 = vmatprep.subr.mxu0 0.0
        %3068 = vmatpush1.msra.mxu0 0.0
        %3069 = vmatprep.subr.mxu0 0.0
        %3070 = vmatpush1.msra.mxu0 0.0
        %v3071 = vand.u32 %v337, 4294901760
        %v3072 = vsub.f32 %v337, %v3071
        %3073 = vmatprep.subr.mxu0 %v3072
        %v3074 = vand.u32 %v334, 4294901760
        %v3075 = vsub.f32 %v334, %v3074
        %3076 = vmatpush1.msra.mxu0 %v3075
        %3077 = vmatprep.subr.mxu0 0.0
        %3078 = vmatpush2.msra.mxu0 0.0
        %3079 = vmatprep.subr.mxu0 0.0
        %3080 = vmatpush2.msra.mxu0 0.0
        %3081 = vmatprep.subr.mxu0 0.0
        %3082 = vmatpush2.msra.mxu0 0.0
        %3083 = vmatprep.subr.mxu0 0.0
        %3084 = vmatpush2.msra.mxu0 0.0
        %3085 = vmatprep.subr.mxu0 0.0
        %3086 = vmatpush2.msra.mxu0 0.0
        %3087 = vmatprep.subr.mxu0 0.0
        %3088 = vmatpush2.msra.mxu0 0.0
        %3089 = vmatprep.subr.mxu0 0.0
        %3090 = vmatpush2.msra.mxu0 0.0
        %3091 = vmatprep.subr.mxu0 0.0
        %3092 = vmatpush2.msra.mxu0 0.0
        %3093 = vmatprep.subr.mxu0 0.0
        %3094 = vmatpush2.msra.mxu0 0.0
        %3095 = vmatprep.subr.mxu0 0.0
        %3096 = vmatpush2.msra.mxu0 0.0
        %3097 = vmatprep.subr.mxu0 0.0
        %3098 = vmatpush2.msra.mxu0 0.0
        %3099 = vmatprep.subr.mxu0 0.0
        %3100 = vmatpush2.msra.mxu0 0.0
        %3101 = vmatprep.subr.mxu0 0.0
        %3102 = vmatpush2.msra.mxu0 0.0
        %3103 = vmatprep.subr.mxu0 0.0
        %3104 = vmatpush2.msra.mxu0 0.0
        %3105 = vmatprep.subr.mxu0 0.0
        %3106 = vmatpush2.msra.mxu0 0.0
        %3107 = vmatprep.subr.mxu0 0.0
        %3108 = vmatpush2.msra.mxu0 0.0
        %3109 = vmatprep.mubr.f32.mxu0 0.0
        %v3110 = vand.u32 %v231, 4294901760
        %v3111 = vsub.f32 %v231, %v3110
        %3112 = vmatmul.mubr.f32.gmra.mxu0 %v3111
        %v3113 = vpop.f32.mrf.mxu0
        %v3114 = vadd.f32 %v2820, %v3113
        %v3115 = vpop.f32.mrf.mxu0
        %v3116 = vadd.f32 %v2822, %v3115
        %3117 = vmatprep.mubr.f32.mxu0 0.0
        %v3118 = vand.u32 %v234, 4294901760
        %v3119 = vsub.f32 %v234, %v3118
        %3120 = vmatmul.mubr.f32.gmra.mxu0 %v3119
        %v3121 = vpop.f32.mrf.mxu0
        %v3122 = vadd.f32 %v2827, %v3121
        %v3123 = vpop.f32.mrf.mxu0
        %v3124 = vadd.f32 %v2829, %v3123
        %3125 = vmatprep.mubr.f32.mxu0 0.0
        %v3126 = vand.u32 %v237, 4294901760
        %v3127 = vsub.f32 %v237, %v3126
        %3128 = vmatmul.mubr.f32.gmra.mxu0 %v3127
        %v3129 = vpop.f32.mrf.mxu0
        %v3130 = vadd.f32 %v2834, %v3129
        %v3131 = vpop.f32.mrf.mxu0
        %v3132 = vadd.f32 %v2836, %v3131
        %3133 = vmatprep.mubr.f32.mxu0 0.0
        %v3134 = vand.u32 %v240, 4294901760
        %v3135 = vsub.f32 %v240, %v3134
        %3136 = vmatmul.mubr.f32.gmra.mxu0 %v3135
        %v3137 = vpop.f32.mrf.mxu0
        %v3138 = vadd.f32 %v2841, %v3137
        %v3139 = vpop.f32.mrf.mxu0
        %v3140 = vadd.f32 %v2843, %v3139
        %3141 = vmatprep.mubr.f32.mxu0 0.0
        %v3142 = vand.u32 %v243, 4294901760
        %v3143 = vsub.f32 %v243, %v3142
        %3144 = vmatmul.mubr.f32.gmra.mxu0 %v3143
        %v3145 = vpop.f32.mrf.mxu0
        %v3146 = vadd.f32 %v2848, %v3145
        %v3147 = vpop.f32.mrf.mxu0
        %v3148 = vadd.f32 %v2850, %v3147
        %3149 = vmatprep.mubr.f32.mxu0 0.0
        %v3150 = vand.u32 %v246, 4294901760
        %v3151 = vsub.f32 %v246, %v3150
        %3152 = vmatmul.mubr.f32.gmra.mxu0 %v3151
        %v3153 = vpop.f32.mrf.mxu0
        %v3154 = vadd.f32 %v2855, %v3153
        %v3155 = vpop.f32.mrf.mxu0
        %v3156 = vadd.f32 %v2857, %v3155
        %3157 = vmatprep.mubr.f32.mxu0 0.0
        %v3158 = vand.u32 %v249, 4294901760
        %v3159 = vsub.f32 %v249, %v3158
        %3160 = vmatmul.mubr.f32.gmra.mxu0 %v3159
        %v3161 = vpop.f32.mrf.mxu0
        %v3162 = vadd.f32 %v2862, %v3161
        %v3163 = vpop.f32.mrf.mxu0
        %v3164 = vadd.f32 %v2864, %v3163
        %3165 = vmatprep.mubr.f32.mxu0 0.0
        %v3166 = vand.u32 %v252, 4294901760
        %v3167 = vsub.f32 %v252, %v3166
        %3168 = vmatmul.mubr.f32.gmra.mxu0 %v3167
        %v3169 = vpop.f32.mrf.mxu0
        %v3170 = vadd.f32 %v2869, %v3169
        %v3171 = vpop.f32.mrf.mxu0
        %v3172 = vadd.f32 %v2871, %v3171
        %3173 = vmatprep.mubr.f32.mxu0 0.0
        %v3174 = vand.u32 %v255, 4294901760
        %v3175 = vsub.f32 %v255, %v3174
        %3176 = vmatmul.mubr.f32.gmra.mxu0 %v3175
        %v3177 = vpop.f32.mrf.mxu0
        %v3178 = vadd.f32 %v2876, %v3177
        %v3179 = vpop.f32.mrf.mxu0
        %v3180 = vadd.f32 %v2878, %v3179
        %3181 = vmatprep.mubr.f32.mxu0 0.0
        %v3182 = vand.u32 %v258, 4294901760
        %v3183 = vsub.f32 %v258, %v3182
        %3184 = vmatmul.mubr.f32.gmra.mxu0 %v3183
        %v3185 = vpop.f32.mrf.mxu0
        %v3186 = vadd.f32 %v2883, %v3185
        %v3187 = vpop.f32.mrf.mxu0
        %v3188 = vadd.f32 %v2885, %v3187
        %3189 = vmatprep.mubr.f32.mxu0 0.0
        %v3190 = vand.u32 %v261, 4294901760
        %v3191 = vsub.f32 %v261, %v3190
        %3192 = vmatmul.mubr.f32.gmra.mxu0 %v3191
        %v3193 = vpop.f32.mrf.mxu0
        %v3194 = vadd.f32 %v2890, %v3193
        %v3195 = vpop.f32.mrf.mxu0
        %v3196 = vadd.f32 %v2892, %v3195
        %3197 = vmatprep.mubr.f32.mxu0 0.0
        %v3198 = vand.u32 %v264, 4294901760
        %v3199 = vsub.f32 %v264, %v3198
        %3200 = vmatmul.mubr.f32.gmra.mxu0 %v3199
        %v3201 = vpop.f32.mrf.mxu0
        %v3202 = vadd.f32 %v2897, %v3201
        %v3203 = vpop.f32.mrf.mxu0
        %v3204 = vadd.f32 %v2899, %v3203
        %3205 = vmatprep.mubr.f32.mxu0 0.0
        %v3206 = vand.u32 %v267, 4294901760
        %v3207 = vsub.f32 %v267, %v3206
        %3208 = vmatmul.mubr.f32.gmra.mxu0 %v3207
        %v3209 = vpop.f32.mrf.mxu0
        %v3210 = vadd.f32 %v2904, %v3209
        %v3211 = vpop.f32.mrf.mxu0
        %v3212 = vadd.f32 %v2906, %v3211
        %3213 = vmatprep.mubr.f32.mxu0 0.0
        %v3214 = vand.u32 %v270, 4294901760
        %v3215 = vsub.f32 %v270, %v3214
        %3216 = vmatmul.mubr.f32.gmra.mxu0 %v3215
        %v3217 = vpop.f32.mrf.mxu0
        %v3218 = vadd.f32 %v2911, %v3217
        %v3219 = vpop.f32.mrf.mxu0
        %v3220 = vadd.f32 %v2913, %v3219
        %3221 = vmatprep.mubr.f32.mxu0 0.0
        %v3222 = vand.u32 %v273, 4294901760
        %v3223 = vsub.f32 %v273, %v3222
        %3224 = vmatmul.mubr.f32.gmra.mxu0 %v3223
        %v3225 = vpop.f32.mrf.mxu0
        %v3226 = vadd.f32 %v2918, %v3225
        %v3227 = vpop.f32.mrf.mxu0
        %v3228 = vadd.f32 %v2920, %v3227
        %3229 = vmatprep.mubr.f32.mxu0 0.0
        %v3230 = vand.u32 %v276, 4294901760
        %v3231 = vsub.f32 %v276, %v3230
        %3232 = vmatmul.mubr.f32.gmra.mxu0 %v3231
        %v3233 = vpop.f32.mrf.mxu0
        %v3234 = vadd.f32 %v2925, %v3233
        %v3235 = vpop.f32.mrf.mxu0
        %v3236 = vadd.f32 %v2927, %v3235
        %3237 = vmatprep.mubr.f32.mxu0 0.0
        %v3238 = vand.u32 %v279, 4294901760
        %v3239 = vsub.f32 %v279, %v3238
        %3240 = vmatmul.mubr.f32.gmra.mxu0 %v3239
        %v3241 = vpop.f32.mrf.mxu0
        %v3242 = vadd.f32 %v2932, %v3241
        %v3243 = vpop.f32.mrf.mxu0
        %v3244 = vadd.f32 %v2934, %v3243
        %3245 = vmatprep.mubr.f32.mxu0 0.0
        %v3246 = vand.u32 %v282, 4294901760
        %v3247 = vsub.f32 %v282, %v3246
        %3248 = vmatmul.mubr.f32.gmra.mxu0 %v3247
        %v3249 = vpop.f32.mrf.mxu0
        %v3250 = vadd.f32 %v2939, %v3249
        %v3251 = vpop.f32.mrf.mxu0
        %v3252 = vadd.f32 %v2941, %v3251
        %3253 = vmatprep.mubr.f32.mxu0 0.0
        %v3254 = vand.u32 %v285, 4294901760
        %v3255 = vsub.f32 %v285, %v3254
        %3256 = vmatmul.mubr.f32.gmra.mxu0 %v3255
        %v3257 = vpop.f32.mrf.mxu0
        %v3258 = vadd.f32 %v2946, %v3257
        %v3259 = vpop.f32.mrf.mxu0
        %v3260 = vadd.f32 %v2948, %v3259
        %3261 = vmatprep.mubr.f32.mxu0 0.0
        %v3262 = vand.u32 %v288, 4294901760
        %v3263 = vsub.f32 %v288, %v3262
        %3264 = vmatmul.mubr.f32.gmra.mxu0 %v3263
        %v3265 = vpop.f32.mrf.mxu0
        %v3266 = vadd.f32 %v2953, %v3265
        %v3267 = vpop.f32.mrf.mxu0
        %v3268 = vadd.f32 %v2955, %v3267
        %3269 = vmatprep.mubr.f32.mxu0 0.0
        %v3270 = vand.u32 %v291, 4294901760
        %v3271 = vsub.f32 %v291, %v3270
        %3272 = vmatmul.mubr.f32.gmra.mxu0 %v3271
        %v3273 = vpop.f32.mrf.mxu0
        %v3274 = vadd.f32 %v2960, %v3273
        %v3275 = vpop.f32.mrf.mxu0
        %v3276 = vadd.f32 %v2962, %v3275
        %3277 = vmatprep.mubr.f32.mxu0 0.0
        %v3278 = vand.u32 %v294, 4294901760
        %v3279 = vsub.f32 %v294, %v3278
        %3280 = vmatmul.mubr.f32.gmra.mxu0 %v3279
        %v3281 = vpop.f32.mrf.mxu0
        %v3282 = vadd.f32 %v2967, %v3281
        %v3283 = vpop.f32.mrf.mxu0
        %v3284 = vadd.f32 %v2969, %v3283
        %3285 = vmatprep.mubr.f32.mxu0 0.0
        %v3286 = vand.u32 %v297, 4294901760
        %v3287 = vsub.f32 %v297, %v3286
        %3288 = vmatmul.mubr.f32.gmra.mxu0 %v3287
        %v3289 = vpop.f32.mrf.mxu0
        %v3290 = vadd.f32 %v2974, %v3289
        %v3291 = vpop.f32.mrf.mxu0
        %v3292 = vadd.f32 %v2976, %v3291
        %3293 = vmatprep.mubr.f32.mxu0 0.0
        %v3294 = vand.u32 %v300, 4294901760
        %v3295 = vsub.f32 %v300, %v3294
        %3296 = vmatmul.mubr.f32.gmra.mxu0 %v3295
        %v3297 = vpop.f32.mrf.mxu0
        %v3298 = vadd.f32 %v2981, %v3297
        %v3299 = vpop.f32.mrf.mxu0
        %v3300 = vadd.f32 %v2983, %v3299
        %3301 = vmatprep.mubr.f32.mxu0 0.0
        %v3302 = vand.u32 %v303, 4294901760
        %v3303 = vsub.f32 %v303, %v3302
        %3304 = vmatmul.mubr.f32.gmra.mxu0 %v3303
        %v3305 = vpop.f32.mrf.mxu0
        %v3306 = vadd.f32 %v2988, %v3305
        %v3307 = vpop.f32.mrf.mxu0
        %v3308 = vadd.f32 %v2990, %v3307
        %3309 = vmatprep.mubr.f32.mxu0 0.0
        %v3310 = vand.u32 %v306, 4294901760
        %v3311 = vsub.f32 %v306, %v3310
        %3312 = vmatmul.mubr.f32.gmra.mxu0 %v3311
        %v3313 = vpop.f32.mrf.mxu0
        %v3314 = vadd.f32 %v2995, %v3313
        %v3315 = vpop.f32.mrf.mxu0
        %v3316 = vadd.f32 %v2997, %v3315
        %3317 = vmatprep.mubr.f32.mxu0 0.0
        %v3318 = vand.u32 %v309, 4294901760
        %v3319 = vsub.f32 %v309, %v3318
        %3320 = vmatmul.mubr.f32.gmra.mxu0 %v3319
        %v3321 = vpop.f32.mrf.mxu0
        %v3322 = vadd.f32 %v3002, %v3321
        %v3323 = vpop.f32.mrf.mxu0
        %v3324 = vadd.f32 %v3004, %v3323
        %3325 = vmatprep.mubr.f32.mxu0 0.0
        %v3326 = vand.u32 %v312, 4294901760
        %v3327 = vsub.f32 %v312, %v3326
        %3328 = vmatmul.mubr.f32.gmra.mxu0 %v3327
        %v3329 = vpop.f32.mrf.mxu0
        %v3330 = vadd.f32 %v3009, %v3329
        %v3331 = vpop.f32.mrf.mxu0
        %v3332 = vadd.f32 %v3011, %v3331
        %3333 = vmatprep.mubr.f32.mxu0 0.0
        %v3334 = vand.u32 %v315, 4294901760
        %v3335 = vsub.f32 %v315, %v3334
        %3336 = vmatmul.mubr.f32.gmra.mxu0 %v3335
        %v3337 = vpop.f32.mrf.mxu0
        %v3338 = vadd.f32 %v3016, %v3337
        %v3339 = vpop.f32.mrf.mxu0
        %v3340 = vadd.f32 %v3018, %v3339
        %3341 = vmatprep.mubr.f32.mxu0 0.0
        %v3342 = vand.u32 %v318, 4294901760
        %v3343 = vsub.f32 %v318, %v3342
        %3344 = vmatmul.mubr.f32.gmra.mxu0 %v3343
        %v3345 = vpop.f32.mrf.mxu0
        %v3346 = vadd.f32 %v3023, %v3345
        %v3347 = vpop.f32.mrf.mxu0
        %v3348 = vadd.f32 %v3025, %v3347
        %3349 = vmatprep.mubr.f32.mxu0 0.0
        %v3350 = vand.u32 %v321, 4294901760
        %v3351 = vsub.f32 %v321, %v3350
        %3352 = vmatmul.mubr.f32.gmra.mxu0 %v3351
        %v3353 = vpop.f32.mrf.mxu0
        %v3354 = vadd.f32 %v3030, %v3353
        %v3355 = vpop.f32.mrf.mxu0
        %v3356 = vadd.f32 %v3032, %v3355
        %3357 = vmatprep.mubr.f32.mxu0 0.0
        %v3358 = vand.u32 %v324, 4294901760
        %v3359 = vsub.f32 %v324, %v3358
        %3360 = vmatmul.mubr.f32.gmra.mxu0 %v3359
        %v3361 = vpop.f32.mrf.mxu0
        %v3362 = vadd.f32 %v3037, %v3361
        %v3363 = vpop.f32.mrf.mxu0
        %v3364 = vadd.f32 %v3039, %v3363
        %3365 = vdwg.mxu0
        %3366 = vmatprep.subr.mxu0 0.0
        %3367 = vmatpush1.msra.mxu0 0.0
        %3368 = vmatprep.subr.mxu0 0.0
        %3369 = vmatpush1.msra.mxu0 0.0
        %3370 = vmatprep.subr.mxu0 0.0
        %3371 = vmatpush1.msra.mxu0 0.0
        %3372 = vmatprep.subr.mxu0 0.0
        %3373 = vmatpush1.msra.mxu0 0.0
        %3374 = vmatprep.subr.mxu0 0.0
        %3375 = vmatpush1.msra.mxu0 0.0
        %3376 = vmatprep.subr.mxu0 0.0
        %3377 = vmatpush1.msra.mxu0 0.0
        %3378 = vmatprep.subr.mxu0 0.0
        %3379 = vmatpush1.msra.mxu0 0.0
        %3380 = vmatprep.subr.mxu0 0.0
        %3381 = vmatpush1.msra.mxu0 0.0
        %3382 = vmatprep.subr.mxu0 0.0
        %3383 = vmatpush1.msra.mxu0 0.0
        %3384 = vmatprep.subr.mxu0 0.0
        %3385 = vmatpush1.msra.mxu0 0.0
        %3386 = vmatprep.subr.mxu0 0.0
        %3387 = vmatpush1.msra.mxu0 0.0
        %3388 = vmatprep.subr.mxu0 0.0
        %3389 = vmatpush1.msra.mxu0 0.0
        %3390 = vmatprep.subr.mxu0 0.0
        %3391 = vmatpush1.msra.mxu0 0.0
        %3392 = vmatprep.subr.mxu0 0.0
        %3393 = vmatpush1.msra.mxu0 0.0
        %3394 = vmatprep.subr.mxu0 0.0
        %3395 = vmatpush1.msra.mxu0 0.0
        %v3396 = vand.u32 %v337, 4294901760
        %3397 = vmatprep.subr.mxu0 %v3396
        %v3398 = vand.u32 %v334, 4294901760
        %3399 = vmatpush1.msra.mxu0 %v3398
        %3400 = vmatprep.subr.mxu0 0.0
        %3401 = vmatpush2.msra.mxu0 0.0
        %3402 = vmatprep.subr.mxu0 0.0
        %3403 = vmatpush2.msra.mxu0 0.0
        %3404 = vmatprep.subr.mxu0 0.0
        %3405 = vmatpush2.msra.mxu0 0.0
        %3406 = vmatprep.subr.mxu0 0.0
        %3407 = vmatpush2.msra.mxu0 0.0
        %3408 = vmatprep.subr.mxu0 0.0
        %3409 = vmatpush2.msra.mxu0 0.0
        %3410 = vmatprep.subr.mxu0 0.0
        %3411 = vmatpush2.msra.mxu0 0.0
        %3412 = vmatprep.subr.mxu0 0.0
        %3413 = vmatpush2.msra.mxu0 0.0
        %3414 = vmatprep.subr.mxu0 0.0
        %3415 = vmatpush2.msra.mxu0 0.0
        %3416 = vmatprep.subr.mxu0 0.0
        %3417 = vmatpush2.msra.mxu0 0.0
        %3418 = vmatprep.subr.mxu0 0.0
        %3419 = vmatpush2.msra.mxu0 0.0
        %3420 = vmatprep.subr.mxu0 0.0
        %3421 = vmatpush2.msra.mxu0 0.0
        %3422 = vmatprep.subr.mxu0 0.0
        %3423 = vmatpush2.msra.mxu0 0.0
        %3424 = vmatprep.subr.mxu0 0.0
        %3425 = vmatpush2.msra.mxu0 0.0
        %3426 = vmatprep.subr.mxu0 0.0
        %3427 = vmatpush2.msra.mxu0 0.0
        %3428 = vmatprep.subr.mxu0 0.0
        %3429 = vmatpush2.msra.mxu0 0.0
        %3430 = vmatprep.subr.mxu0 0.0
        %3431 = vmatpush2.msra.mxu0 0.0
        %3432 = vmatprep.mubr.f32.mxu0 0.0
        %v3433 = vand.u32 %v231, 4294901760
        %v3434 = vsub.f32 %v231, %v3433
        %v3435 = vand.u32 %v3434, 4294901760
        %3436 = vmatmul.mubr.f32.gmra.mxu0 %v3435
        %v3437 = vpop.f32.mrf.mxu0
        %v3438 = vadd.f32 %v3114, %v3437
        %v3439 = vpop.f32.mrf.mxu0
        %v3440 = vadd.f32 %v3116, %v3439
        %3441 = vmatprep.mubr.f32.mxu0 0.0
        %v3442 = vand.u32 %v234, 4294901760
        %v3443 = vsub.f32 %v234, %v3442
        %v3444 = vand.u32 %v3443, 4294901760
        %3445 = vmatmul.mubr.f32.gmra.mxu0 %v3444
        %v3446 = vpop.f32.mrf.mxu0
        %v3447 = vadd.f32 %v3122, %v3446
        %v3448 = vpop.f32.mrf.mxu0
        %v3449 = vadd.f32 %v3124, %v3448
        %3450 = vmatprep.mubr.f32.mxu0 0.0
        %v3451 = vand.u32 %v237, 4294901760
        %v3452 = vsub.f32 %v237, %v3451
        %v3453 = vand.u32 %v3452, 4294901760
        %3454 = vmatmul.mubr.f32.gmra.mxu0 %v3453
        %v3455 = vpop.f32.mrf.mxu0
        %v3456 = vadd.f32 %v3130, %v3455
        %v3457 = vpop.f32.mrf.mxu0
        %v3458 = vadd.f32 %v3132, %v3457
        %3459 = vmatprep.mubr.f32.mxu0 0.0
        %v3460 = vand.u32 %v240, 4294901760
        %v3461 = vsub.f32 %v240, %v3460
        %v3462 = vand.u32 %v3461, 4294901760
        %3463 = vmatmul.mubr.f32.gmra.mxu0 %v3462
        %v3464 = vpop.f32.mrf.mxu0
        %v3465 = vadd.f32 %v3138, %v3464
        %v3466 = vpop.f32.mrf.mxu0
        %v3467 = vadd.f32 %v3140, %v3466
        %3468 = vmatprep.mubr.f32.mxu0 0.0
        %v3469 = vand.u32 %v243, 4294901760
        %v3470 = vsub.f32 %v243, %v3469
        %v3471 = vand.u32 %v3470, 4294901760
        %3472 = vmatmul.mubr.f32.gmra.mxu0 %v3471
        %v3473 = vpop.f32.mrf.mxu0
        %v3474 = vadd.f32 %v3146, %v3473
        %v3475 = vpop.f32.mrf.mxu0
        %v3476 = vadd.f32 %v3148, %v3475
        %3477 = vmatprep.mubr.f32.mxu0 0.0
        %v3478 = vand.u32 %v246, 4294901760
        %v3479 = vsub.f32 %v246, %v3478
        %v3480 = vand.u32 %v3479, 4294901760
        %3481 = vmatmul.mubr.f32.gmra.mxu0 %v3480
        %v3482 = vpop.f32.mrf.mxu0
        %v3483 = vadd.f32 %v3154, %v3482
        %v3484 = vpop.f32.mrf.mxu0
        %v3485 = vadd.f32 %v3156, %v3484
        %3486 = vmatprep.mubr.f32.mxu0 0.0
        %v3487 = vand.u32 %v249, 4294901760
        %v3488 = vsub.f32 %v249, %v3487
        %v3489 = vand.u32 %v3488, 4294901760
        %3490 = vmatmul.mubr.f32.gmra.mxu0 %v3489
        %v3491 = vpop.f32.mrf.mxu0
        %v3492 = vadd.f32 %v3162, %v3491
        %v3493 = vpop.f32.mrf.mxu0
        %v3494 = vadd.f32 %v3164, %v3493
        %3495 = vmatprep.mubr.f32.mxu0 0.0
        %v3496 = vand.u32 %v252, 4294901760
        %v3497 = vsub.f32 %v252, %v3496
        %v3498 = vand.u32 %v3497, 4294901760
        %3499 = vmatmul.mubr.f32.gmra.mxu0 %v3498
        %v3500 = vpop.f32.mrf.mxu0
        %v3501 = vadd.f32 %v3170, %v3500
        %v3502 = vpop.f32.mrf.mxu0
        %v3503 = vadd.f32 %v3172, %v3502
        %3504 = vmatprep.mubr.f32.mxu0 0.0
        %v3505 = vand.u32 %v255, 4294901760
        %v3506 = vsub.f32 %v255, %v3505
        %v3507 = vand.u32 %v3506, 4294901760
        %3508 = vmatmul.mubr.f32.gmra.mxu0 %v3507
        %v3509 = vpop.f32.mrf.mxu0
        %v3510 = vadd.f32 %v3178, %v3509
        %v3511 = vpop.f32.mrf.mxu0
        %v3512 = vadd.f32 %v3180, %v3511
        %3513 = vmatprep.mubr.f32.mxu0 0.0
        %v3514 = vand.u32 %v258, 4294901760
        %v3515 = vsub.f32 %v258, %v3514
        %v3516 = vand.u32 %v3515, 4294901760
        %3517 = vmatmul.mubr.f32.gmra.mxu0 %v3516
        %v3518 = vpop.f32.mrf.mxu0
        %v3519 = vadd.f32 %v3186, %v3518
        %v3520 = vpop.f32.mrf.mxu0
        %v3521 = vadd.f32 %v3188, %v3520
        %3522 = vmatprep.mubr.f32.mxu0 0.0
        %v3523 = vand.u32 %v261, 4294901760
        %v3524 = vsub.f32 %v261, %v3523
        %v3525 = vand.u32 %v3524, 4294901760
        %3526 = vmatmul.mubr.f32.gmra.mxu0 %v3525
        %v3527 = vpop.f32.mrf.mxu0
        %v3528 = vadd.f32 %v3194, %v3527
        %v3529 = vpop.f32.mrf.mxu0
        %v3530 = vadd.f32 %v3196, %v3529
        %3531 = vmatprep.mubr.f32.mxu0 0.0
        %v3532 = vand.u32 %v264, 4294901760
        %v3533 = vsub.f32 %v264, %v3532
        %v3534 = vand.u32 %v3533, 4294901760
        %3535 = vmatmul.mubr.f32.gmra.mxu0 %v3534
        %v3536 = vpop.f32.mrf.mxu0
        %v3537 = vadd.f32 %v3202, %v3536
        %v3538 = vpop.f32.mrf.mxu0
        %v3539 = vadd.f32 %v3204, %v3538
        %3540 = vmatprep.mubr.f32.mxu0 0.0
        %v3541 = vand.u32 %v267, 4294901760
        %v3542 = vsub.f32 %v267, %v3541
        %v3543 = vand.u32 %v3542, 4294901760
        %3544 = vmatmul.mubr.f32.gmra.mxu0 %v3543
        %v3545 = vpop.f32.mrf.mxu0
        %v3546 = vadd.f32 %v3210, %v3545
        %v3547 = vpop.f32.mrf.mxu0
        %v3548 = vadd.f32 %v3212, %v3547
        %3549 = vmatprep.mubr.f32.mxu0 0.0
        %v3550 = vand.u32 %v270, 4294901760
        %v3551 = vsub.f32 %v270, %v3550
        %v3552 = vand.u32 %v3551, 4294901760
        %3553 = vmatmul.mubr.f32.gmra.mxu0 %v3552
        %v3554 = vpop.f32.mrf.mxu0
        %v3555 = vadd.f32 %v3218, %v3554
        %v3556 = vpop.f32.mrf.mxu0
        %v3557 = vadd.f32 %v3220, %v3556
        %3558 = vmatprep.mubr.f32.mxu0 0.0
        %v3559 = vand.u32 %v273, 4294901760
        %v3560 = vsub.f32 %v273, %v3559
        %v3561 = vand.u32 %v3560, 4294901760
        %3562 = vmatmul.mubr.f32.gmra.mxu0 %v3561
        %v3563 = vpop.f32.mrf.mxu0
        %v3564 = vadd.f32 %v3226, %v3563
        %v3565 = vpop.f32.mrf.mxu0
        %v3566 = vadd.f32 %v3228, %v3565
        %3567 = vmatprep.mubr.f32.mxu0 0.0
        %v3568 = vand.u32 %v276, 4294901760
        %v3569 = vsub.f32 %v276, %v3568
        %v3570 = vand.u32 %v3569, 4294901760
        %3571 = vmatmul.mubr.f32.gmra.mxu0 %v3570
        %v3572 = vpop.f32.mrf.mxu0
        %v3573 = vadd.f32 %v3234, %v3572
        %v3574 = vpop.f32.mrf.mxu0
        %v3575 = vadd.f32 %v3236, %v3574
        %3576 = vmatprep.mubr.f32.mxu0 0.0
        %v3577 = vand.u32 %v279, 4294901760
        %v3578 = vsub.f32 %v279, %v3577
        %v3579 = vand.u32 %v3578, 4294901760
        %3580 = vmatmul.mubr.f32.gmra.mxu0 %v3579
        %v3581 = vpop.f32.mrf.mxu0
        %v3582 = vadd.f32 %v3242, %v3581
        %v3583 = vpop.f32.mrf.mxu0
        %v3584 = vadd.f32 %v3244, %v3583
        %3585 = vmatprep.mubr.f32.mxu0 0.0
        %v3586 = vand.u32 %v282, 4294901760
        %v3587 = vsub.f32 %v282, %v3586
        %v3588 = vand.u32 %v3587, 4294901760
        %3589 = vmatmul.mubr.f32.gmra.mxu0 %v3588
        %v3590 = vpop.f32.mrf.mxu0
        %v3591 = vadd.f32 %v3250, %v3590
        %v3592 = vpop.f32.mrf.mxu0
        %v3593 = vadd.f32 %v3252, %v3592
        %3594 = vmatprep.mubr.f32.mxu0 0.0
        %v3595 = vand.u32 %v285, 4294901760
        %v3596 = vsub.f32 %v285, %v3595
        %v3597 = vand.u32 %v3596, 4294901760
        %3598 = vmatmul.mubr.f32.gmra.mxu0 %v3597
        %v3599 = vpop.f32.mrf.mxu0
        %v3600 = vadd.f32 %v3258, %v3599
        %v3601 = vpop.f32.mrf.mxu0
        %v3602 = vadd.f32 %v3260, %v3601
        %3603 = vmatprep.mubr.f32.mxu0 0.0
        %v3604 = vand.u32 %v288, 4294901760
        %v3605 = vsub.f32 %v288, %v3604
        %v3606 = vand.u32 %v3605, 4294901760
        %3607 = vmatmul.mubr.f32.gmra.mxu0 %v3606
        %v3608 = vpop.f32.mrf.mxu0
        %v3609 = vadd.f32 %v3266, %v3608
        %v3610 = vpop.f32.mrf.mxu0
        %v3611 = vadd.f32 %v3268, %v3610
        %3612 = vmatprep.mubr.f32.mxu0 0.0
        %v3613 = vand.u32 %v291, 4294901760
        %v3614 = vsub.f32 %v291, %v3613
        %v3615 = vand.u32 %v3614, 4294901760
        %3616 = vmatmul.mubr.f32.gmra.mxu0 %v3615
        %v3617 = vpop.f32.mrf.mxu0
        %v3618 = vadd.f32 %v3274, %v3617
        %v3619 = vpop.f32.mrf.mxu0
        %v3620 = vadd.f32 %v3276, %v3619
        %3621 = vmatprep.mubr.f32.mxu0 0.0
        %v3622 = vand.u32 %v294, 4294901760
        %v3623 = vsub.f32 %v294, %v3622
        %v3624 = vand.u32 %v3623, 4294901760
        %3625 = vmatmul.mubr.f32.gmra.mxu0 %v3624
        %v3626 = vpop.f32.mrf.mxu0
        %v3627 = vadd.f32 %v3282, %v3626
        %v3628 = vpop.f32.mrf.mxu0
        %v3629 = vadd.f32 %v3284, %v3628
        %3630 = vmatprep.mubr.f32.mxu0 0.0
        %v3631 = vand.u32 %v297, 4294901760
        %v3632 = vsub.f32 %v297, %v3631
        %v3633 = vand.u32 %v3632, 4294901760
        %3634 = vmatmul.mubr.f32.gmra.mxu0 %v3633
        %v3635 = vpop.f32.mrf.mxu0
        %v3636 = vadd.f32 %v3290, %v3635
        %v3637 = vpop.f32.mrf.mxu0
        %v3638 = vadd.f32 %v3292, %v3637
        %3639 = vmatprep.mubr.f32.mxu0 0.0
        %v3640 = vand.u32 %v300, 4294901760
        %v3641 = vsub.f32 %v300, %v3640
        %v3642 = vand.u32 %v3641, 4294901760
        %3643 = vmatmul.mubr.f32.gmra.mxu0 %v3642
        %v3644 = vpop.f32.mrf.mxu0
        %v3645 = vadd.f32 %v3298, %v3644
        %v3646 = vpop.f32.mrf.mxu0
        %v3647 = vadd.f32 %v3300, %v3646
        %3648 = vmatprep.mubr.f32.mxu0 0.0
        %v3649 = vand.u32 %v303, 4294901760
        %v3650 = vsub.f32 %v303, %v3649
        %v3651 = vand.u32 %v3650, 4294901760
        %3652 = vmatmul.mubr.f32.gmra.mxu0 %v3651
        %v3653 = vpop.f32.mrf.mxu0
        %v3654 = vadd.f32 %v3306, %v3653
        %v3655 = vpop.f32.mrf.mxu0
        %v3656 = vadd.f32 %v3308, %v3655
        %3657 = vmatprep.mubr.f32.mxu0 0.0
        %v3658 = vand.u32 %v306, 4294901760
        %v3659 = vsub.f32 %v306, %v3658
        %v3660 = vand.u32 %v3659, 4294901760
        %3661 = vmatmul.mubr.f32.gmra.mxu0 %v3660
        %v3662 = vpop.f32.mrf.mxu0
        %v3663 = vadd.f32 %v3314, %v3662
        %v3664 = vpop.f32.mrf.mxu0
        %v3665 = vadd.f32 %v3316, %v3664
        %3666 = vmatprep.mubr.f32.mxu0 0.0
        %v3667 = vand.u32 %v309, 4294901760
        %v3668 = vsub.f32 %v309, %v3667
        %v3669 = vand.u32 %v3668, 4294901760
        %3670 = vmatmul.mubr.f32.gmra.mxu0 %v3669
        %v3671 = vpop.f32.mrf.mxu0
        %v3672 = vadd.f32 %v3322, %v3671
        %v3673 = vpop.f32.mrf.mxu0
        %v3674 = vadd.f32 %v3324, %v3673
        %3675 = vmatprep.mubr.f32.mxu0 0.0
        %v3676 = vand.u32 %v312, 4294901760
        %v3677 = vsub.f32 %v312, %v3676
        %v3678 = vand.u32 %v3677, 4294901760
        %3679 = vmatmul.mubr.f32.gmra.mxu0 %v3678
        %v3680 = vpop.f32.mrf.mxu0
        %v3681 = vadd.f32 %v3330, %v3680
        %v3682 = vpop.f32.mrf.mxu0
        %v3683 = vadd.f32 %v3332, %v3682
        %3684 = vmatprep.mubr.f32.mxu0 0.0
        %v3685 = vand.u32 %v315, 4294901760
        %v3686 = vsub.f32 %v315, %v3685
        %v3687 = vand.u32 %v3686, 4294901760
        %3688 = vmatmul.mubr.f32.gmra.mxu0 %v3687
        %v3689 = vpop.f32.mrf.mxu0
        %v3690 = vadd.f32 %v3338, %v3689
        %v3691 = vpop.f32.mrf.mxu0
        %v3692 = vadd.f32 %v3340, %v3691
        %3693 = vmatprep.mubr.f32.mxu0 0.0
        %v3694 = vand.u32 %v318, 4294901760
        %v3695 = vsub.f32 %v318, %v3694
        %v3696 = vand.u32 %v3695, 4294901760
        %3697 = vmatmul.mubr.f32.gmra.mxu0 %v3696
        %v3698 = vpop.f32.mrf.mxu0
        %v3699 = vadd.f32 %v3346, %v3698
        %v3700 = vpop.f32.mrf.mxu0
        %v3701 = vadd.f32 %v3348, %v3700
        %3702 = vmatprep.mubr.f32.mxu0 0.0
        %v3703 = vand.u32 %v321, 4294901760
        %v3704 = vsub.f32 %v321, %v3703
        %v3705 = vand.u32 %v3704, 4294901760
        %3706 = vmatmul.mubr.f32.gmra.mxu0 %v3705
        %v3707 = vpop.f32.mrf.mxu0
        %v3708 = vadd.f32 %v3354, %v3707
        %v3709 = vpop.f32.mrf.mxu0
        %v3710 = vadd.f32 %v3356, %v3709
        %3711 = vmatprep.mubr.f32.mxu0 0.0
        %v3712 = vand.u32 %v324, 4294901760
        %v3713 = vsub.f32 %v324, %v3712
        %v3714 = vand.u32 %v3713, 4294901760
        %3715 = vmatmul.mubr.f32.gmra.mxu0 %v3714
        %v3716 = vpop.f32.mrf.mxu0
        %v3717 = vadd.f32 %v3362, %v3716
        %v3718 = vpop.f32.mrf.mxu0
        %v3719 = vadd.f32 %v3364, %v3718
        %3720 = vdwg.mxu0
        %3721 = vmatprep.subr.mxu0 0.0
        %3722 = vmatpush1.msra.mxu0 0.0
        %3723 = vmatprep.subr.mxu0 0.0
        %3724 = vmatpush1.msra.mxu0 0.0
        %3725 = vmatprep.subr.mxu0 0.0
        %3726 = vmatpush1.msra.mxu0 0.0
        %3727 = vmatprep.subr.mxu0 0.0
        %3728 = vmatpush1.msra.mxu0 0.0
        %3729 = vmatprep.subr.mxu0 0.0
        %3730 = vmatpush1.msra.mxu0 0.0
        %3731 = vmatprep.subr.mxu0 0.0
        %3732 = vmatpush1.msra.mxu0 0.0
        %3733 = vmatprep.subr.mxu0 0.0
        %3734 = vmatpush1.msra.mxu0 0.0
        %3735 = vmatprep.subr.mxu0 0.0
        %3736 = vmatpush1.msra.mxu0 0.0
        %3737 = vmatprep.subr.mxu0 0.0
        %3738 = vmatpush1.msra.mxu0 0.0
        %3739 = vmatprep.subr.mxu0 0.0
        %3740 = vmatpush1.msra.mxu0 0.0
        %3741 = vmatprep.subr.mxu0 0.0
        %3742 = vmatpush1.msra.mxu0 0.0
        %3743 = vmatprep.subr.mxu0 0.0
        %3744 = vmatpush1.msra.mxu0 0.0
        %3745 = vmatprep.subr.mxu0 0.0
        %3746 = vmatpush1.msra.mxu0 0.0
        %3747 = vmatprep.subr.mxu0 0.0
        %3748 = vmatpush1.msra.mxu0 0.0
        %3749 = vmatprep.subr.mxu0 0.0
        %3750 = vmatpush1.msra.mxu0 0.0
        %v3751 = vand.u32 %v337, 4294901760
        %v3752 = vsub.f32 %v337, %v3751
        %v3753 = vand.u32 %v3752, 4294901760
        %3754 = vmatprep.subr.mxu0 %v3753
        %v3755 = vand.u32 %v334, 4294901760
        %v3756 = vsub.f32 %v334, %v3755
        %v3757 = vand.u32 %v3756, 4294901760
        %3758 = vmatpush1.msra.mxu0 %v3757
        %3759 = vmatprep.subr.mxu0 0.0
        %3760 = vmatpush2.msra.mxu0 0.0
        %3761 = vmatprep.subr.mxu0 0.0
        %3762 = vmatpush2.msra.mxu0 0.0
        %3763 = vmatprep.subr.mxu0 0.0
        %3764 = vmatpush2.msra.mxu0 0.0
        %3765 = vmatprep.subr.mxu0 0.0
        %3766 = vmatpush2.msra.mxu0 0.0
        %3767 = vmatprep.subr.mxu0 0.0
        %3768 = vmatpush2.msra.mxu0 0.0
        %3769 = vmatprep.subr.mxu0 0.0
        %3770 = vmatpush2.msra.mxu0 0.0
        %3771 = vmatprep.subr.mxu0 0.0
        %3772 = vmatpush2.msra.mxu0 0.0
        %3773 = vmatprep.subr.mxu0 0.0
        %3774 = vmatpush2.msra.mxu0 0.0
        %3775 = vmatprep.subr.mxu0 0.0
        %3776 = vmatpush2.msra.mxu0 0.0
        %3777 = vmatprep.subr.mxu0 0.0
        %3778 = vmatpush2.msra.mxu0 0.0
        %3779 = vmatprep.subr.mxu0 0.0
        %3780 = vmatpush2.msra.mxu0 0.0
        %3781 = vmatprep.subr.mxu0 0.0
        %3782 = vmatpush2.msra.mxu0 0.0
        %3783 = vmatprep.subr.mxu0 0.0
        %3784 = vmatpush2.msra.mxu0 0.0
        %3785 = vmatprep.subr.mxu0 0.0
        %3786 = vmatpush2.msra.mxu0 0.0
        %3787 = vmatprep.subr.mxu0 0.0
        %3788 = vmatpush2.msra.mxu0 0.0
        %3789 = vmatprep.subr.mxu0 0.0
        %3790 = vmatpush2.msra.mxu0 0.0
        %3791 = vmatprep.mubr.f32.mxu0 0.0
        %v3792 = vand.u32 %v231, 4294901760
        %3793 = vmatmul.mubr.f32.gmra.mxu0 %v3792
        %v3794 = vpop.f32.mrf.mxu0
        %v3795 = vadd.f32 %v3438, %v3794
        %v3796 = vpop.f32.mrf.mxu0
        %v3797 = vadd.f32 %v3440, %v3796
        %3798 = vmatprep.mubr.f32.mxu0 0.0
        %v3799 = vand.u32 %v234, 4294901760
        %3800 = vmatmul.mubr.f32.gmra.mxu0 %v3799
        %v3801 = vpop.f32.mrf.mxu0
        %v3802 = vadd.f32 %v3447, %v3801
        %v3803 = vpop.f32.mrf.mxu0
        %v3804 = vadd.f32 %v3449, %v3803
        %3805 = vmatprep.mubr.f32.mxu0 0.0
        %v3806 = vand.u32 %v237, 4294901760
        %3807 = vmatmul.mubr.f32.gmra.mxu0 %v3806
        %v3808 = vpop.f32.mrf.mxu0
        %v3809 = vadd.f32 %v3456, %v3808
        %v3810 = vpop.f32.mrf.mxu0
        %v3811 = vadd.f32 %v3458, %v3810
        %3812 = vmatprep.mubr.f32.mxu0 0.0
        %v3813 = vand.u32 %v240, 4294901760
        %3814 = vmatmul.mubr.f32.gmra.mxu0 %v3813
        %v3815 = vpop.f32.mrf.mxu0
        %v3816 = vadd.f32 %v3465, %v3815
        %v3817 = vpop.f32.mrf.mxu0
        %v3818 = vadd.f32 %v3467, %v3817
        %3819 = vmatprep.mubr.f32.mxu0 0.0
        %v3820 = vand.u32 %v243, 4294901760
        %3821 = vmatmul.mubr.f32.gmra.mxu0 %v3820
        %v3822 = vpop.f32.mrf.mxu0
        %v3823 = vadd.f32 %v3474, %v3822
        %v3824 = vpop.f32.mrf.mxu0
        %v3825 = vadd.f32 %v3476, %v3824
        %3826 = vmatprep.mubr.f32.mxu0 0.0
        %v3827 = vand.u32 %v246, 4294901760
        %3828 = vmatmul.mubr.f32.gmra.mxu0 %v3827
        %v3829 = vpop.f32.mrf.mxu0
        %v3830 = vadd.f32 %v3483, %v3829
        %v3831 = vpop.f32.mrf.mxu0
        %v3832 = vadd.f32 %v3485, %v3831
        %3833 = vmatprep.mubr.f32.mxu0 0.0
        %v3834 = vand.u32 %v249, 4294901760
        %3835 = vmatmul.mubr.f32.gmra.mxu0 %v3834
        %v3836 = vpop.f32.mrf.mxu0
        %v3837 = vadd.f32 %v3492, %v3836
        %v3838 = vpop.f32.mrf.mxu0
        %v3839 = vadd.f32 %v3494, %v3838
        %3840 = vmatprep.mubr.f32.mxu0 0.0
        %v3841 = vand.u32 %v252, 4294901760
        %3842 = vmatmul.mubr.f32.gmra.mxu0 %v3841
        %v3843 = vpop.f32.mrf.mxu0
        %v3844 = vadd.f32 %v3501, %v3843
        %v3845 = vpop.f32.mrf.mxu0
        %v3846 = vadd.f32 %v3503, %v3845
        %3847 = vmatprep.mubr.f32.mxu0 0.0
        %v3848 = vand.u32 %v255, 4294901760
        %3849 = vmatmul.mubr.f32.gmra.mxu0 %v3848
        %v3850 = vpop.f32.mrf.mxu0
        %v3851 = vadd.f32 %v3510, %v3850
        %v3852 = vpop.f32.mrf.mxu0
        %v3853 = vadd.f32 %v3512, %v3852
        %3854 = vmatprep.mubr.f32.mxu0 0.0
        %v3855 = vand.u32 %v258, 4294901760
        %3856 = vmatmul.mubr.f32.gmra.mxu0 %v3855
        %v3857 = vpop.f32.mrf.mxu0
        %v3858 = vadd.f32 %v3519, %v3857
        %v3859 = vpop.f32.mrf.mxu0
        %v3860 = vadd.f32 %v3521, %v3859
        %3861 = vmatprep.mubr.f32.mxu0 0.0
        %v3862 = vand.u32 %v261, 4294901760
        %3863 = vmatmul.mubr.f32.gmra.mxu0 %v3862
        %v3864 = vpop.f32.mrf.mxu0
        %v3865 = vadd.f32 %v3528, %v3864
        %v3866 = vpop.f32.mrf.mxu0
        %v3867 = vadd.f32 %v3530, %v3866
        %3868 = vmatprep.mubr.f32.mxu0 0.0
        %v3869 = vand.u32 %v264, 4294901760
        %3870 = vmatmul.mubr.f32.gmra.mxu0 %v3869
        %v3871 = vpop.f32.mrf.mxu0
        %v3872 = vadd.f32 %v3537, %v3871
        %v3873 = vpop.f32.mrf.mxu0
        %v3874 = vadd.f32 %v3539, %v3873
        %3875 = vmatprep.mubr.f32.mxu0 0.0
        %v3876 = vand.u32 %v267, 4294901760
        %3877 = vmatmul.mubr.f32.gmra.mxu0 %v3876
        %v3878 = vpop.f32.mrf.mxu0
        %v3879 = vadd.f32 %v3546, %v3878
        %v3880 = vpop.f32.mrf.mxu0
        %v3881 = vadd.f32 %v3548, %v3880
        %3882 = vmatprep.mubr.f32.mxu0 0.0
        %v3883 = vand.u32 %v270, 4294901760
        %3884 = vmatmul.mubr.f32.gmra.mxu0 %v3883
        %v3885 = vpop.f32.mrf.mxu0
        %v3886 = vadd.f32 %v3555, %v3885
        %v3887 = vpop.f32.mrf.mxu0
        %v3888 = vadd.f32 %v3557, %v3887
        %3889 = vmatprep.mubr.f32.mxu0 0.0
        %v3890 = vand.u32 %v273, 4294901760
        %3891 = vmatmul.mubr.f32.gmra.mxu0 %v3890
        %v3892 = vpop.f32.mrf.mxu0
        %v3893 = vadd.f32 %v3564, %v3892
        %v3894 = vpop.f32.mrf.mxu0
        %v3895 = vadd.f32 %v3566, %v3894
        %3896 = vmatprep.mubr.f32.mxu0 0.0
        %v3897 = vand.u32 %v276, 4294901760
        %3898 = vmatmul.mubr.f32.gmra.mxu0 %v3897
        %v3899 = vpop.f32.mrf.mxu0
        %v3900 = vadd.f32 %v3573, %v3899
        %v3901 = vpop.f32.mrf.mxu0
        %v3902 = vadd.f32 %v3575, %v3901
        %3903 = vmatprep.mubr.f32.mxu0 0.0
        %v3904 = vand.u32 %v279, 4294901760
        %3905 = vmatmul.mubr.f32.gmra.mxu0 %v3904
        %v3906 = vpop.f32.mrf.mxu0
        %v3907 = vadd.f32 %v3582, %v3906
        %v3908 = vpop.f32.mrf.mxu0
        %v3909 = vadd.f32 %v3584, %v3908
        %3910 = vmatprep.mubr.f32.mxu0 0.0
        %v3911 = vand.u32 %v282, 4294901760
        %3912 = vmatmul.mubr.f32.gmra.mxu0 %v3911
        %v3913 = vpop.f32.mrf.mxu0
        %v3914 = vadd.f32 %v3591, %v3913
        %v3915 = vpop.f32.mrf.mxu0
        %v3916 = vadd.f32 %v3593, %v3915
        %3917 = vmatprep.mubr.f32.mxu0 0.0
        %v3918 = vand.u32 %v285, 4294901760
        %3919 = vmatmul.mubr.f32.gmra.mxu0 %v3918
        %v3920 = vpop.f32.mrf.mxu0
        %v3921 = vadd.f32 %v3600, %v3920
        %v3922 = vpop.f32.mrf.mxu0
        %v3923 = vadd.f32 %v3602, %v3922
        %3924 = vmatprep.mubr.f32.mxu0 0.0
        %v3925 = vand.u32 %v288, 4294901760
        %3926 = vmatmul.mubr.f32.gmra.mxu0 %v3925
        %v3927 = vpop.f32.mrf.mxu0
        %v3928 = vadd.f32 %v3609, %v3927
        %v3929 = vpop.f32.mrf.mxu0
        %v3930 = vadd.f32 %v3611, %v3929
        %3931 = vmatprep.mubr.f32.mxu0 0.0
        %v3932 = vand.u32 %v291, 4294901760
        %3933 = vmatmul.mubr.f32.gmra.mxu0 %v3932
        %v3934 = vpop.f32.mrf.mxu0
        %v3935 = vadd.f32 %v3618, %v3934
        %v3936 = vpop.f32.mrf.mxu0
        %v3937 = vadd.f32 %v3620, %v3936
        %3938 = vmatprep.mubr.f32.mxu0 0.0
        %v3939 = vand.u32 %v294, 4294901760
        %3940 = vmatmul.mubr.f32.gmra.mxu0 %v3939
        %v3941 = vpop.f32.mrf.mxu0
        %v3942 = vadd.f32 %v3627, %v3941
        %v3943 = vpop.f32.mrf.mxu0
        %v3944 = vadd.f32 %v3629, %v3943
        %3945 = vmatprep.mubr.f32.mxu0 0.0
        %v3946 = vand.u32 %v297, 4294901760
        %3947 = vmatmul.mubr.f32.gmra.mxu0 %v3946
        %v3948 = vpop.f32.mrf.mxu0
        %v3949 = vadd.f32 %v3636, %v3948
        %v3950 = vpop.f32.mrf.mxu0
        %v3951 = vadd.f32 %v3638, %v3950
        %3952 = vmatprep.mubr.f32.mxu0 0.0
        %v3953 = vand.u32 %v300, 4294901760
        %3954 = vmatmul.mubr.f32.gmra.mxu0 %v3953
        %v3955 = vpop.f32.mrf.mxu0
        %v3956 = vadd.f32 %v3645, %v3955
        %v3957 = vpop.f32.mrf.mxu0
        %v3958 = vadd.f32 %v3647, %v3957
        %3959 = vmatprep.mubr.f32.mxu0 0.0
        %v3960 = vand.u32 %v303, 4294901760
        %3961 = vmatmul.mubr.f32.gmra.mxu0 %v3960
        %v3962 = vpop.f32.mrf.mxu0
        %v3963 = vadd.f32 %v3654, %v3962
        %v3964 = vpop.f32.mrf.mxu0
        %v3965 = vadd.f32 %v3656, %v3964
        %3966 = vmatprep.mubr.f32.mxu0 0.0
        %v3967 = vand.u32 %v306, 4294901760
        %3968 = vmatmul.mubr.f32.gmra.mxu0 %v3967
        %v3969 = vpop.f32.mrf.mxu0
        %v3970 = vadd.f32 %v3663, %v3969
        %v3971 = vpop.f32.mrf.mxu0
        %v3972 = vadd.f32 %v3665, %v3971
        %3973 = vmatprep.mubr.f32.mxu0 0.0
        %v3974 = vand.u32 %v309, 4294901760
        %3975 = vmatmul.mubr.f32.gmra.mxu0 %v3974
        %v3976 = vpop.f32.mrf.mxu0
        %v3977 = vadd.f32 %v3672, %v3976
        %v3978 = vpop.f32.mrf.mxu0
        %v3979 = vadd.f32 %v3674, %v3978
        %3980 = vmatprep.mubr.f32.mxu0 0.0
        %v3981 = vand.u32 %v312, 4294901760
        %3982 = vmatmul.mubr.f32.gmra.mxu0 %v3981
        %v3983 = vpop.f32.mrf.mxu0
        %v3984 = vadd.f32 %v3681, %v3983
        %v3985 = vpop.f32.mrf.mxu0
        %v3986 = vadd.f32 %v3683, %v3985
        %3987 = vmatprep.mubr.f32.mxu0 0.0
        %v3988 = vand.u32 %v315, 4294901760
        %3989 = vmatmul.mubr.f32.gmra.mxu0 %v3988
        %v3990 = vpop.f32.mrf.mxu0
        %v3991 = vadd.f32 %v3690, %v3990
        %v3992 = vpop.f32.mrf.mxu0
        %v3993 = vadd.f32 %v3692, %v3992
        %3994 = vmatprep.mubr.f32.mxu0 0.0
        %v3995 = vand.u32 %v318, 4294901760
        %3996 = vmatmul.mubr.f32.gmra.mxu0 %v3995
        %v3997 = vpop.f32.mrf.mxu0
        %v3998 = vadd.f32 %v3699, %v3997
        %v3999 = vpop.f32.mrf.mxu0
        %v4000 = vadd.f32 %v3701, %v3999
        %4001 = vmatprep.mubr.f32.mxu0 0.0
        %v4002 = vand.u32 %v321, 4294901760
        %4003 = vmatmul.mubr.f32.gmra.mxu0 %v4002
        %v4004 = vpop.f32.mrf.mxu0
        %v4005 = vadd.f32 %v3708, %v4004
        %v4006 = vpop.f32.mrf.mxu0
        %v4007 = vadd.f32 %v3710, %v4006
        %4008 = vmatprep.mubr.f32.mxu0 0.0
        %v4009 = vand.u32 %v324, 4294901760
        %4010 = vmatmul.mubr.f32.gmra.mxu0 %v4009
        %v4011 = vpop.f32.mrf.mxu0
        %v4012 = vadd.f32 %v3717, %v4011
        %v4013 = vpop.f32.mrf.mxu0
        %v4014 = vadd.f32 %v3719, %v4013
        %4015 = vdwg.mxu0
        %4016 = vmatprep.subr.mxu0 0.0
        %4017 = vmatpush1.msra.mxu0 0.0
        %4018 = vmatprep.subr.mxu0 0.0
        %4019 = vmatpush1.msra.mxu0 0.0
        %4020 = vmatprep.subr.mxu0 0.0
        %4021 = vmatpush1.msra.mxu0 0.0
        %4022 = vmatprep.subr.mxu0 0.0
        %4023 = vmatpush1.msra.mxu0 0.0
        %4024 = vmatprep.subr.mxu0 0.0
        %4025 = vmatpush1.msra.mxu0 0.0
        %4026 = vmatprep.subr.mxu0 0.0
        %4027 = vmatpush1.msra.mxu0 0.0
        %4028 = vmatprep.subr.mxu0 0.0
        %4029 = vmatpush1.msra.mxu0 0.0
        %4030 = vmatprep.subr.mxu0 0.0
        %4031 = vmatpush1.msra.mxu0 0.0
        %4032 = vmatprep.subr.mxu0 0.0
        %4033 = vmatpush1.msra.mxu0 0.0
        %4034 = vmatprep.subr.mxu0 0.0
        %4035 = vmatpush1.msra.mxu0 0.0
        %4036 = vmatprep.subr.mxu0 0.0
        %4037 = vmatpush1.msra.mxu0 0.0
        %4038 = vmatprep.subr.mxu0 0.0
        %4039 = vmatpush1.msra.mxu0 0.0
        %4040 = vmatprep.subr.mxu0 0.0
        %4041 = vmatpush1.msra.mxu0 0.0
        %4042 = vmatprep.subr.mxu0 0.0
        %4043 = vmatpush1.msra.mxu0 0.0
        %4044 = vmatprep.subr.mxu0 0.0
        %4045 = vmatpush1.msra.mxu0 0.0
        %v4046 = vand.u32 %v337, 4294901760
        %4047 = vmatprep.subr.mxu0 %v4046
        %v4048 = vand.u32 %v334, 4294901760
        %4049 = vmatpush1.msra.mxu0 %v4048
        %4050 = vmatprep.subr.mxu0 0.0
        %4051 = vmatpush2.msra.mxu0 0.0
        %4052 = vmatprep.subr.mxu0 0.0
        %4053 = vmatpush2.msra.mxu0 0.0
        %4054 = vmatprep.subr.mxu0 0.0
        %4055 = vmatpush2.msra.mxu0 0.0
        %4056 = vmatprep.subr.mxu0 0.0
        %4057 = vmatpush2.msra.mxu0 0.0
        %4058 = vmatprep.subr.mxu0 0.0
        %4059 = vmatpush2.msra.mxu0 0.0
        %4060 = vmatprep.subr.mxu0 0.0
        %4061 = vmatpush2.msra.mxu0 0.0
        %4062 = vmatprep.subr.mxu0 0.0
        %4063 = vmatpush2.msra.mxu0 0.0
        %4064 = vmatprep.subr.mxu0 0.0
        %4065 = vmatpush2.msra.mxu0 0.0
        %4066 = vmatprep.subr.mxu0 0.0
        %4067 = vmatpush2.msra.mxu0 0.0
        %4068 = vmatprep.subr.mxu0 0.0
        %4069 = vmatpush2.msra.mxu0 0.0
        %4070 = vmatprep.subr.mxu0 0.0
        %4071 = vmatpush2.msra.mxu0 0.0
        %4072 = vmatprep.subr.mxu0 0.0
        %4073 = vmatpush2.msra.mxu0 0.0
        %4074 = vmatprep.subr.mxu0 0.0
        %4075 = vmatpush2.msra.mxu0 0.0
        %4076 = vmatprep.subr.mxu0 0.0
        %4077 = vmatpush2.msra.mxu0 0.0
        %4078 = vmatprep.subr.mxu0 0.0
        %4079 = vmatpush2.msra.mxu0 0.0
        %4080 = vmatprep.subr.mxu0 0.0
        %4081 = vmatpush2.msra.mxu0 0.0
        %4082 = vmatprep.mubr.f32.mxu0 0.0
        %v4083 = vand.u32 %v231, 4294901760
        %4084 = vmatmul.mubr.f32.gmra.mxu0 %v4083
        %v4085 = vpop.f32.mrf.mxu0
        %v4086 = vadd.f32 %v3795, %v4085
        %v4087 = vpop.f32.mrf.mxu0
        %v4088 = vadd.f32 %v3797, %v4087
        %4089 = vmatprep.mubr.f32.mxu0 0.0
        %v4090 = vand.u32 %v234, 4294901760
        %4091 = vmatmul.mubr.f32.gmra.mxu0 %v4090
        %v4092 = vpop.f32.mrf.mxu0
        %v4093 = vadd.f32 %v3802, %v4092
        %v4094 = vpop.f32.mrf.mxu0
        %v4095 = vadd.f32 %v3804, %v4094
        %4096 = vmatprep.mubr.f32.mxu0 0.0
        %v4097 = vand.u32 %v237, 4294901760
        %4098 = vmatmul.mubr.f32.gmra.mxu0 %v4097
        %v4099 = vpop.f32.mrf.mxu0
        %v4100 = vadd.f32 %v3809, %v4099
        %v4101 = vpop.f32.mrf.mxu0
        %v4102 = vadd.f32 %v3811, %v4101
        %4103 = vmatprep.mubr.f32.mxu0 0.0
        %v4104 = vand.u32 %v240, 4294901760
        %4105 = vmatmul.mubr.f32.gmra.mxu0 %v4104
        %v4106 = vpop.f32.mrf.mxu0
        %v4107 = vadd.f32 %v3816, %v4106
        %v4108 = vpop.f32.mrf.mxu0
        %v4109 = vadd.f32 %v3818, %v4108
        %4110 = vmatprep.mubr.f32.mxu0 0.0
        %v4111 = vand.u32 %v243, 4294901760
        %4112 = vmatmul.mubr.f32.gmra.mxu0 %v4111
        %v4113 = vpop.f32.mrf.mxu0
        %v4114 = vadd.f32 %v3823, %v4113
        %v4115 = vpop.f32.mrf.mxu0
        %v4116 = vadd.f32 %v3825, %v4115
        %4117 = vmatprep.mubr.f32.mxu0 0.0
        %v4118 = vand.u32 %v246, 4294901760
        %4119 = vmatmul.mubr.f32.gmra.mxu0 %v4118
        %v4120 = vpop.f32.mrf.mxu0
        %v4121 = vadd.f32 %v3830, %v4120
        %v4122 = vpop.f32.mrf.mxu0
        %v4123 = vadd.f32 %v3832, %v4122
        %4124 = vmatprep.mubr.f32.mxu0 0.0
        %v4125 = vand.u32 %v249, 4294901760
        %4126 = vmatmul.mubr.f32.gmra.mxu0 %v4125
        %v4127 = vpop.f32.mrf.mxu0
        %v4128 = vadd.f32 %v3837, %v4127
        %v4129 = vpop.f32.mrf.mxu0
        %v4130 = vadd.f32 %v3839, %v4129
        %4131 = vmatprep.mubr.f32.mxu0 0.0
        %v4132 = vand.u32 %v252, 4294901760
        %4133 = vmatmul.mubr.f32.gmra.mxu0 %v4132
        %v4134 = vpop.f32.mrf.mxu0
        %v4135 = vadd.f32 %v3844, %v4134
        %v4136 = vpop.f32.mrf.mxu0
        %v4137 = vadd.f32 %v3846, %v4136
        %4138 = vmatprep.mubr.f32.mxu0 0.0
        %v4139 = vand.u32 %v255, 4294901760
        %4140 = vmatmul.mubr.f32.gmra.mxu0 %v4139
        %v4141 = vpop.f32.mrf.mxu0
        %v4142 = vadd.f32 %v3851, %v4141
        %v4143 = vpop.f32.mrf.mxu0
        %v4144 = vadd.f32 %v3853, %v4143
        %4145 = vmatprep.mubr.f32.mxu0 0.0
        %v4146 = vand.u32 %v258, 4294901760
        %4147 = vmatmul.mubr.f32.gmra.mxu0 %v4146
        %v4148 = vpop.f32.mrf.mxu0
        %v4149 = vadd.f32 %v3858, %v4148
        %v4150 = vpop.f32.mrf.mxu0
        %v4151 = vadd.f32 %v3860, %v4150
        %4152 = vmatprep.mubr.f32.mxu0 0.0
        %v4153 = vand.u32 %v261, 4294901760
        %4154 = vmatmul.mubr.f32.gmra.mxu0 %v4153
        %v4155 = vpop.f32.mrf.mxu0
        %v4156 = vadd.f32 %v3865, %v4155
        %v4157 = vpop.f32.mrf.mxu0
        %v4158 = vadd.f32 %v3867, %v4157
        %4159 = vmatprep.mubr.f32.mxu0 0.0
        %v4160 = vand.u32 %v264, 4294901760
        %4161 = vmatmul.mubr.f32.gmra.mxu0 %v4160
        %v4162 = vpop.f32.mrf.mxu0
        %v4163 = vadd.f32 %v3872, %v4162
        %v4164 = vpop.f32.mrf.mxu0
        %v4165 = vadd.f32 %v3874, %v4164
        %4166 = vmatprep.mubr.f32.mxu0 0.0
        %v4167 = vand.u32 %v267, 4294901760
        %4168 = vmatmul.mubr.f32.gmra.mxu0 %v4167
        %v4169 = vpop.f32.mrf.mxu0
        %v4170 = vadd.f32 %v3879, %v4169
        %v4171 = vpop.f32.mrf.mxu0
        %v4172 = vadd.f32 %v3881, %v4171
        %4173 = vmatprep.mubr.f32.mxu0 0.0
        %v4174 = vand.u32 %v270, 4294901760
        %4175 = vmatmul.mubr.f32.gmra.mxu0 %v4174
        %v4176 = vpop.f32.mrf.mxu0
        %v4177 = vadd.f32 %v3886, %v4176
        %v4178 = vpop.f32.mrf.mxu0
        %v4179 = vadd.f32 %v3888, %v4178
        %4180 = vmatprep.mubr.f32.mxu0 0.0
        %v4181 = vand.u32 %v273, 4294901760
        %4182 = vmatmul.mubr.f32.gmra.mxu0 %v4181
        %v4183 = vpop.f32.mrf.mxu0
        %v4184 = vadd.f32 %v3893, %v4183
        %v4185 = vpop.f32.mrf.mxu0
        %v4186 = vadd.f32 %v3895, %v4185
        %4187 = vmatprep.mubr.f32.mxu0 0.0
        %v4188 = vand.u32 %v276, 4294901760
        %4189 = vmatmul.mubr.f32.gmra.mxu0 %v4188
        %v4190 = vpop.f32.mrf.mxu0
        %v4191 = vadd.f32 %v3900, %v4190
        %v4192 = vpop.f32.mrf.mxu0
        %v4193 = vadd.f32 %v3902, %v4192
        %4194 = vmatprep.mubr.f32.mxu0 0.0
        %v4195 = vand.u32 %v279, 4294901760
        %4196 = vmatmul.mubr.f32.gmra.mxu0 %v4195
        %v4197 = vpop.f32.mrf.mxu0
        %v4198 = vadd.f32 %v3907, %v4197
        %v4199 = vpop.f32.mrf.mxu0
        %v4200 = vadd.f32 %v3909, %v4199
        %4201 = vmatprep.mubr.f32.mxu0 0.0
        %v4202 = vand.u32 %v282, 4294901760
        %4203 = vmatmul.mubr.f32.gmra.mxu0 %v4202
        %v4204 = vpop.f32.mrf.mxu0
        %v4205 = vadd.f32 %v3914, %v4204
        %v4206 = vpop.f32.mrf.mxu0
        %v4207 = vadd.f32 %v3916, %v4206
        %4208 = vmatprep.mubr.f32.mxu0 0.0
        %v4209 = vand.u32 %v285, 4294901760
        %4210 = vmatmul.mubr.f32.gmra.mxu0 %v4209
        %v4211 = vpop.f32.mrf.mxu0
        %v4212 = vadd.f32 %v3921, %v4211
        %v4213 = vpop.f32.mrf.mxu0
        %v4214 = vadd.f32 %v3923, %v4213
        %4215 = vmatprep.mubr.f32.mxu0 0.0
        %v4216 = vand.u32 %v288, 4294901760
        %4217 = vmatmul.mubr.f32.gmra.mxu0 %v4216
        %v4218 = vpop.f32.mrf.mxu0
        %v4219 = vadd.f32 %v3928, %v4218
        %v4220 = vpop.f32.mrf.mxu0
        %v4221 = vadd.f32 %v3930, %v4220
        %4222 = vmatprep.mubr.f32.mxu0 0.0
        %v4223 = vand.u32 %v291, 4294901760
        %4224 = vmatmul.mubr.f32.gmra.mxu0 %v4223
        %v4225 = vpop.f32.mrf.mxu0
        %v4226 = vadd.f32 %v3935, %v4225
        %v4227 = vpop.f32.mrf.mxu0
        %v4228 = vadd.f32 %v3937, %v4227
        %4229 = vmatprep.mubr.f32.mxu0 0.0
        %v4230 = vand.u32 %v294, 4294901760
        %4231 = vmatmul.mubr.f32.gmra.mxu0 %v4230
        %v4232 = vpop.f32.mrf.mxu0
        %v4233 = vadd.f32 %v3942, %v4232
        %v4234 = vpop.f32.mrf.mxu0
        %v4235 = vadd.f32 %v3944, %v4234
        %4236 = vmatprep.mubr.f32.mxu0 0.0
        %v4237 = vand.u32 %v297, 4294901760
        %4238 = vmatmul.mubr.f32.gmra.mxu0 %v4237
        %v4239 = vpop.f32.mrf.mxu0
        %v4240 = vadd.f32 %v3949, %v4239
        %v4241 = vpop.f32.mrf.mxu0
        %v4242 = vadd.f32 %v3951, %v4241
        %4243 = vmatprep.mubr.f32.mxu0 0.0
        %v4244 = vand.u32 %v300, 4294901760
        %4245 = vmatmul.mubr.f32.gmra.mxu0 %v4244
        %v4246 = vpop.f32.mrf.mxu0
        %v4247 = vadd.f32 %v3956, %v4246
        %v4248 = vpop.f32.mrf.mxu0
        %v4249 = vadd.f32 %v3958, %v4248
        %4250 = vmatprep.mubr.f32.mxu0 0.0
        %v4251 = vand.u32 %v303, 4294901760
        %4252 = vmatmul.mubr.f32.gmra.mxu0 %v4251
        %v4253 = vpop.f32.mrf.mxu0
        %v4254 = vadd.f32 %v3963, %v4253
        %v4255 = vpop.f32.mrf.mxu0
        %v4256 = vadd.f32 %v3965, %v4255
        %4257 = vmatprep.mubr.f32.mxu0 0.0
        %v4258 = vand.u32 %v306, 4294901760
        %4259 = vmatmul.mubr.f32.gmra.mxu0 %v4258
        %v4260 = vpop.f32.mrf.mxu0
        %v4261 = vadd.f32 %v3970, %v4260
        %v4262 = vpop.f32.mrf.mxu0
        %v4263 = vadd.f32 %v3972, %v4262
        %4264 = vmatprep.mubr.f32.mxu0 0.0
        %v4265 = vand.u32 %v309, 4294901760
        %4266 = vmatmul.mubr.f32.gmra.mxu0 %v4265
        %v4267 = vpop.f32.mrf.mxu0
        %v4268 = vadd.f32 %v3977, %v4267
        %v4269 = vpop.f32.mrf.mxu0
        %v4270 = vadd.f32 %v3979, %v4269
        %4271 = vmatprep.mubr.f32.mxu0 0.0
        %v4272 = vand.u32 %v312, 4294901760
        %4273 = vmatmul.mubr.f32.gmra.mxu0 %v4272
        %v4274 = vpop.f32.mrf.mxu0
        %v4275 = vadd.f32 %v3984, %v4274
        %v4276 = vpop.f32.mrf.mxu0
        %v4277 = vadd.f32 %v3986, %v4276
        %4278 = vmatprep.mubr.f32.mxu0 0.0
        %v4279 = vand.u32 %v315, 4294901760
        %4280 = vmatmul.mubr.f32.gmra.mxu0 %v4279
        %v4281 = vpop.f32.mrf.mxu0
        %v4282 = vadd.f32 %v3991, %v4281
        %v4283 = vpop.f32.mrf.mxu0
        %v4284 = vadd.f32 %v3993, %v4283
        %4285 = vmatprep.mubr.f32.mxu0 0.0
        %v4286 = vand.u32 %v318, 4294901760
        %4287 = vmatmul.mubr.f32.gmra.mxu0 %v4286
        %v4288 = vpop.f32.mrf.mxu0
        %v4289 = vadd.f32 %v3998, %v4288
        %v4290 = vpop.f32.mrf.mxu0
        %v4291 = vadd.f32 %v4000, %v4290
        %4292 = vmatprep.mubr.f32.mxu0 0.0
        %v4293 = vand.u32 %v321, 4294901760
        %4294 = vmatmul.mubr.f32.gmra.mxu0 %v4293
        %v4295 = vpop.f32.mrf.mxu0
        %v4296 = vadd.f32 %v4005, %v4295
        %v4297 = vpop.f32.mrf.mxu0
        %v4298 = vadd.f32 %v4007, %v4297
        %4299 = vmatprep.mubr.f32.mxu0 0.0
        %v4300 = vand.u32 %v324, 4294901760
        %4301 = vmatmul.mubr.f32.gmra.mxu0 %v4300
        %v4302 = vpop.f32.mrf.mxu0
        %v4303 = vadd.f32 %v4012, %v4302
        %v4304 = vpop.f32.mrf.mxu0
        %v4305 = vadd.f32 %v4014, %v4304
        %4306 = vdwg.mxu0
        %4307 = vst [vmem:[%s176] sm:$0xff] %v2102
        %4308 = vst [vmem:[%s176 + $0x8] sm:$0xff] %v2104
        %4309 = vst [vmem:[%s176 + $0x10] sm:$0xff] %v4086
        %4310 = vst [vmem:[%s176 + $0x18] sm:$0xff] %v4088
        %4311 = vst [vmem:[%s176 + $0x20] sm:$0xff] %v2109
        %4312 = vst [vmem:[%s176 + $0x28] sm:$0xff] %v2111
        %4313 = vst [vmem:[%s176 + $0x30] sm:$0xff] %v4093
        %4314 = vst [vmem:[%s176 + $0x38] sm:$0xff] %v4095
        %4315 = vst [vmem:[%s176 + $0x40] sm:$0xff] %v2116
        %4316 = vst [vmem:[%s176 + $0x48] sm:$0xff] %v2118
        %4317 = vst [vmem:[%s176 + $0x50] sm:$0xff] %v4100
        %4318 = vst [vmem:[%s176 + $0x58] sm:$0xff] %v4102
        %4319 = vst [vmem:[%s176 + $0x60] sm:$0xff] %v2123
        %4320 = vst [vmem:[%s176 + $0x68] sm:$0xff] %v2125
        %4321 = vst [vmem:[%s176 + $0x70] sm:$0xff] %v4107
        %4322 = vst [vmem:[%s176 + $0x78] sm:$0xff] %v4109
        %4323 = vst [vmem:[%s176 + $0x80] sm:$0xff] %v2130
        %4324 = vst [vmem:[%s176 + $0x88] sm:$0xff] %v2132
        %4325 = vst [vmem:[%s176 + $0x90] sm:$0xff] %v4114
        %4326 = vst [vmem:[%s176 + $0x98] sm:$0xff] %v4116
        %4327 = vst [vmem:[%s176 + $0xa0] sm:$0xff] %v2137
        %4328 = vst [vmem:[%s176 + $0xa8] sm:$0xff] %v2139
        %4329 = vst [vmem:[%s176 + $0xb0] sm:$0xff] %v4121
        %4330 = vst [vmem:[%s176 + $0xb8] sm:$0xff] %v4123
        %4331 = vst [vmem:[%s176 + $0xc0] sm:$0xff] %v2144
        %4332 = vst [vmem:[%s176 + $0xc8] sm:$0xff] %v2146
        %4333 = vst [vmem:[%s176 + $0xd0] sm:$0xff] %v4128
        %4334 = vst [vmem:[%s176 + $0xd8] sm:$0xff] %v4130
        %4335 = vst [vmem:[%s176 + $0xe0] sm:$0xff] %v2151
        %4336 = vst [vmem:[%s176 + $0xe8] sm:$0xff] %v2153
        %4337 = vst [vmem:[%s176 + $0xf0] sm:$0xff] %v4135
        %4338 = vst [vmem:[%s176 + $0xf8] sm:$0xff] %v4137
        %4339 = vst [vmem:[%s176 + $0x100] sm:$0xff] %v2158
        %4340 = vst [vmem:[%s176 + $0x108] sm:$0xff] %v2160
        %4341 = vst [vmem:[%s176 + $0x110] sm:$0xff] %v4142
        %4342 = vst [vmem:[%s176 + $0x118] sm:$0xff] %v4144
        %4343 = vst [vmem:[%s176 + $0x120] sm:$0xff] %v2165
        %4344 = vst [vmem:[%s176 + $0x128] sm:$0xff] %v2167
        %4345 = vst [vmem:[%s176 + $0x130] sm:$0xff] %v4149
        %4346 = vst [vmem:[%s176 + $0x138] sm:$0xff] %v4151
        %4347 = vst [vmem:[%s176 + $0x140] sm:$0xff] %v2172
        %4348 = vst [vmem:[%s176 + $0x148] sm:$0xff] %v2174
        %4349 = vst [vmem:[%s176 + $0x150] sm:$0xff] %v4156
        %4350 = vst [vmem:[%s176 + $0x158] sm:$0xff] %v4158
        %4351 = vst [vmem:[%s176 + $0x160] sm:$0xff] %v2179
        %4352 = vst [vmem:[%s176 + $0x168] sm:$0xff] %v2181
        %4353 = vst [vmem:[%s176 + $0x170] sm:$0xff] %v4163
        %4354 = vst [vmem:[%s176 + $0x178] sm:$0xff] %v4165
        %4355 = vst [vmem:[%s176 + $0x180] sm:$0xff] %v2186
        %4356 = vst [vmem:[%s176 + $0x188] sm:$0xff] %v2188
        %4357 = vst [vmem:[%s176 + $0x190] sm:$0xff] %v4170
        %4358 = vst [vmem:[%s176 + $0x198] sm:$0xff] %v4172
        %4359 = vst [vmem:[%s176 + $0x1a0] sm:$0xff] %v2193
        %4360 = vst [vmem:[%s176 + $0x1a8] sm:$0xff] %v2195
        %4361 = vst [vmem:[%s176 + $0x1b0] sm:$0xff] %v4177
        %4362 = vst [vmem:[%s176 + $0x1b8] sm:$0xff] %v4179
        %4363 = vst [vmem:[%s176 + $0x1c0] sm:$0xff] %v2200
        %4364 = vst [vmem:[%s176 + $0x1c8] sm:$0xff] %v2202
        %4365 = vst [vmem:[%s176 + $0x1d0] sm:$0xff] %v4184
        %4366 = vst [vmem:[%s176 + $0x1d8] sm:$0xff] %v4186
        %4367 = vst [vmem:[%s176 + $0x1e0] sm:$0xff] %v2207
        %4368 = vst [vmem:[%s176 + $0x1e8] sm:$0xff] %v2209
        %4369 = vst [vmem:[%s176 + $0x1f0] sm:$0xff] %v4191
        %4370 = vst [vmem:[%s176 + $0x1f8] sm:$0xff] %v4193
        %4371 = vst [vmem:[%s176 + $0x200] sm:$0xff] %v2214
        %4372 = vst [vmem:[%s176 + $0x208] sm:$0xff] %v2216
        %4373 = vst [vmem:[%s176 + $0x210] sm:$0xff] %v4198
        %4374 = vst [vmem:[%s176 + $0x218] sm:$0xff] %v4200
        %4375 = vst [vmem:[%s176 + $0x220] sm:$0xff] %v2221
        %4376 = vst [vmem:[%s176 + $0x228] sm:$0xff] %v2223
        %4377 = vst [vmem:[%s176 + $0x230] sm:$0xff] %v4205
        %4378 = vst [vmem:[%s176 + $0x238] sm:$0xff] %v4207
        %4379 = vst [vmem:[%s176 + $0x240] sm:$0xff] %v2228
        %4380 = vst [vmem:[%s176 + $0x248] sm:$0xff] %v2230
        %4381 = vst [vmem:[%s176 + $0x250] sm:$0xff] %v4212
        %4382 = vst [vmem:[%s176 + $0x258] sm:$0xff] %v4214
        %4383 = vst [vmem:[%s176 + $0x260] sm:$0xff] %v2235
        %4384 = vst [vmem:[%s176 + $0x268] sm:$0xff] %v2237
        %4385 = vst [vmem:[%s176 + $0x270] sm:$0xff] %v4219
        %4386 = vst [vmem:[%s176 + $0x278] sm:$0xff] %v4221
        %4387 = vst [vmem:[%s176 + $0x280] sm:$0xff] %v2242
        %4388 = vst [vmem:[%s176 + $0x288] sm:$0xff] %v2244
        %4389 = vst [vmem:[%s176 + $0x290] sm:$0xff] %v4226
        %4390 = vst [vmem:[%s176 + $0x298] sm:$0xff] %v4228
        %4391 = vst [vmem:[%s176 + $0x2a0] sm:$0xff] %v2249
        %4392 = vst [vmem:[%s176 + $0x2a8] sm:$0xff] %v2251
        %4393 = vst [vmem:[%s176 + $0x2b0] sm:$0xff] %v4233
        %4394 = vst [vmem:[%s176 + $0x2b8] sm:$0xff] %v4235
        %4395 = vst [vmem:[%s176 + $0x2c0] sm:$0xff] %v2256
        %4396 = vst [vmem:[%s176 + $0x2c8] sm:$0xff] %v2258
        %4397 = vst [vmem:[%s176 + $0x2d0] sm:$0xff] %v4240
        %4398 = vst [vmem:[%s176 + $0x2d8] sm:$0xff] %v4242
        %4399 = vst [vmem:[%s176 + $0x2e0] sm:$0xff] %v2263
        %4400 = vst [vmem:[%s176 + $0x2e8] sm:$0xff] %v2265
        %4401 = vst [vmem:[%s176 + $0x2f0] sm:$0xff] %v4247
        %4402 = vst [vmem:[%s176 + $0x2f8] sm:$0xff] %v4249
        %4403 = vst [vmem:[%s176 + $0x300] sm:$0xff] %v2270
        %4404 = vst [vmem:[%s176 + $0x308] sm:$0xff] %v2272
        %4405 = vst [vmem:[%s176 + $0x310] sm:$0xff] %v4254
        %4406 = vst [vmem:[%s176 + $0x318] sm:$0xff] %v4256
        %4407 = vst [vmem:[%s176 + $0x320] sm:$0xff] %v2277
        %4408 = vst [vmem:[%s176 + $0x328] sm:$0xff] %v2279
        %4409 = vst [vmem:[%s176 + $0x330] sm:$0xff] %v4261
        %4410 = vst [vmem:[%s176 + $0x338] sm:$0xff] %v4263
        %4411 = vst [vmem:[%s176 + $0x340] sm:$0xff] %v2284
        %4412 = vst [vmem:[%s176 + $0x348] sm:$0xff] %v2286
        %4413 = vst [vmem:[%s176 + $0x350] sm:$0xff] %v4268
        %4414 = vst [vmem:[%s176 + $0x358] sm:$0xff] %v4270
        %4415 = vst [vmem:[%s176 + $0x360] sm:$0xff] %v2291
        %4416 = vst [vmem:[%s176 + $0x368] sm:$0xff] %v2293
        %4417 = vst [vmem:[%s176 + $0x370] sm:$0xff] %v4275
        %4418 = vst [vmem:[%s176 + $0x378] sm:$0xff] %v4277
        %4419 = vst [vmem:[%s176 + $0x380] sm:$0xff] %v2298
        %4420 = vst [vmem:[%s176 + $0x388] sm:$0xff] %v2300
        %4421 = vst [vmem:[%s176 + $0x390] sm:$0xff] %v4282
        %4422 = vst [vmem:[%s176 + $0x398] sm:$0xff] %v4284
        %4423 = vst [vmem:[%s176 + $0x3a0] sm:$0xff] %v2305
        %4424 = vst [vmem:[%s176 + $0x3a8] sm:$0xff] %v2307
        %4425 = vst [vmem:[%s176 + $0x3b0] sm:$0xff] %v4289
        %4426 = vst [vmem:[%s176 + $0x3b8] sm:$0xff] %v4291
        %4427 = vst [vmem:[%s176 + $0x3c0] sm:$0xff] %v2312
        %4428 = vst [vmem:[%s176 + $0x3c8] sm:$0xff] %v2314
        %4429 = vst [vmem:[%s176 + $0x3d0] sm:$0xff] %v4296
        %4430 = vst [vmem:[%s176 + $0x3d8] sm:$0xff] %v4298
        %4431 = vst [vmem:[%s176 + $0x3e0] sm:$0xff] %v2319
        %4432 = vst [vmem:[%s176 + $0x3e8] sm:$0xff] %v2321
        %4433 = vst [vmem:[%s176 + $0x3f0] sm:$0xff] %v4303
        %4434 = vst [vmem:[%s176 + $0x3f8] sm:$0xff] %v4305
        %s4435 = sand.u32 %s92, 1
        %s4436 = scalar_lea.sflag [#allocation3], %s4435
        %s4437 = sand.u32 %s92, 1
        %s4438 = smul.addr %s4437, 1024
        %s4439 = scalar_lea.vmem [#allocation2], %s4438
        // Predicated region
        $region29: #{tpu_custom_call.1} parent=27 // pred_check
          %p4440 = pneg %p102
        $region30: #{tpu_custom_call.1} parent=27 // pred_check_branch
          %4442 = sbr.rel (%p4440) target = $region32
        $region31: #{tpu_custom_call.1} parent=27 // pred_region
          %s4443 = smul.u32 32, %s21
          %s4445 = ssub.s32 16384, 16384
          %4446 = vsyncadd %s4436, %s4445
          %s4447 = smul.addr %s4443, 4
          %s4448 = smul.addr %s20, 256
          %s4449 = sadd.s32 %s4447, %s4448
          %s4450 = smul.addr %s4449, 128
          %s4451 = scalar_lea.hbm %s2, %s4450
          %s4452 = sshll.u32 %s4439, 4
          %s4453 = int_to_ptr.vmem [resolvable:$true] %s4452
          %4458 = dma.vmem_to_hbm [thread:$0]  %s4453, 16384, %s4451, %s4436, 512, 512, 32
        $region32: #{tpu_custom_call.1} parent=27 // pred_fallthru
          _
      $region28: #{tpu_custom_call.1} parent=5 // pred_fallthru
        _
      %p4459 = scmp.le.s32.totalorder 2, %s11
      // Predicated region
      $region33: #{tpu_custom_call.1} parent=5 // pred_check
        %p4460 = pneg %p4459
      $region34: #{tpu_custom_call.1} parent=5 // pred_check_branch
        %4462 = sbr.rel (%p4460) target = $region36
      $region35: #{tpu_custom_call.1} parent=5 // pred_region
        %s4463 = ssub.s32 %s11, 2
        // Predicated region
        $region37: #{tpu_custom_call.1} parent=35 // pred_check
          %p4464 = pneg %p108
        $region38: #{tpu_custom_call.1} parent=35 // pred_check_branch
          %4466 = sbr.rel (%p4464) target = $region40
        $region39: #{tpu_custom_call.1} parent=35 // pred_region
          %s4467 = sand.u32 %s93, 1
          %s4468 = scalar_lea.sflag [#allocation3], %s4467
          %s4469 = sand.u32 %s93, 1
          %s4470 = smul.addr %s4469, 1024
          %s4471 = scalar_lea.vmem [#allocation2], %s4470
          %4472 = dma.done %s4468, 16384
        $region40: #{tpu_custom_call.1} parent=35 // pred_fallthru
          _
      $region36: #{tpu_custom_call.1} parent=5 // pred_fallthru
        _
    $region6: #{tpu_custom_call.1} parent=1 // loop_footer
      %s15 = sadd.s32 1, %s11
    $region7: #{tpu_custom_call.1} parent=1 // loop_footer_branch
      %10 = sbr.rel target = $region3
    $region8: #{tpu_custom_call.1} parent=1 // loop_exit
      _
    %4473 = vsyncpa [#allocation3], 1
    %s4474 = scalar_lea.sflag [#allocation3], 1
    %4475 = vsyncpa %s4474, 1

</llo_original>
